<compile_context>
chip_gen: v5e
topology: v5e:2x2
jax: 0.10.0
libtpu: 0.0.40
codegen_flags: <defaults>
</compile_context>

<pallas_src>
import functools

import jax
import jax.numpy as jnp
from jax.experimental import pallas as pl
from jax.experimental.pallas import tpu as pltpu

LANE = 128  # one 128-lane block per gate


# ---------------------------------------------------------------------------
# Fused Pallas kernel (all GRU layers + dense + ReLU in one launch, no grid)
# ---------------------------------------------------------------------------
def make_fused_gru_kernel(T, B, H, num_layers):
    """B is the (sublane-padded) batch, H the real hidden size."""
    L = num_layers
    G = 3 * LANE  # lane-padded gate axis

    def kernel(*refs):
        # ---- unpack refs: inputs..., output, scratch ----
        x_ref = refs[0]                          # (T*B, I0)  time-major, flat
        h0_ref = refs[1]                         # (L, B, H)
        idx = 2
        layer = []
        for _ in range(L):
            layer.append(refs[idx:idx + 4])      # wih, whh, bih, bhh
            idx += 4
        wd_ref = refs[idx]                       # (1, H)
        bd_ref = refs[idx + 1]                   # (1, 1)
        out_ref = refs[idx + 2]                  # (B, 1)
        proj_ref = refs[idx + 3]                 # scratch (T, B, G) f32

        # Layer-0 input projection hoisted over all T steps: ONE MXU call with
        # b_ih folded in, stored time-major so each per-step read is a
        # leading-axis indexed, sublane-aligned (B, G) tile.
        wih0, _, bih0, _ = layer[0]
        proj = jnp.dot(x_ref[...], wih0[...],
                       preferred_element_type=jnp.float32) + bih0[...]
        proj_ref[...] = proj.reshape(T, B, G)

        # Hoist bias broadcasts once per layer (loop-invariant, tiny).
        bhh = [jnp.broadcast_to(layer[l][3][...], (B, G)) for l in range(L)]
        bih = [None] + [jnp.broadcast_to(layer[l][2][...], (B, G))
                        for l in range(1, L)]

        def gru_cell(gi, h, whh_ref, bhh_b):
            # One fused (B,H)@(H,3*128) matmul; every gate slice below starts
            # on a 128-lane vreg boundary, so all gate math is same-offset VPU
            # (sigmoid/tanh go to the EUP) with no lane realignment.
            gh = jnp.dot(h, whh_ref[...],
                         preferred_element_type=jnp.float32) + bhh_b
            r = jax.nn.sigmoid(gi[:, 0:H] + gh[:, 0:H])
            z = jax.nn.sigmoid(gi[:, LANE:LANE + H] + gh[:, LANE:LANE + H])
            # b_hh[n] sits inside r * (.) because it was added to gh above
            # (matches PyTorch GRU exactly).
            n = jnp.tanh(gi[:, 2 * LANE:2 * LANE + H]
                         + r * gh[:, 2 * LANE:2 * LANE + H])
            return (1.0 - z) * n + z * h

        # Wavefront schedule over (layer, time): at stage s, layer l advances
        # its timestep t = s - l.  Layer l's step-t work depends only on layer
        # l-1's step-t output (produced at stage s-1), so work within a stage
        # is independent and overlaps on the MXU/EUP.
        hs = [h0_ref[l] for l in range(L)]       # (B, H) carried in vregs
        pend = [None] * L                        # pend[l] = input for layer l
        for s in range(T + L - 1):
            new_pend = [None] * L
            for l in range(L):
                t = s - l
                if 0 <= t < T:
                    if l == 0:
                        gi = proj_ref[t]                             # (B, G)
                    else:
                        gi = jnp.dot(pend[l], layer[l][0][...],
                                     preferred_element_type=jnp.float32) + bih[l]
                    h_new = gru_cell(gi, hs[l], layer[l][1], bhh[l])
                    hs[l] = h_new
                    if l + 1 < L:
                        new_pend[l + 1] = h_new
            pend = new_pend

        # Dense(H -> 1) + ReLU head: VPU multiply + lane reduction (avoids an
        # N=1 MXU matmul and a second kernel launch).
        y = jnp.sum(hs[L - 1] * wd_ref[...], axis=-1, keepdims=True) + bd_ref[...]
        out_ref[...] = jnp.maximum(y, 0.0)

    return kernel


# ---------------------------------------------------------------------------
# Wrapper: layout plumbing (batch / gate padding) + pallas_call
# ---------------------------------------------------------------------------
@functools.partial(jax.jit, static_argnames=("num_layers",))
def gru_model_forward(x, h0_all, params, num_layers):
    """x: (B, T, input_size) batch-first (matches nn.GRU(batch_first=True))."""
    B, T, I = x.shape
    H = h0_all.shape[-1]
    B_pad = ((B + 7) // 8) * 8                    # sublane-aligned batch
    G_pad = 3 * LANE

    def pad_gate_cols(w):
        # (..., 3H) -> (..., 3*LANE): each gate gets its own 128-lane block.
        parts = []
        for g in range(3):
            blk = w[..., g * H:(g + 1) * H]
            pad = jnp.zeros(blk.shape[:-1] + (LANE - H,), blk.dtype)
            parts.append(jnp.concatenate([blk, pad], axis=-1))
        return jnp.concatenate(parts, axis=-1)

    # Time-major, zero-padded batch, flattened so layer-0 projection is one
    # big matmul; padded rows are zero and sliced off the output below.
    x_tm = jnp.transpose(x, (1, 0, 2))                         # (T, B, I)
    x_tm = jnp.pad(x_tm, ((0, 0), (0, B_pad - B), (0, 0)))
    x_flat = x_tm.reshape(T * B_pad, I)
    h0_pad = jnp.pad(h0_all, ((0, 0), (0, B_pad - B), (0, 0)))  # (L, B_pad, H)

    inputs = [x_flat, h0_pad]
    for l in range(num_layers):
        w_ih, w_hh, b_ih, b_hh = params["gru"][l]
        inputs.extend([pad_gate_cols(w_ih), pad_gate_cols(w_hh),
                       pad_gate_cols(b_ih), pad_gate_cols(b_hh)])
    inputs.extend([params["dense_w"], params["dense_b"]])

    vmem = pltpu.MemorySpace.VMEM
    kernel = make_fused_gru_kernel(T, B_pad, H, num_layers)
    out_pad = pl.pallas_call(
        kernel,
        out_shape=jax.ShapeDtypeStruct((B_pad, 1), jnp.float32),
        in_specs=[pl.BlockSpec(memory_space=vmem)] * len(inputs),
        out_specs=pl.BlockSpec(memory_space=vmem),
        scratch_shapes=[
            pltpu.VMEM((T, B_pad, G_pad), jnp.float32),  # hoisted layer-0 proj
        ],
    )(*inputs)
    return out_pad[:B]


# ---------------------------------------------------------------------------
# Pure-JAX reference (same math / same real weight layout)
# ---------------------------------------------------------------------------
def gru_reference(x, h0_all, params, num_layers):
    layer_in = jnp.transpose(x, (1, 0, 2))                 # (T, B, I)
    for l in range(num_layers):
        w_ih, w_hh, b_ih, b_hh = params["gru"][l]

        def step(h, x_t):
            gi = x_t @ w_ih + b_ih
            gh = h @ w_hh + b_hh
            i_r, i_z, i_n = jnp.split(gi, 3, axis=-1)
            h_r, h_z, h_n = jnp.split(gh, 3, axis=-1)
            r = jax.nn.sigmoid(i_r + h_r)
            z = jax.nn.sigmoid(i_z + h_z)
            n = jnp.tanh(i_n + r * h_n)
            h_new = (1.0 - z) * n + z * h
            return h_new, h_new

        _, layer_in = jax.lax.scan(step, h0_all[l], layer_in)
    last = layer_in[-1]                                    # (B, H)
    y = last @ params["dense_w"].T + params["dense_b"]     # (B, 1)
    return jnp.maximum(y, 0.0)


# ---------------------------------------------------------------------------
# Deterministic parameter construction (uniform(-1/sqrt(H), 1/sqrt(H)))
# ---------------------------------------------------------------------------
def init_params(key, input_size, hidden_size, num_layers):
    H = hidden_size
    bound = 1.0 / (H ** 0.5)
    gru = []
    for layer in range(num_layers):
        in_feat = input_size if layer == 0 else H
        key, k1, k2, k3, k4 = jax.random.split(key, 5)
        # Gate order [r | z | n] along the 3H axis, pre-transposed for x @ W.
        w_ih = jax.random.uniform(k1, (in_feat, 3 * H), jnp.float32, -bound, bound)
        w_hh = jax.random.uniform(k2, (H, 3 * H), jnp.float32, -bound, bound)
        b_ih = jax.random.uniform(k3, (1, 3 * H), jnp.float32, -bound, bound)
        b_hh = jax.random.uniform(k4, (1, 3 * H), jnp.float32, -bound, bound)
        gru.append((w_ih, w_hh, b_ih, b_hh))
    key, k5, k6 = jax.random.split(key, 3)
    dense_w = jax.random.uniform(k5, (1, H), jnp.float32, -bound, bound)
    dense_b = jax.random.uniform(k6, (1, 1), jnp.float32, -bound, bound)
    return {"gru": gru, "dense_w": dense_w, "dense_b": dense_b}, key


# ---------------------------------------------------------------------------
if __name__ == "__main__":
    INPUT_SIZE, HIDDEN_SIZE, NUM_LAYERS = 8, 32, 2
    BATCH, SEQ = 4, 10

    root = jax.random.PRNGKey(0)
    k_x, k_h0, k_p = jax.random.split(root, 3)

    x = jax.random.normal(k_x, (BATCH, SEQ, INPUT_SIZE), jnp.float32)
    # TODO(synk): PyTorch draws h0 ~ randn inside forward(); we draw it once,
    # deterministically, and pass it in.
    h0_all = jax.random.normal(k_h0, (NUM_LAYERS, BATCH, HIDDEN_SIZE), jnp.float32)
    params, _ = init_params(k_p, INPUT_SIZE, HIDDEN_SIZE, NUM_LAYERS)

    out = gru_model_forward(x, h0_all, params, num_layers=NUM_LAYERS)
    out = jax.block_until_ready(out)
    assert out.shape == (BATCH, 1), out.shape

    ref = jax.block_until_ready(gru_reference(x, h0_all, params, NUM_LAYERS))
    assert jnp.allclose(out, ref, atol=1e-4, rtol=1e-4), (out, ref)

    print("KERNEL_OK")
</pallas_src>

<mosaic_0001>
module attributes {stable_mosaic.version = 11 : i64} {
  func.func @kernel(%arg0: memref<80x8xf32, #tpu.memory_space<vmem>>, %arg1: memref<2x8x32xf32, #tpu.memory_space<vmem>>, %arg2: memref<8x384xf32, #tpu.memory_space<vmem>>, %arg3: memref<32x384xf32, #tpu.memory_space<vmem>>, %arg4: memref<1x384xf32, #tpu.memory_space<vmem>>, %arg5: memref<1x384xf32, #tpu.memory_space<vmem>>, %arg6: memref<32x384xf32, #tpu.memory_space<vmem>>, %arg7: memref<32x384xf32, #tpu.memory_space<vmem>>, %arg8: memref<1x384xf32, #tpu.memory_space<vmem>>, %arg9: memref<1x384xf32, #tpu.memory_space<vmem>>, %arg10: memref<1x32xf32, #tpu.memory_space<vmem>>, %arg11: memref<1x1xf32, #tpu.memory_space<vmem>>, %arg12: memref<8x1xf32, #tpu.memory_space<vmem>>, %arg13: memref<10x8x384xf32, #tpu.memory_space<vmem>>) attributes {dimension_semantics = [], scalar_prefetch = 0 : i64, scratch_operands = 1 : i64, tpu.core_type = #tpu.core_type<tc>} {
    %c0 = arith.constant 0 : index
    %c0_0 = arith.constant 0 : index
    %0 = vector.load %arg0[%c0, %c0_0] : memref<80x8xf32, #tpu.memory_space<vmem>>, vector<80x8xf32>
    %c0_1 = arith.constant 0 : index
    %c0_2 = arith.constant 0 : index
    %1 = vector.load %arg2[%c0_1, %c0_2] : memref<8x384xf32, #tpu.memory_space<vmem>>, vector<8x384xf32>
    %cst = arith.constant dense<0.000000e+00> : vector<80x384xf32>
    %2 = tpu.matmul %0, %1, %cst {dimension_numbers = #tpu.dot_dimension_numbers<[1], [0], [0], [1], [0, 0, 1, 1], [], []>} : vector<80x8xf32>, vector<8x384xf32>, vector<80x384xf32> -> vector<80x384xf32>
    %c0_3 = arith.constant 0 : index
    %c0_4 = arith.constant 0 : index
    %3 = vector.load %arg4[%c0_3, %c0_4] : memref<1x384xf32, #tpu.memory_space<vmem>>, vector<1x384xf32>
    %4 = vector.broadcast %3 : vector<1x384xf32> to vector<80x384xf32>
    %5 = arith.addf %2, %4 : vector<80x384xf32>
    %6 = vector.shape_cast %5 : vector<80x384xf32> to vector<10x8x384xf32>
    %c0_5 = arith.constant 0 : index
    %c0_6 = arith.constant 0 : index
    %c0_7 = arith.constant 0 : index
    %7 = vector.load %arg13[%c0_5, %c0_6, %c0_7] : memref<10x8x384xf32, #tpu.memory_space<vmem>>, vector<10x8x384xf32>
    tpu.vector_store %arg13[%c0_5, %c0_6, %c0_7], %6 {strides = array<i32>} : memref<10x8x384xf32, #tpu.memory_space<vmem>>, vector<10x8x384xf32>,
    %c0_8 = arith.constant 0 : index
    %c0_9 = arith.constant 0 : index
    %8 = vector.load %arg5[%c0_8, %c0_9] : memref<1x384xf32, #tpu.memory_space<vmem>>, vector<1x384xf32>
    %9 = vector.shape_cast %8 : vector<1x384xf32> to vector<1x384xf32>
    %10 = vector.broadcast %9 : vector<1x384xf32> to vector<8x384xf32>
    %c0_10 = arith.constant 0 : index
    %c0_11 = arith.constant 0 : index
    %11 = vector.load %arg9[%c0_10, %c0_11] : memref<1x384xf32, #tpu.memory_space<vmem>>, vector<1x384xf32>
    %12 = vector.shape_cast %11 : vector<1x384xf32> to vector<1x384xf32>
    %13 = vector.broadcast %12 : vector<1x384xf32> to vector<8x384xf32>
    %c0_12 = arith.constant 0 : index
    %c0_13 = arith.constant 0 : index
    %14 = vector.load %arg8[%c0_12, %c0_13] : memref<1x384xf32, #tpu.memory_space<vmem>>, vector<1x384xf32>
    %15 = vector.shape_cast %14 : vector<1x384xf32> to vector<1x384xf32>
    %16 = vector.broadcast %15 : vector<1x384xf32> to vector<8x384xf32>
    %c0_14 = arith.constant 0 : index
    %c0_15 = arith.constant 0 : index
    %c0_16 = arith.constant 0 : index
    %17 = vector.load %arg1[%c0_14, %c0_15, %c0_16] : memref<2x8x32xf32, #tpu.memory_space<vmem>>, vector<1x8x32xf32>
    %18 = vector.shape_cast %17 : vector<1x8x32xf32> to vector<8x32xf32>
    %c1 = arith.constant 1 : index
    %c0_17 = arith.constant 0 : index
    %c0_18 = arith.constant 0 : index
    %19 = vector.load %arg1[%c1, %c0_17, %c0_18] : memref<2x8x32xf32, #tpu.memory_space<vmem>>, vector<1x8x32xf32>
    %20 = vector.shape_cast %19 : vector<1x8x32xf32> to vector<8x32xf32>
    %c0_19 = arith.constant 0 : index
    %c0_20 = arith.constant 0 : index
    %c0_21 = arith.constant 0 : index
    %21 = vector.load %arg13[%c0_19, %c0_20, %c0_21] : memref<10x8x384xf32, #tpu.memory_space<vmem>>, vector<1x8x384xf32>
    %22 = vector.shape_cast %21 : vector<1x8x384xf32> to vector<8x384xf32>
    %c0_22 = arith.constant 0 : index
    %c0_23 = arith.constant 0 : index
    %23 = vector.load %arg3[%c0_22, %c0_23] : memref<32x384xf32, #tpu.memory_space<vmem>>, vector<32x384xf32>
    %cst_24 = arith.constant dense<0.000000e+00> : vector<8x384xf32>
    %24 = tpu.matmul %18, %23, %cst_24 {dimension_numbers = #tpu.dot_dimension_numbers<[1], [0], [0], [1], [0, 0, 1, 1], [], []>} : vector<8x32xf32>, vector<32x384xf32>, vector<8x384xf32> -> vector<8x384xf32>
    %25 = arith.addf %24, %10 : vector<8x384xf32>
    %26 = vector.extract_strided_slice %22 {offsets = [0, 0], sizes = [8, 32], strides = [1, 1]} : vector<8x384xf32> to vector<8x32xf32>
    %27 = vector.extract_strided_slice %25 {offsets = [0, 0], sizes = [8, 32], strides = [1, 1]} : vector<8x384xf32> to vector<8x32xf32>
    %28 = arith.addf %26, %27 : vector<8x32xf32>
    %29 = arith.negf %28 : vector<8x32xf32>
    %30 = math.exp %29 : vector<8x32xf32>
    %cst_25 = arith.constant 1.000000e+00 : f32
    %31 = vector.broadcast %cst_25 : f32 to vector<8x32xf32>
    %32 = arith.addf %31, %30 : vector<8x32xf32>
    %33 = arith.divf %31, %32 : vector<8x32xf32>
    %34 = vector.extract_strided_slice %22 {offsets = [0, 128], sizes = [8, 32], strides = [1, 1]} : vector<8x384xf32> to vector<8x32xf32>
    %35 = vector.extract_strided_slice %25 {offsets = [0, 128], sizes = [8, 32], strides = [1, 1]} : vector<8x384xf32> to vector<8x32xf32>
    %36 = arith.addf %34, %35 : vector<8x32xf32>
    %37 = arith.negf %36 : vector<8x32xf32>
    %38 = math.exp %37 : vector<8x32xf32>
    %cst_26 = arith.constant 1.000000e+00 : f32
    %39 = vector.broadcast %cst_26 : f32 to vector<8x32xf32>
    %40 = arith.addf %39, %38 : vector<8x32xf32>
    %41 = arith.divf %39, %40 : vector<8x32xf32>
    %42 = vector.extract_strided_slice %22 {offsets = [0, 256], sizes = [8, 32], strides = [1, 1]} : vector<8x384xf32> to vector<8x32xf32>
    %43 = vector.extract_strided_slice %25 {offsets = [0, 256], sizes = [8, 32], strides = [1, 1]} : vector<8x384xf32> to vector<8x32xf32>
    %44 = arith.mulf %33, %43 : vector<8x32xf32>
    %45 = arith.addf %42, %44 : vector<8x32xf32>
    %46 = math.tanh %45 : vector<8x32xf32>
    %cst_27 = arith.constant 1.000000e+00 : f32
    %47 = vector.broadcast %cst_27 : f32 to vector<8x32xf32>
    %48 = arith.subf %47, %41 : vector<8x32xf32>
    %49 = arith.mulf %48, %46 : vector<8x32xf32>
    %50 = arith.mulf %41, %18 : vector<8x32xf32>
    %51 = arith.addf %49, %50 : vector<8x32xf32>
    %c1_28 = arith.constant 1 : index
    %c0_29 = arith.constant 0 : index
    %c0_30 = arith.constant 0 : index
    %52 = vector.load %arg13[%c1_28, %c0_29, %c0_30] : memref<10x8x384xf32, #tpu.memory_space<vmem>>, vector<1x8x384xf32>
    %53 = vector.shape_cast %52 : vector<1x8x384xf32> to vector<8x384xf32>
    %c0_31 = arith.constant 0 : index
    %c0_32 = arith.constant 0 : index
    %54 = vector.load %arg3[%c0_31, %c0_32] : memref<32x384xf32, #tpu.memory_space<vmem>>, vector<32x384xf32>
    %cst_33 = arith.constant dense<0.000000e+00> : vector<8x384xf32>
    %55 = tpu.matmul %51, %54, %cst_33 {dimension_numbers = #tpu.dot_dimension_numbers<[1], [0], [0], [1], [0, 0, 1, 1], [], []>} : vector<8x32xf32>, vector<32x384xf32>, vector<8x384xf32> -> vector<8x384xf32>
    %56 = arith.addf %55, %10 : vector<8x384xf32>
    %57 = vector.extract_strided_slice %53 {offsets = [0, 0], sizes = [8, 32], strides = [1, 1]} : vector<8x384xf32> to vector<8x32xf32>
    %58 = vector.extract_strided_slice %56 {offsets = [0, 0], sizes = [8, 32], strides = [1, 1]} : vector<8x384xf32> to vector<8x32xf32>
    %59 = arith.addf %57, %58 : vector<8x32xf32>
    %60 = arith.negf %59 : vector<8x32xf32>
    %61 = math.exp %60 : vector<8x32xf32>
    %cst_34 = arith.constant 1.000000e+00 : f32
    %62 = vector.broadcast %cst_34 : f32 to vector<8x32xf32>
    %63 = arith.addf %62, %61 : vector<8x32xf32>
    %64 = arith.divf %62, %63 : vector<8x32xf32>
    %65 = vector.extract_strided_slice %53 {offsets = [0, 128], sizes = [8, 32], strides = [1, 1]} : vector<8x384xf32> to vector<8x32xf32>
    %66 = vector.extract_strided_slice %56 {offsets = [0, 128], sizes = [8, 32], strides = [1, 1]} : vector<8x384xf32> to vector<8x32xf32>
    %67 = arith.addf %65, %66 : vector<8x32xf32>
    %68 = arith.negf %67 : vector<8x32xf32>
    %69 = math.exp %68 : vector<8x32xf32>
    %cst_35 = arith.constant 1.000000e+00 : f32
    %70 = vector.broadcast %cst_35 : f32 to vector<8x32xf32>
    %71 = arith.addf %70, %69 : vector<8x32xf32>
    %72 = arith.divf %70, %71 : vector<8x32xf32>
    %73 = vector.extract_strided_slice %53 {offsets = [0, 256], sizes = [8, 32], strides = [1, 1]} : vector<8x384xf32> to vector<8x32xf32>
    %74 = vector.extract_strided_slice %56 {offsets = [0, 256], sizes = [8, 32], strides = [1, 1]} : vector<8x384xf32> to vector<8x32xf32>
    %75 = arith.mulf %64, %74 : vector<8x32xf32>
    %76 = arith.addf %73, %75 : vector<8x32xf32>
    %77 = math.tanh %76 : vector<8x32xf32>
    %cst_36 = arith.constant 1.000000e+00 : f32
    %78 = vector.broadcast %cst_36 : f32 to vector<8x32xf32>
    %79 = arith.subf %78, %72 : vector<8x32xf32>
    %80 = arith.mulf %79, %77 : vector<8x32xf32>
    %81 = arith.mulf %72, %51 : vector<8x32xf32>
    %82 = arith.addf %80, %81 : vector<8x32xf32>
    %c0_37 = arith.constant 0 : index
    %c0_38 = arith.constant 0 : index
    %83 = vector.load %arg6[%c0_37, %c0_38] : memref<32x384xf32, #tpu.memory_space<vmem>>, vector<32x384xf32>
    %cst_39 = arith.constant dense<0.000000e+00> : vector<8x384xf32>
    %84 = tpu.matmul %51, %83, %cst_39 {dimension_numbers = #tpu.dot_dimension_numbers<[1], [0], [0], [1], [0, 0, 1, 1], [], []>} : vector<8x32xf32>, vector<32x384xf32>, vector<8x384xf32> -> vector<8x384xf32>
    %85 = arith.addf %84, %16 : vector<8x384xf32>
    %c0_40 = arith.constant 0 : index
    %c0_41 = arith.constant 0 : index
    %86 = vector.load %arg7[%c0_40, %c0_41] : memref<32x384xf32, #tpu.memory_space<vmem>>, vector<32x384xf32>
    %cst_42 = arith.constant dense<0.000000e+00> : vector<8x384xf32>
    %87 = tpu.matmul %20, %86, %cst_42 {dimension_numbers = #tpu.dot_dimension_numbers<[1], [0], [0], [1], [0, 0, 1, 1], [], []>} : vector<8x32xf32>, vector<32x384xf32>, vector<8x384xf32> -> vector<8x384xf32>
    %88 = arith.addf %87, %13 : vector<8x384xf32>
    %89 = vector.extract_strided_slice %85 {offsets = [0, 0], sizes = [8, 32], strides = [1, 1]} : vector<8x384xf32> to vector<8x32xf32>
    %90 = vector.extract_strided_slice %88 {offsets = [0, 0], sizes = [8, 32], strides = [1, 1]} : vector<8x384xf32> to vector<8x32xf32>
    %91 = arith.addf %89, %90 : vector<8x32xf32>
    %92 = arith.negf %91 : vector<8x32xf32>
    %93 = math.exp %92 : vector<8x32xf32>
    %cst_43 = arith.constant 1.000000e+00 : f32
    %94 = vector.broadcast %cst_43 : f32 to vector<8x32xf32>
    %95 = arith.addf %94, %93 : vector<8x32xf32>
    %96 = arith.divf %94, %95 : vector<8x32xf32>
    %97 = vector.extract_strided_slice %85 {offsets = [0, 128], sizes = [8, 32], strides = [1, 1]} : vector<8x384xf32> to vector<8x32xf32>
    %98 = vector.extract_strided_slice %88 {offsets = [0, 128], sizes = [8, 32], strides = [1, 1]} : vector<8x384xf32> to vector<8x32xf32>
    %99 = arith.addf %97, %98 : vector<8x32xf32>
    %100 = arith.negf %99 : vector<8x32xf32>
    %101 = math.exp %100 : vector<8x32xf32>
    %cst_44 = arith.constant 1.000000e+00 : f32
    %102 = vector.broadcast %cst_44 : f32 to vector<8x32xf32>
    %103 = arith.addf %102, %101 : vector<8x32xf32>
    %104 = arith.divf %102, %103 : vector<8x32xf32>
    %105 = vector.extract_strided_slice %85 {offsets = [0, 256], sizes = [8, 32], strides = [1, 1]} : vector<8x384xf32> to vector<8x32xf32>
    %106 = vector.extract_strided_slice %88 {offsets = [0, 256], sizes = [8, 32], strides = [1, 1]} : vector<8x384xf32> to vector<8x32xf32>
    %107 = arith.mulf %96, %106 : vector<8x32xf32>
    %108 = arith.addf %105, %107 : vector<8x32xf32>
    %109 = math.tanh %108 : vector<8x32xf32>
    %cst_45 = arith.constant 1.000000e+00 : f32
    %110 = vector.broadcast %cst_45 : f32 to vector<8x32xf32>
    %111 = arith.subf %110, %104 : vector<8x32xf32>
    %112 = arith.mulf %111, %109 : vector<8x32xf32>
    %113 = arith.mulf %104, %20 : vector<8x32xf32>
    %114 = arith.addf %112, %113 : vector<8x32xf32>
    %c2 = arith.constant 2 : index
    %c0_46 = arith.constant 0 : index
    %c0_47 = arith.constant 0 : index
    %115 = vector.load %arg13[%c2, %c0_46, %c0_47] : memref<10x8x384xf32, #tpu.memory_space<vmem>>, vector<1x8x384xf32>
    %116 = vector.shape_cast %115 : vector<1x8x384xf32> to vector<8x384xf32>
    %c0_48 = arith.constant 0 : index
    %c0_49 = arith.constant 0 : index
    %117 = vector.load %arg3[%c0_48, %c0_49] : memref<32x384xf32, #tpu.memory_space<vmem>>, vector<32x384xf32>
    %cst_50 = arith.constant dense<0.000000e+00> : vector<8x384xf32>
    %118 = tpu.matmul %82, %117, %cst_50 {dimension_numbers = #tpu.dot_dimension_numbers<[1], [0], [0], [1], [0, 0, 1, 1], [], []>} : vector<8x32xf32>, vector<32x384xf32>, vector<8x384xf32> -> vector<8x384xf32>
    %119 = arith.addf %118, %10 : vector<8x384xf32>
    %120 = vector.extract_strided_slice %116 {offsets = [0, 0], sizes = [8, 32], strides = [1, 1]} : vector<8x384xf32> to vector<8x32xf32>
    %121 = vector.extract_strided_slice %119 {offsets = [0, 0], sizes = [8, 32], strides = [1, 1]} : vector<8x384xf32> to vector<8x32xf32>
    %122 = arith.addf %120, %121 : vector<8x32xf32>
    %123 = arith.negf %122 : vector<8x32xf32>
    %124 = math.exp %123 : vector<8x32xf32>
    %cst_51 = arith.constant 1.000000e+00 : f32
    %125 = vector.broadcast %cst_51 : f32 to vector<8x32xf32>
    %126 = arith.addf %125, %124 : vector<8x32xf32>
    %127 = arith.divf %125, %126 : vector<8x32xf32>
    %128 = vector.extract_strided_slice %116 {offsets = [0, 128], sizes = [8, 32], strides = [1, 1]} : vector<8x384xf32> to vector<8x32xf32>
    %129 = vector.extract_strided_slice %119 {offsets = [0, 128], sizes = [8, 32], strides = [1, 1]} : vector<8x384xf32> to vector<8x32xf32>
    %130 = arith.addf %128, %129 : vector<8x32xf32>
    %131 = arith.negf %130 : vector<8x32xf32>
    %132 = math.exp %131 : vector<8x32xf32>
    %cst_52 = arith.constant 1.000000e+00 : f32
    %133 = vector.broadcast %cst_52 : f32 to vector<8x32xf32>
    %134 = arith.addf %133, %132 : vector<8x32xf32>
    %135 = arith.divf %133, %134 : vector<8x32xf32>
    %136 = vector.extract_strided_slice %116 {offsets = [0, 256], sizes = [8, 32], strides = [1, 1]} : vector<8x384xf32> to vector<8x32xf32>
    %137 = vector.extract_strided_slice %119 {offsets = [0, 256], sizes = [8, 32], strides = [1, 1]} : vector<8x384xf32> to vector<8x32xf32>
    %138 = arith.mulf %127, %137 : vector<8x32xf32>
    %139 = arith.addf %136, %138 : vector<8x32xf32>
    %140 = math.tanh %139 : vector<8x32xf32>
    %cst_53 = arith.constant 1.000000e+00 : f32
    %141 = vector.broadcast %cst_53 : f32 to vector<8x32xf32>
    %142 = arith.subf %141, %135 : vector<8x32xf32>
    %143 = arith.mulf %142, %140 : vector<8x32xf32>
    %144 = arith.mulf %135, %82 : vector<8x32xf32>
    %145 = arith.addf %143, %144 : vector<8x32xf32>
    %c0_54 = arith.constant 0 : index
    %c0_55 = arith.constant 0 : index
    %146 = vector.load %arg6[%c0_54, %c0_55] : memref<32x384xf32, #tpu.memory_space<vmem>>, vector<32x384xf32>
    %cst_56 = arith.constant dense<0.000000e+00> : vector<8x384xf32>
    %147 = tpu.matmul %82, %146, %cst_56 {dimension_numbers = #tpu.dot_dimension_numbers<[1], [0], [0], [1], [0, 0, 1, 1], [], []>} : vector<8x32xf32>, vector<32x384xf32>, vector<8x384xf32> -> vector<8x384xf32>
    %148 = arith.addf %147, %16 : vector<8x384xf32>
    %c0_57 = arith.constant 0 : index
    %c0_58 = arith.constant 0 : index
    %149 = vector.load %arg7[%c0_57, %c0_58] : memref<32x384xf32, #tpu.memory_space<vmem>>, vector<32x384xf32>
    %cst_59 = arith.constant dense<0.000000e+00> : vector<8x384xf32>
    %150 = tpu.matmul %114, %149, %cst_59 {dimension_numbers = #tpu.dot_dimension_numbers<[1], [0], [0], [1], [0, 0, 1, 1], [], []>} : vector<8x32xf32>, vector<32x384xf32>, vector<8x384xf32> -> vector<8x384xf32>
    %151 = arith.addf %150, %13 : vector<8x384xf32>
    %152 = vector.extract_strided_slice %148 {offsets = [0, 0], sizes = [8, 32], strides = [1, 1]} : vector<8x384xf32> to vector<8x32xf32>
    %153 = vector.extract_strided_slice %151 {offsets = [0, 0], sizes = [8, 32], strides = [1, 1]} : vector<8x384xf32> to vector<8x32xf32>
    %154 = arith.addf %152, %153 : vector<8x32xf32>
    %155 = arith.negf %154 : vector<8x32xf32>
    %156 = math.exp %155 : vector<8x32xf32>
    %cst_60 = arith.constant 1.000000e+00 : f32
    %157 = vector.broadcast %cst_60 : f32 to vector<8x32xf32>
    %158 = arith.addf %157, %156 : vector<8x32xf32>
    %159 = arith.divf %157, %158 : vector<8x32xf32>
    %160 = vector.extract_strided_slice %148 {offsets = [0, 128], sizes = [8, 32], strides = [1, 1]} : vector<8x384xf32> to vector<8x32xf32>
    %161 = vector.extract_strided_slice %151 {offsets = [0, 128], sizes = [8, 32], strides = [1, 1]} : vector<8x384xf32> to vector<8x32xf32>
    %162 = arith.addf %160, %161 : vector<8x32xf32>
    %163 = arith.negf %162 : vector<8x32xf32>
    %164 = math.exp %163 : vector<8x32xf32>
    %cst_61 = arith.constant 1.000000e+00 : f32
    %165 = vector.broadcast %cst_61 : f32 to vector<8x32xf32>
    %166 = arith.addf %165, %164 : vector<8x32xf32>
    %167 = arith.divf %165, %166 : vector<8x32xf32>
    %168 = vector.extract_strided_slice %148 {offsets = [0, 256], sizes = [8, 32], strides = [1, 1]} : vector<8x384xf32> to vector<8x32xf32>
    %169 = vector.extract_strided_slice %151 {offsets = [0, 256], sizes = [8, 32], strides = [1, 1]} : vector<8x384xf32> to vector<8x32xf32>
    %170 = arith.mulf %159, %169 : vector<8x32xf32>
    %171 = arith.addf %168, %170 : vector<8x32xf32>
    %172 = math.tanh %171 : vector<8x32xf32>
    %cst_62 = arith.constant 1.000000e+00 : f32
    %173 = vector.broadcast %cst_62 : f32 to vector<8x32xf32>
    %174 = arith.subf %173, %167 : vector<8x32xf32>
    %175 = arith.mulf %174, %172 : vector<8x32xf32>
    %176 = arith.mulf %167, %114 : vector<8x32xf32>
    %177 = arith.addf %175, %176 : vector<8x32xf32>
    %c3 = arith.constant 3 : index
    %c0_63 = arith.constant 0 : index
    %c0_64 = arith.constant 0 : index
    %178 = vector.load %arg13[%c3, %c0_63, %c0_64] : memref<10x8x384xf32, #tpu.memory_space<vmem>>, vector<1x8x384xf32>
    %179 = vector.shape_cast %178 : vector<1x8x384xf32> to vector<8x384xf32>
    %c0_65 = arith.constant 0 : index
    %c0_66 = arith.constant 0 : index
    %180 = vector.load %arg3[%c0_65, %c0_66] : memref<32x384xf32, #tpu.memory_space<vmem>>, vector<32x384xf32>
    %cst_67 = arith.constant dense<0.000000e+00> : vector<8x384xf32>
    %181 = tpu.matmul %145, %180, %cst_67 {dimension_numbers = #tpu.dot_dimension_numbers<[1], [0], [0], [1], [0, 0, 1, 1], [], []>} : vector<8x32xf32>, vector<32x384xf32>, vector<8x384xf32> -> vector<8x384xf32>
    %182 = arith.addf %181, %10 : vector<8x384xf32>
    %183 = vector.extract_strided_slice %179 {offsets = [0, 0], sizes = [8, 32], strides = [1, 1]} : vector<8x384xf32> to vector<8x32xf32>
    %184 = vector.extract_strided_slice %182 {offsets = [0, 0], sizes = [8, 32], strides = [1, 1]} : vector<8x384xf32> to vector<8x32xf32>
    %185 = arith.addf %183, %184 : vector<8x32xf32>
    %186 = arith.negf %185 : vector<8x32xf32>
    %187 = math.exp %186 : vector<8x32xf32>
    %cst_68 = arith.constant 1.000000e+00 : f32
    %188 = vector.broadcast %cst_68 : f32 to vector<8x32xf32>
    %189 = arith.addf %188, %187 : vector<8x32xf32>
    %190 = arith.divf %188, %189 : vector<8x32xf32>
    %191 = vector.extract_strided_slice %179 {offsets = [0, 128], sizes = [8, 32], strides = [1, 1]} : vector<8x384xf32> to vector<8x32xf32>
    %192 = vector.extract_strided_slice %182 {offsets = [0, 128], sizes = [8, 32], strides = [1, 1]} : vector<8x384xf32> to vector<8x32xf32>
    %193 = arith.addf %191, %192 : vector<8x32xf32>
    %194 = arith.negf %193 : vector<8x32xf32>
    %195 = math.exp %194 : vector<8x32xf32>
    %cst_69 = arith.constant 1.000000e+00 : f32
    %196 = vector.broadcast %cst_69 : f32 to vector<8x32xf32>
    %197 = arith.addf %196, %195 : vector<8x32xf32>
    %198 = arith.divf %196, %197 : vector<8x32xf32>
    %199 = vector.extract_strided_slice %179 {offsets = [0, 256], sizes = [8, 32], strides = [1, 1]} : vector<8x384xf32> to vector<8x32xf32>
    %200 = vector.extract_strided_slice %182 {offsets = [0, 256], sizes = [8, 32], strides = [1, 1]} : vector<8x384xf32> to vector<8x32xf32>
    %201 = arith.mulf %190, %200 : vector<8x32xf32>
    %202 = arith.addf %199, %201 : vector<8x32xf32>
    %203 = math.tanh %202 : vector<8x32xf32>
    %cst_70 = arith.constant 1.000000e+00 : f32
    %204 = vector.broadcast %cst_70 : f32 to vector<8x32xf32>
    %205 = arith.subf %204, %198 : vector<8x32xf32>
    %206 = arith.mulf %205, %203 : vector<8x32xf32>
    %207 = arith.mulf %198, %145 : vector<8x32xf32>
    %208 = arith.addf %206, %207 : vector<8x32xf32>
    %c0_71 = arith.constant 0 : index
    %c0_72 = arith.constant 0 : index
    %209 = vector.load %arg6[%c0_71, %c0_72] : memref<32x384xf32, #tpu.memory_space<vmem>>, vector<32x384xf32>
    %cst_73 = arith.constant dense<0.000000e+00> : vector<8x384xf32>
    %210 = tpu.matmul %145, %209, %cst_73 {dimension_numbers = #tpu.dot_dimension_numbers<[1], [0], [0], [1], [0, 0, 1, 1], [], []>} : vector<8x32xf32>, vector<32x384xf32>, vector<8x384xf32> -> vector<8x384xf32>
    %211 = arith.addf %210, %16 : vector<8x384xf32>
    %c0_74 = arith.constant 0 : index
    %c0_75 = arith.constant 0 : index
    %212 = vector.load %arg7[%c0_74, %c0_75] : memref<32x384xf32, #tpu.memory_space<vmem>>, vector<32x384xf32>
    %cst_76 = arith.constant dense<0.000000e+00> : vector<8x384xf32>
    %213 = tpu.matmul %177, %212, %cst_76 {dimension_numbers = #tpu.dot_dimension_numbers<[1], [0], [0], [1], [0, 0, 1, 1], [], []>} : vector<8x32xf32>, vector<32x384xf32>, vector<8x384xf32> -> vector<8x384xf32>
    %214 = arith.addf %213, %13 : vector<8x384xf32>
    %215 = vector.extract_strided_slice %211 {offsets = [0, 0], sizes = [8, 32], strides = [1, 1]} : vector<8x384xf32> to vector<8x32xf32>
    %216 = vector.extract_strided_slice %214 {offsets = [0, 0], sizes = [8, 32], strides = [1, 1]} : vector<8x384xf32> to vector<8x32xf32>
    %217 = arith.addf %215, %216 : vector<8x32xf32>
    %218 = arith.negf %217 : vector<8x32xf32>
    %219 = math.exp %218 : vector<8x32xf32>
    %cst_77 = arith.constant 1.000000e+00 : f32
    %220 = vector.broadcast %cst_77 : f32 to vector<8x32xf32>
    %221 = arith.addf %220, %219 : vector<8x32xf32>
    %222 = arith.divf %220, %221 : vector<8x32xf32>
    %223 = vector.extract_strided_slice %211 {offsets = [0, 128], sizes = [8, 32], strides = [1, 1]} : vector<8x384xf32> to vector<8x32xf32>
    %224 = vector.extract_strided_slice %214 {offsets = [0, 128], sizes = [8, 32], strides = [1, 1]} : vector<8x384xf32> to vector<8x32xf32>
    %225 = arith.addf %223, %224 : vector<8x32xf32>
    %226 = arith.negf %225 : vector<8x32xf32>
    %227 = math.exp %226 : vector<8x32xf32>
    %cst_78 = arith.constant 1.000000e+00 : f32
    %228 = vector.broadcast %cst_78 : f32 to vector<8x32xf32>
    %229 = arith.addf %228, %227 : vector<8x32xf32>
    %230 = arith.divf %228, %229 : vector<8x32xf32>
    %231 = vector.extract_strided_slice %211 {offsets = [0, 256], sizes = [8, 32], strides = [1, 1]} : vector<8x384xf32> to vector<8x32xf32>
    %232 = vector.extract_strided_slice %214 {offsets = [0, 256], sizes = [8, 32], strides = [1, 1]} : vector<8x384xf32> to vector<8x32xf32>
    %233 = arith.mulf %222, %232 : vector<8x32xf32>
    %234 = arith.addf %231, %233 : vector<8x32xf32>
    %235 = math.tanh %234 : vector<8x32xf32>
    %cst_79 = arith.constant 1.000000e+00 : f32
    %236 = vector.broadcast %cst_79 : f32 to vector<8x32xf32>
    %237 = arith.subf %236, %230 : vector<8x32xf32>
    %238 = arith.mulf %237, %235 : vector<8x32xf32>
    %239 = arith.mulf %230, %177 : vector<8x32xf32>
    %240 = arith.addf %238, %239 : vector<8x32xf32>
    %c4 = arith.constant 4 : index
    %c0_80 = arith.constant 0 : index
    %c0_81 = arith.constant 0 : index
    %241 = vector.load %arg13[%c4, %c0_80, %c0_81] : memref<10x8x384xf32, #tpu.memory_space<vmem>>, vector<1x8x384xf32>
    %242 = vector.shape_cast %241 : vector<1x8x384xf32> to vector<8x384xf32>
    %c0_82 = arith.constant 0 : index
    %c0_83 = arith.constant 0 : index
    %243 = vector.load %arg3[%c0_82, %c0_83] : memref<32x384xf32, #tpu.memory_space<vmem>>, vector<32x384xf32>
    %cst_84 = arith.constant dense<0.000000e+00> : vector<8x384xf32>
    %244 = tpu.matmul %208, %243, %cst_84 {dimension_numbers = #tpu.dot_dimension_numbers<[1], [0], [0], [1], [0, 0, 1, 1], [], []>} : vector<8x32xf32>, vector<32x384xf32>, vector<8x384xf32> -> vector<8x384xf32>
    %245 = arith.addf %244, %10 : vector<8x384xf32>
    %246 = vector.extract_strided_slice %242 {offsets = [0, 0], sizes = [8, 32], strides = [1, 1]} : vector<8x384xf32> to vector<8x32xf32>
    %247 = vector.extract_strided_slice %245 {offsets = [0, 0], sizes = [8, 32], strides = [1, 1]} : vector<8x384xf32> to vector<8x32xf32>
    %248 = arith.addf %246, %247 : vector<8x32xf32>
    %249 = arith.negf %248 : vector<8x32xf32>
    %250 = math.exp %249 : vector<8x32xf32>
    %cst_85 = arith.constant 1.000000e+00 : f32
    %251 = vector.broadcast %cst_85 : f32 to vector<8x32xf32>
    %252 = arith.addf %251, %250 : vector<8x32xf32>
    %253 = arith.divf %251, %252 : vector<8x32xf32>
    %254 = vector.extract_strided_slice %242 {offsets = [0, 128], sizes = [8, 32], strides = [1, 1]} : vector<8x384xf32> to vector<8x32xf32>
    %255 = vector.extract_strided_slice %245 {offsets = [0, 128], sizes = [8, 32], strides = [1, 1]} : vector<8x384xf32> to vector<8x32xf32>
    %256 = arith.addf %254, %255 : vector<8x32xf32>
    %257 = arith.negf %256 : vector<8x32xf32>
    %258 = math.exp %257 : vector<8x32xf32>
    %cst_86 = arith.constant 1.000000e+00 : f32
    %259 = vector.broadcast %cst_86 : f32 to vector<8x32xf32>
    %260 = arith.addf %259, %258 : vector<8x32xf32>
    %261 = arith.divf %259, %260 : vector<8x32xf32>
    %262 = vector.extract_strided_slice %242 {offsets = [0, 256], sizes = [8, 32], strides = [1, 1]} : vector<8x384xf32> to vector<8x32xf32>
    %263 = vector.extract_strided_slice %245 {offsets = [0, 256], sizes = [8, 32], strides = [1, 1]} : vector<8x384xf32> to vector<8x32xf32>
    %264 = arith.mulf %253, %263 : vector<8x32xf32>
    %265 = arith.addf %262, %264 : vector<8x32xf32>
    %266 = math.tanh %265 : vector<8x32xf32>
    %cst_87 = arith.constant 1.000000e+00 : f32
    %267 = vector.broadcast %cst_87 : f32 to vector<8x32xf32>
    %268 = arith.subf %267, %261 : vector<8x32xf32>
    %269 = arith.mulf %268, %266 : vector<8x32xf32>
    %270 = arith.mulf %261, %208 : vector<8x32xf32>
    %271 = arith.addf %269, %270 : vector<8x32xf32>
    %c0_88 = arith.constant 0 : index
    %c0_89 = arith.constant 0 : index
    %272 = vector.load %arg6[%c0_88, %c0_89] : memref<32x384xf32, #tpu.memory_space<vmem>>, vector<32x384xf32>
    %cst_90 = arith.constant dense<0.000000e+00> : vector<8x384xf32>
    %273 = tpu.matmul %208, %272, %cst_90 {dimension_numbers = #tpu.dot_dimension_numbers<[1], [0], [0], [1], [0, 0, 1, 1], [], []>} : vector<8x32xf32>, vector<32x384xf32>, vector<8x384xf32> -> vector<8x384xf32>
    %274 = arith.addf %273, %16 : vector<8x384xf32>
    %c0_91 = arith.constant 0 : index
    %c0_92 = arith.constant 0 : index
    %275 = vector.load %arg7[%c0_91, %c0_92] : memref<32x384xf32, #tpu.memory_space<vmem>>, vector<32x384xf32>
    %cst_93 = arith.constant dense<0.000000e+00> : vector<8x384xf32>
    %276 = tpu.matmul %240, %275, %cst_93 {dimension_numbers = #tpu.dot_dimension_numbers<[1], [0], [0], [1], [0, 0, 1, 1], [], []>} : vector<8x32xf32>, vector<32x384xf32>, vector<8x384xf32> -> vector<8x384xf32>
    %277 = arith.addf %276, %13 : vector<8x384xf32>
    %278 = vector.extract_strided_slice %274 {offsets = [0, 0], sizes = [8, 32], strides = [1, 1]} : vector<8x384xf32> to vector<8x32xf32>
    %279 = vector.extract_strided_slice %277 {offsets = [0, 0], sizes = [8, 32], strides = [1, 1]} : vector<8x384xf32> to vector<8x32xf32>
    %280 = arith.addf %278, %279 : vector<8x32xf32>
    %281 = arith.negf %280 : vector<8x32xf32>
    %282 = math.exp %281 : vector<8x32xf32>
    %cst_94 = arith.constant 1.000000e+00 : f32
    %283 = vector.broadcast %cst_94 : f32 to vector<8x32xf32>
    %284 = arith.addf %283, %282 : vector<8x32xf32>
    %285 = arith.divf %283, %284 : vector<8x32xf32>
    %286 = vector.extract_strided_slice %274 {offsets = [0, 128], sizes = [8, 32], strides = [1, 1]} : vector<8x384xf32> to vector<8x32xf32>
    %287 = vector.extract_strided_slice %277 {offsets = [0, 128], sizes = [8, 32], strides = [1, 1]} : vector<8x384xf32> to vector<8x32xf32>
    %288 = arith.addf %286, %287 : vector<8x32xf32>
    %289 = arith.negf %288 : vector<8x32xf32>
    %290 = math.exp %289 : vector<8x32xf32>
    %cst_95 = arith.constant 1.000000e+00 : f32
    %291 = vector.broadcast %cst_95 : f32 to vector<8x32xf32>
    %292 = arith.addf %291, %290 : vector<8x32xf32>
    %293 = arith.divf %291, %292 : vector<8x32xf32>
    %294 = vector.extract_strided_slice %274 {offsets = [0, 256], sizes = [8, 32], strides = [1, 1]} : vector<8x384xf32> to vector<8x32xf32>
    %295 = vector.extract_strided_slice %277 {offsets = [0, 256], sizes = [8, 32], strides = [1, 1]} : vector<8x384xf32> to vector<8x32xf32>
    %296 = arith.mulf %285, %295 : vector<8x32xf32>
    %297 = arith.addf %294, %296 : vector<8x32xf32>
    %298 = math.tanh %297 : vector<8x32xf32>
    %cst_96 = arith.constant 1.000000e+00 : f32
    %299 = vector.broadcast %cst_96 : f32 to vector<8x32xf32>
    %300 = arith.subf %299, %293 : vector<8x32xf32>
    %301 = arith.mulf %300, %298 : vector<8x32xf32>
    %302 = arith.mulf %293, %240 : vector<8x32xf32>
    %303 = arith.addf %301, %302 : vector<8x32xf32>
    %c5 = arith.constant 5 : index
    %c0_97 = arith.constant 0 : index
    %c0_98 = arith.constant 0 : index
    %304 = vector.load %arg13[%c5, %c0_97, %c0_98] : memref<10x8x384xf32, #tpu.memory_space<vmem>>, vector<1x8x384xf32>
    %305 = vector.shape_cast %304 : vector<1x8x384xf32> to vector<8x384xf32>
    %c0_99 = arith.constant 0 : index
    %c0_100 = arith.constant 0 : index
    %306 = vector.load %arg3[%c0_99, %c0_100] : memref<32x384xf32, #tpu.memory_space<vmem>>, vector<32x384xf32>
    %cst_101 = arith.constant dense<0.000000e+00> : vector<8x384xf32>
    %307 = tpu.matmul %271, %306, %cst_101 {dimension_numbers = #tpu.dot_dimension_numbers<[1], [0], [0], [1], [0, 0, 1, 1], [], []>} : vector<8x32xf32>, vector<32x384xf32>, vector<8x384xf32> -> vector<8x384xf32>
    %308 = arith.addf %307, %10 : vector<8x384xf32>
    %309 = vector.extract_strided_slice %305 {offsets = [0, 0], sizes = [8, 32], strides = [1, 1]} : vector<8x384xf32> to vector<8x32xf32>
    %310 = vector.extract_strided_slice %308 {offsets = [0, 0], sizes = [8, 32], strides = [1, 1]} : vector<8x384xf32> to vector<8x32xf32>
    %311 = arith.addf %309, %310 : vector<8x32xf32>
    %312 = arith.negf %311 : vector<8x32xf32>
    %313 = math.exp %312 : vector<8x32xf32>
    %cst_102 = arith.constant 1.000000e+00 : f32
    %314 = vector.broadcast %cst_102 : f32 to vector<8x32xf32>
    %315 = arith.addf %314, %313 : vector<8x32xf32>
    %316 = arith.divf %314, %315 : vector<8x32xf32>
    %317 = vector.extract_strided_slice %305 {offsets = [0, 128], sizes = [8, 32], strides = [1, 1]} : vector<8x384xf32> to vector<8x32xf32>
    %318 = vector.extract_strided_slice %308 {offsets = [0, 128], sizes = [8, 32], strides = [1, 1]} : vector<8x384xf32> to vector<8x32xf32>
    %319 = arith.addf %317, %318 : vector<8x32xf32>
    %320 = arith.negf %319 : vector<8x32xf32>
    %321 = math.exp %320 : vector<8x32xf32>
    %cst_103 = arith.constant 1.000000e+00 : f32
    %322 = vector.broadcast %cst_103 : f32 to vector<8x32xf32>
    %323 = arith.addf %322, %321 : vector<8x32xf32>
    %324 = arith.divf %322, %323 : vector<8x32xf32>
    %325 = vector.extract_strided_slice %305 {offsets = [0, 256], sizes = [8, 32], strides = [1, 1]} : vector<8x384xf32> to vector<8x32xf32>
    %326 = vector.extract_strided_slice %308 {offsets = [0, 256], sizes = [8, 32], strides = [1, 1]} : vector<8x384xf32> to vector<8x32xf32>
    %327 = arith.mulf %316, %326 : vector<8x32xf32>
    %328 = arith.addf %325, %327 : vector<8x32xf32>
    %329 = math.tanh %328 : vector<8x32xf32>
    %cst_104 = arith.constant 1.000000e+00 : f32
    %330 = vector.broadcast %cst_104 : f32 to vector<8x32xf32>
    %331 = arith.subf %330, %324 : vector<8x32xf32>
    %332 = arith.mulf %331, %329 : vector<8x32xf32>
    %333 = arith.mulf %324, %271 : vector<8x32xf32>
    %334 = arith.addf %332, %333 : vector<8x32xf32>
    %c0_105 = arith.constant 0 : index
    %c0_106 = arith.constant 0 : index
    %335 = vector.load %arg6[%c0_105, %c0_106] : memref<32x384xf32, #tpu.memory_space<vmem>>, vector<32x384xf32>
    %cst_107 = arith.constant dense<0.000000e+00> : vector<8x384xf32>
    %336 = tpu.matmul %271, %335, %cst_107 {dimension_numbers = #tpu.dot_dimension_numbers<[1], [0], [0], [1], [0, 0, 1, 1], [], []>} : vector<8x32xf32>, vector<32x384xf32>, vector<8x384xf32> -> vector<8x384xf32>
    %337 = arith.addf %336, %16 : vector<8x384xf32>
    %c0_108 = arith.constant 0 : index
    %c0_109 = arith.constant 0 : index
    %338 = vector.load %arg7[%c0_108, %c0_109] : memref<32x384xf32, #tpu.memory_space<vmem>>, vector<32x384xf32>
    %cst_110 = arith.constant dense<0.000000e+00> : vector<8x384xf32>
    %339 = tpu.matmul %303, %338, %cst_110 {dimension_numbers = #tpu.dot_dimension_numbers<[1], [0], [0], [1], [0, 0, 1, 1], [], []>} : vector<8x32xf32>, vector<32x384xf32>, vector<8x384xf32> -> vector<8x384xf32>
    %340 = arith.addf %339, %13 : vector<8x384xf32>
    %341 = vector.extract_strided_slice %337 {offsets = [0, 0], sizes = [8, 32], strides = [1, 1]} : vector<8x384xf32> to vector<8x32xf32>
    %342 = vector.extract_strided_slice %340 {offsets = [0, 0], sizes = [8, 32], strides = [1, 1]} : vector<8x384xf32> to vector<8x32xf32>
    %343 = arith.addf %341, %342 : vector<8x32xf32>
    %344 = arith.negf %343 : vector<8x32xf32>
    %345 = math.exp %344 : vector<8x32xf32>
    %cst_111 = arith.constant 1.000000e+00 : f32
    %346 = vector.broadcast %cst_111 : f32 to vector<8x32xf32>
    %347 = arith.addf %346, %345 : vector<8x32xf32>
    %348 = arith.divf %346, %347 : vector<8x32xf32>
    %349 = vector.extract_strided_slice %337 {offsets = [0, 128], sizes = [8, 32], strides = [1, 1]} : vector<8x384xf32> to vector<8x32xf32>
    %350 = vector.extract_strided_slice %340 {offsets = [0, 128], sizes = [8, 32], strides = [1, 1]} : vector<8x384xf32> to vector<8x32xf32>
    %351 = arith.addf %349, %350 : vector<8x32xf32>
    %352 = arith.negf %351 : vector<8x32xf32>
    %353 = math.exp %352 : vector<8x32xf32>
    %cst_112 = arith.constant 1.000000e+00 : f32
    %354 = vector.broadcast %cst_112 : f32 to vector<8x32xf32>
    %355 = arith.addf %354, %353 : vector<8x32xf32>
    %356 = arith.divf %354, %355 : vector<8x32xf32>
    %357 = vector.extract_strided_slice %337 {offsets = [0, 256], sizes = [8, 32], strides = [1, 1]} : vector<8x384xf32> to vector<8x32xf32>
    %358 = vector.extract_strided_slice %340 {offsets = [0, 256], sizes = [8, 32], strides = [1, 1]} : vector<8x384xf32> to vector<8x32xf32>
    %359 = arith.mulf %348, %358 : vector<8x32xf32>
    %360 = arith.addf %357, %359 : vector<8x32xf32>
    %361 = math.tanh %360 : vector<8x32xf32>
    %cst_113 = arith.constant 1.000000e+00 : f32
    %362 = vector.broadcast %cst_113 : f32 to vector<8x32xf32>
    %363 = arith.subf %362, %356 : vector<8x32xf32>
    %364 = arith.mulf %363, %361 : vector<8x32xf32>
    %365 = arith.mulf %356, %303 : vector<8x32xf32>
    %366 = arith.addf %364, %365 : vector<8x32xf32>
    %c6 = arith.constant 6 : index
    %c0_114 = arith.constant 0 : index
    %c0_115 = arith.constant 0 : index
    %367 = vector.load %arg13[%c6, %c0_114, %c0_115] : memref<10x8x384xf32, #tpu.memory_space<vmem>>, vector<1x8x384xf32>
    %368 = vector.shape_cast %367 : vector<1x8x384xf32> to vector<8x384xf32>
    %c0_116 = arith.constant 0 : index
    %c0_117 = arith.constant 0 : index
    %369 = vector.load %arg3[%c0_116, %c0_117] : memref<32x384xf32, #tpu.memory_space<vmem>>, vector<32x384xf32>
    %cst_118 = arith.constant dense<0.000000e+00> : vector<8x384xf32>
    %370 = tpu.matmul %334, %369, %cst_118 {dimension_numbers = #tpu.dot_dimension_numbers<[1], [0], [0], [1], [0, 0, 1, 1], [], []>} : vector<8x32xf32>, vector<32x384xf32>, vector<8x384xf32> -> vector<8x384xf32>
    %371 = arith.addf %370, %10 : vector<8x384xf32>
    %372 = vector.extract_strided_slice %368 {offsets = [0, 0], sizes = [8, 32], strides = [1, 1]} : vector<8x384xf32> to vector<8x32xf32>
    %373 = vector.extract_strided_slice %371 {offsets = [0, 0], sizes = [8, 32], strides = [1, 1]} : vector<8x384xf32> to vector<8x32xf32>
    %374 = arith.addf %372, %373 : vector<8x32xf32>
    %375 = arith.negf %374 : vector<8x32xf32>
    %376 = math.exp %375 : vector<8x32xf32>
    %cst_119 = arith.constant 1.000000e+00 : f32
    %377 = vector.broadcast %cst_119 : f32 to vector<8x32xf32>
    %378 = arith.addf %377, %376 : vector<8x32xf32>
    %379 = arith.divf %377, %378 : vector<8x32xf32>
    %380 = vector.extract_strided_slice %368 {offsets = [0, 128], sizes = [8, 32], strides = [1, 1]} : vector<8x384xf32> to vector<8x32xf32>
    %381 = vector.extract_strided_slice %371 {offsets = [0, 128], sizes = [8, 32], strides = [1, 1]} : vector<8x384xf32> to vector<8x32xf32>
    %382 = arith.addf %380, %381 : vector<8x32xf32>
    %383 = arith.negf %382 : vector<8x32xf32>
    %384 = math.exp %383 : vector<8x32xf32>
    %cst_120 = arith.constant 1.000000e+00 : f32
    %385 = vector.broadcast %cst_120 : f32 to vector<8x32xf32>
    %386 = arith.addf %385, %384 : vector<8x32xf32>
    %387 = arith.divf %385, %386 : vector<8x32xf32>
    %388 = vector.extract_strided_slice %368 {offsets = [0, 256], sizes = [8, 32], strides = [1, 1]} : vector<8x384xf32> to vector<8x32xf32>
    %389 = vector.extract_strided_slice %371 {offsets = [0, 256], sizes = [8, 32], strides = [1, 1]} : vector<8x384xf32> to vector<8x32xf32>
    %390 = arith.mulf %379, %389 : vector<8x32xf32>
    %391 = arith.addf %388, %390 : vector<8x32xf32>
    %392 = math.tanh %391 : vector<8x32xf32>
    %cst_121 = arith.constant 1.000000e+00 : f32
    %393 = vector.broadcast %cst_121 : f32 to vector<8x32xf32>
    %394 = arith.subf %393, %387 : vector<8x32xf32>
    %395 = arith.mulf %394, %392 : vector<8x32xf32>
    %396 = arith.mulf %387, %334 : vector<8x32xf32>
    %397 = arith.addf %395, %396 : vector<8x32xf32>
    %c0_122 = arith.constant 0 : index
    %c0_123 = arith.constant 0 : index
    %398 = vector.load %arg6[%c0_122, %c0_123] : memref<32x384xf32, #tpu.memory_space<vmem>>, vector<32x384xf32>
    %cst_124 = arith.constant dense<0.000000e+00> : vector<8x384xf32>
    %399 = tpu.matmul %334, %398, %cst_124 {dimension_numbers = #tpu.dot_dimension_numbers<[1], [0], [0], [1], [0, 0, 1, 1], [], []>} : vector<8x32xf32>, vector<32x384xf32>, vector<8x384xf32> -> vector<8x384xf32>
    %400 = arith.addf %399, %16 : vector<8x384xf32>
    %c0_125 = arith.constant 0 : index
    %c0_126 = arith.constant 0 : index
    %401 = vector.load %arg7[%c0_125, %c0_126] : memref<32x384xf32, #tpu.memory_space<vmem>>, vector<32x384xf32>
    %cst_127 = arith.constant dense<0.000000e+00> : vector<8x384xf32>
    %402 = tpu.matmul %366, %401, %cst_127 {dimension_numbers = #tpu.dot_dimension_numbers<[1], [0], [0], [1], [0, 0, 1, 1], [], []>} : vector<8x32xf32>, vector<32x384xf32>, vector<8x384xf32> -> vector<8x384xf32>
    %403 = arith.addf %402, %13 : vector<8x384xf32>
    %404 = vector.extract_strided_slice %400 {offsets = [0, 0], sizes = [8, 32], strides = [1, 1]} : vector<8x384xf32> to vector<8x32xf32>
    %405 = vector.extract_strided_slice %403 {offsets = [0, 0], sizes = [8, 32], strides = [1, 1]} : vector<8x384xf32> to vector<8x32xf32>
    %406 = arith.addf %404, %405 : vector<8x32xf32>
    %407 = arith.negf %406 : vector<8x32xf32>
    %408 = math.exp %407 : vector<8x32xf32>
    %cst_128 = arith.constant 1.000000e+00 : f32
    %409 = vector.broadcast %cst_128 : f32 to vector<8x32xf32>
    %410 = arith.addf %409, %408 : vector<8x32xf32>
    %411 = arith.divf %409, %410 : vector<8x32xf32>
    %412 = vector.extract_strided_slice %400 {offsets = [0, 128], sizes = [8, 32], strides = [1, 1]} : vector<8x384xf32> to vector<8x32xf32>
    %413 = vector.extract_strided_slice %403 {offsets = [0, 128], sizes = [8, 32], strides = [1, 1]} : vector<8x384xf32> to vector<8x32xf32>
    %414 = arith.addf %412, %413 : vector<8x32xf32>
    %415 = arith.negf %414 : vector<8x32xf32>
    %416 = math.exp %415 : vector<8x32xf32>
    %cst_129 = arith.constant 1.000000e+00 : f32
    %417 = vector.broadcast %cst_129 : f32 to vector<8x32xf32>
    %418 = arith.addf %417, %416 : vector<8x32xf32>
    %419 = arith.divf %417, %418 : vector<8x32xf32>
    %420 = vector.extract_strided_slice %400 {offsets = [0, 256], sizes = [8, 32], strides = [1, 1]} : vector<8x384xf32> to vector<8x32xf32>
    %421 = vector.extract_strided_slice %403 {offsets = [0, 256], sizes = [8, 32], strides = [1, 1]} : vector<8x384xf32> to vector<8x32xf32>
    %422 = arith.mulf %411, %421 : vector<8x32xf32>
    %423 = arith.addf %420, %422 : vector<8x32xf32>
    %424 = math.tanh %423 : vector<8x32xf32>
    %cst_130 = arith.constant 1.000000e+00 : f32
    %425 = vector.broadcast %cst_130 : f32 to vector<8x32xf32>
    %426 = arith.subf %425, %419 : vector<8x32xf32>
    %427 = arith.mulf %426, %424 : vector<8x32xf32>
    %428 = arith.mulf %419, %366 : vector<8x32xf32>
    %429 = arith.addf %427, %428 : vector<8x32xf32>
    %c7 = arith.constant 7 : index
    %c0_131 = arith.constant 0 : index
    %c0_132 = arith.constant 0 : index
    %430 = vector.load %arg13[%c7, %c0_131, %c0_132] : memref<10x8x384xf32, #tpu.memory_space<vmem>>, vector<1x8x384xf32>
    %431 = vector.shape_cast %430 : vector<1x8x384xf32> to vector<8x384xf32>
    %c0_133 = arith.constant 0 : index
    %c0_134 = arith.constant 0 : index
    %432 = vector.load %arg3[%c0_133, %c0_134] : memref<32x384xf32, #tpu.memory_space<vmem>>, vector<32x384xf32>
    %cst_135 = arith.constant dense<0.000000e+00> : vector<8x384xf32>
    %433 = tpu.matmul %397, %432, %cst_135 {dimension_numbers = #tpu.dot_dimension_numbers<[1], [0], [0], [1], [0, 0, 1, 1], [], []>} : vector<8x32xf32>, vector<32x384xf32>, vector<8x384xf32> -> vector<8x384xf32>
    %434 = arith.addf %433, %10 : vector<8x384xf32>
    %435 = vector.extract_strided_slice %431 {offsets = [0, 0], sizes = [8, 32], strides = [1, 1]} : vector<8x384xf32> to vector<8x32xf32>
    %436 = vector.extract_strided_slice %434 {offsets = [0, 0], sizes = [8, 32], strides = [1, 1]} : vector<8x384xf32> to vector<8x32xf32>
    %437 = arith.addf %435, %436 : vector<8x32xf32>
    %438 = arith.negf %437 : vector<8x32xf32>
    %439 = math.exp %438 : vector<8x32xf32>
    %cst_136 = arith.constant 1.000000e+00 : f32
    %440 = vector.broadcast %cst_136 : f32 to vector<8x32xf32>
    %441 = arith.addf %440, %439 : vector<8x32xf32>
    %442 = arith.divf %440, %441 : vector<8x32xf32>
    %443 = vector.extract_strided_slice %431 {offsets = [0, 128], sizes = [8, 32], strides = [1, 1]} : vector<8x384xf32> to vector<8x32xf32>
    %444 = vector.extract_strided_slice %434 {offsets = [0, 128], sizes = [8, 32], strides = [1, 1]} : vector<8x384xf32> to vector<8x32xf32>
    %445 = arith.addf %443, %444 : vector<8x32xf32>
    %446 = arith.negf %445 : vector<8x32xf32>
    %447 = math.exp %446 : vector<8x32xf32>
    %cst_137 = arith.constant 1.000000e+00 : f32
    %448 = vector.broadcast %cst_137 : f32 to vector<8x32xf32>
    %449 = arith.addf %448, %447 : vector<8x32xf32>
    %450 = arith.divf %448, %449 : vector<8x32xf32>
    %451 = vector.extract_strided_slice %431 {offsets = [0, 256], sizes = [8, 32], strides = [1, 1]} : vector<8x384xf32> to vector<8x32xf32>
    %452 = vector.extract_strided_slice %434 {offsets = [0, 256], sizes = [8, 32], strides = [1, 1]} : vector<8x384xf32> to vector<8x32xf32>
    %453 = arith.mulf %442, %452 : vector<8x32xf32>
    %454 = arith.addf %451, %453 : vector<8x32xf32>
    %455 = math.tanh %454 : vector<8x32xf32>
    %cst_138 = arith.constant 1.000000e+00 : f32
    %456 = vector.broadcast %cst_138 : f32 to vector<8x32xf32>
    %457 = arith.subf %456, %450 : vector<8x32xf32>
    %458 = arith.mulf %457, %455 : vector<8x32xf32>
    %459 = arith.mulf %450, %397 : vector<8x32xf32>
    %460 = arith.addf %458, %459 : vector<8x32xf32>
    %c0_139 = arith.constant 0 : index
    %c0_140 = arith.constant 0 : index
    %461 = vector.load %arg6[%c0_139, %c0_140] : memref<32x384xf32, #tpu.memory_space<vmem>>, vector<32x384xf32>
    %cst_141 = arith.constant dense<0.000000e+00> : vector<8x384xf32>
    %462 = tpu.matmul %397, %461, %cst_141 {dimension_numbers = #tpu.dot_dimension_numbers<[1], [0], [0], [1], [0, 0, 1, 1], [], []>} : vector<8x32xf32>, vector<32x384xf32>, vector<8x384xf32> -> vector<8x384xf32>
    %463 = arith.addf %462, %16 : vector<8x384xf32>
    %c0_142 = arith.constant 0 : index
    %c0_143 = arith.constant 0 : index
    %464 = vector.load %arg7[%c0_142, %c0_143] : memref<32x384xf32, #tpu.memory_space<vmem>>, vector<32x384xf32>
    %cst_144 = arith.constant dense<0.000000e+00> : vector<8x384xf32>
    %465 = tpu.matmul %429, %464, %cst_144 {dimension_numbers = #tpu.dot_dimension_numbers<[1], [0], [0], [1], [0, 0, 1, 1], [], []>} : vector<8x32xf32>, vector<32x384xf32>, vector<8x384xf32> -> vector<8x384xf32>
    %466 = arith.addf %465, %13 : vector<8x384xf32>
    %467 = vector.extract_strided_slice %463 {offsets = [0, 0], sizes = [8, 32], strides = [1, 1]} : vector<8x384xf32> to vector<8x32xf32>
    %468 = vector.extract_strided_slice %466 {offsets = [0, 0], sizes = [8, 32], strides = [1, 1]} : vector<8x384xf32> to vector<8x32xf32>
    %469 = arith.addf %467, %468 : vector<8x32xf32>
    %470 = arith.negf %469 : vector<8x32xf32>
    %471 = math.exp %470 : vector<8x32xf32>
    %cst_145 = arith.constant 1.000000e+00 : f32
    %472 = vector.broadcast %cst_145 : f32 to vector<8x32xf32>
    %473 = arith.addf %472, %471 : vector<8x32xf32>
    %474 = arith.divf %472, %473 : vector<8x32xf32>
    %475 = vector.extract_strided_slice %463 {offsets = [0, 128], sizes = [8, 32], strides = [1, 1]} : vector<8x384xf32> to vector<8x32xf32>
    %476 = vector.extract_strided_slice %466 {offsets = [0, 128], sizes = [8, 32], strides = [1, 1]} : vector<8x384xf32> to vector<8x32xf32>
    %477 = arith.addf %475, %476 : vector<8x32xf32>
    %478 = arith.negf %477 : vector<8x32xf32>
    %479 = math.exp %478 : vector<8x32xf32>
    %cst_146 = arith.constant 1.000000e+00 : f32
    %480 = vector.broadcast %cst_146 : f32 to vector<8x32xf32>
    %481 = arith.addf %480, %479 : vector<8x32xf32>
    %482 = arith.divf %480, %481 : vector<8x32xf32>
    %483 = vector.extract_strided_slice %463 {offsets = [0, 256], sizes = [8, 32], strides = [1, 1]} : vector<8x384xf32> to vector<8x32xf32>
    %484 = vector.extract_strided_slice %466 {offsets = [0, 256], sizes = [8, 32], strides = [1, 1]} : vector<8x384xf32> to vector<8x32xf32>
    %485 = arith.mulf %474, %484 : vector<8x32xf32>
    %486 = arith.addf %483, %485 : vector<8x32xf32>
    %487 = math.tanh %486 : vector<8x32xf32>
    %cst_147 = arith.constant 1.000000e+00 : f32
    %488 = vector.broadcast %cst_147 : f32 to vector<8x32xf32>
    %489 = arith.subf %488, %482 : vector<8x32xf32>
    %490 = arith.mulf %489, %487 : vector<8x32xf32>
    %491 = arith.mulf %482, %429 : vector<8x32xf32>
    %492 = arith.addf %490, %491 : vector<8x32xf32>
    %c8 = arith.constant 8 : index
    %c0_148 = arith.constant 0 : index
    %c0_149 = arith.constant 0 : index
    %493 = vector.load %arg13[%c8, %c0_148, %c0_149] : memref<10x8x384xf32, #tpu.memory_space<vmem>>, vector<1x8x384xf32>
    %494 = vector.shape_cast %493 : vector<1x8x384xf32> to vector<8x384xf32>
    %c0_150 = arith.constant 0 : index
    %c0_151 = arith.constant 0 : index
    %495 = vector.load %arg3[%c0_150, %c0_151] : memref<32x384xf32, #tpu.memory_space<vmem>>, vector<32x384xf32>
    %cst_152 = arith.constant dense<0.000000e+00> : vector<8x384xf32>
    %496 = tpu.matmul %460, %495, %cst_152 {dimension_numbers = #tpu.dot_dimension_numbers<[1], [0], [0], [1], [0, 0, 1, 1], [], []>} : vector<8x32xf32>, vector<32x384xf32>, vector<8x384xf32> -> vector<8x384xf32>
    %497 = arith.addf %496, %10 : vector<8x384xf32>
    %498 = vector.extract_strided_slice %494 {offsets = [0, 0], sizes = [8, 32], strides = [1, 1]} : vector<8x384xf32> to vector<8x32xf32>
    %499 = vector.extract_strided_slice %497 {offsets = [0, 0], sizes = [8, 32], strides = [1, 1]} : vector<8x384xf32> to vector<8x32xf32>
    %500 = arith.addf %498, %499 : vector<8x32xf32>
    %501 = arith.negf %500 : vector<8x32xf32>
    %502 = math.exp %501 : vector<8x32xf32>
    %cst_153 = arith.constant 1.000000e+00 : f32
    %503 = vector.broadcast %cst_153 : f32 to vector<8x32xf32>
    %504 = arith.addf %503, %502 : vector<8x32xf32>
    %505 = arith.divf %503, %504 : vector<8x32xf32>
    %506 = vector.extract_strided_slice %494 {offsets = [0, 128], sizes = [8, 32], strides = [1, 1]} : vector<8x384xf32> to vector<8x32xf32>
    %507 = vector.extract_strided_slice %497 {offsets = [0, 128], sizes = [8, 32], strides = [1, 1]} : vector<8x384xf32> to vector<8x32xf32>
    %508 = arith.addf %506, %507 : vector<8x32xf32>
    %509 = arith.negf %508 : vector<8x32xf32>
    %510 = math.exp %509 : vector<8x32xf32>
    %cst_154 = arith.constant 1.000000e+00 : f32
    %511 = vector.broadcast %cst_154 : f32 to vector<8x32xf32>
    %512 = arith.addf %511, %510 : vector<8x32xf32>
    %513 = arith.divf %511, %512 : vector<8x32xf32>
    %514 = vector.extract_strided_slice %494 {offsets = [0, 256], sizes = [8, 32], strides = [1, 1]} : vector<8x384xf32> to vector<8x32xf32>
    %515 = vector.extract_strided_slice %497 {offsets = [0, 256], sizes = [8, 32], strides = [1, 1]} : vector<8x384xf32> to vector<8x32xf32>
    %516 = arith.mulf %505, %515 : vector<8x32xf32>
    %517 = arith.addf %514, %516 : vector<8x32xf32>
    %518 = math.tanh %517 : vector<8x32xf32>
    %cst_155 = arith.constant 1.000000e+00 : f32
    %519 = vector.broadcast %cst_155 : f32 to vector<8x32xf32>
    %520 = arith.subf %519, %513 : vector<8x32xf32>
    %521 = arith.mulf %520, %518 : vector<8x32xf32>
    %522 = arith.mulf %513, %460 : vector<8x32xf32>
    %523 = arith.addf %521, %522 : vector<8x32xf32>
    %c0_156 = arith.constant 0 : index
    %c0_157 = arith.constant 0 : index
    %524 = vector.load %arg6[%c0_156, %c0_157] : memref<32x384xf32, #tpu.memory_space<vmem>>, vector<32x384xf32>
    %cst_158 = arith.constant dense<0.000000e+00> : vector<8x384xf32>
    %525 = tpu.matmul %460, %524, %cst_158 {dimension_numbers = #tpu.dot_dimension_numbers<[1], [0], [0], [1], [0, 0, 1, 1], [], []>} : vector<8x32xf32>, vector<32x384xf32>, vector<8x384xf32> -> vector<8x384xf32>
    %526 = arith.addf %525, %16 : vector<8x384xf32>
    %c0_159 = arith.constant 0 : index
    %c0_160 = arith.constant 0 : index
    %527 = vector.load %arg7[%c0_159, %c0_160] : memref<32x384xf32, #tpu.memory_space<vmem>>, vector<32x384xf32>
    %cst_161 = arith.constant dense<0.000000e+00> : vector<8x384xf32>
    %528 = tpu.matmul %492, %527, %cst_161 {dimension_numbers = #tpu.dot_dimension_numbers<[1], [0], [0], [1], [0, 0, 1, 1], [], []>} : vector<8x32xf32>, vector<32x384xf32>, vector<8x384xf32> -> vector<8x384xf32>
    %529 = arith.addf %528, %13 : vector<8x384xf32>
    %530 = vector.extract_strided_slice %526 {offsets = [0, 0], sizes = [8, 32], strides = [1, 1]} : vector<8x384xf32> to vector<8x32xf32>
    %531 = vector.extract_strided_slice %529 {offsets = [0, 0], sizes = [8, 32], strides = [1, 1]} : vector<8x384xf32> to vector<8x32xf32>
    %532 = arith.addf %530, %531 : vector<8x32xf32>
    %533 = arith.negf %532 : vector<8x32xf32>
    %534 = math.exp %533 : vector<8x32xf32>
    %cst_162 = arith.constant 1.000000e+00 : f32
    %535 = vector.broadcast %cst_162 : f32 to vector<8x32xf32>
    %536 = arith.addf %535, %534 : vector<8x32xf32>
    %537 = arith.divf %535, %536 : vector<8x32xf32>
    %538 = vector.extract_strided_slice %526 {offsets = [0, 128], sizes = [8, 32], strides = [1, 1]} : vector<8x384xf32> to vector<8x32xf32>
    %539 = vector.extract_strided_slice %529 {offsets = [0, 128], sizes = [8, 32], strides = [1, 1]} : vector<8x384xf32> to vector<8x32xf32>
    %540 = arith.addf %538, %539 : vector<8x32xf32>
    %541 = arith.negf %540 : vector<8x32xf32>
    %542 = math.exp %541 : vector<8x32xf32>
    %cst_163 = arith.constant 1.000000e+00 : f32
    %543 = vector.broadcast %cst_163 : f32 to vector<8x32xf32>
    %544 = arith.addf %543, %542 : vector<8x32xf32>
    %545 = arith.divf %543, %544 : vector<8x32xf32>
    %546 = vector.extract_strided_slice %526 {offsets = [0, 256], sizes = [8, 32], strides = [1, 1]} : vector<8x384xf32> to vector<8x32xf32>
    %547 = vector.extract_strided_slice %529 {offsets = [0, 256], sizes = [8, 32], strides = [1, 1]} : vector<8x384xf32> to vector<8x32xf32>
    %548 = arith.mulf %537, %547 : vector<8x32xf32>
    %549 = arith.addf %546, %548 : vector<8x32xf32>
    %550 = math.tanh %549 : vector<8x32xf32>
    %cst_164 = arith.constant 1.000000e+00 : f32
    %551 = vector.broadcast %cst_164 : f32 to vector<8x32xf32>
    %552 = arith.subf %551, %545 : vector<8x32xf32>
    %553 = arith.mulf %552, %550 : vector<8x32xf32>
    %554 = arith.mulf %545, %492 : vector<8x32xf32>
    %555 = arith.addf %553, %554 : vector<8x32xf32>
    %c9 = arith.constant 9 : index
    %c0_165 = arith.constant 0 : index
    %c0_166 = arith.constant 0 : index
    %556 = vector.load %arg13[%c9, %c0_165, %c0_166] : memref<10x8x384xf32, #tpu.memory_space<vmem>>, vector<1x8x384xf32>
    %557 = vector.shape_cast %556 : vector<1x8x384xf32> to vector<8x384xf32>
    %c0_167 = arith.constant 0 : index
    %c0_168 = arith.constant 0 : index
    %558 = vector.load %arg3[%c0_167, %c0_168] : memref<32x384xf32, #tpu.memory_space<vmem>>, vector<32x384xf32>
    %cst_169 = arith.constant dense<0.000000e+00> : vector<8x384xf32>
    %559 = tpu.matmul %523, %558, %cst_169 {dimension_numbers = #tpu.dot_dimension_numbers<[1], [0], [0], [1], [0, 0, 1, 1], [], []>} : vector<8x32xf32>, vector<32x384xf32>, vector<8x384xf32> -> vector<8x384xf32>
    %560 = arith.addf %559, %10 : vector<8x384xf32>
    %561 = vector.extract_strided_slice %557 {offsets = [0, 0], sizes = [8, 32], strides = [1, 1]} : vector<8x384xf32> to vector<8x32xf32>
    %562 = vector.extract_strided_slice %560 {offsets = [0, 0], sizes = [8, 32], strides = [1, 1]} : vector<8x384xf32> to vector<8x32xf32>
    %563 = arith.addf %561, %562 : vector<8x32xf32>
    %564 = arith.negf %563 : vector<8x32xf32>
    %565 = math.exp %564 : vector<8x32xf32>
    %cst_170 = arith.constant 1.000000e+00 : f32
    %566 = vector.broadcast %cst_170 : f32 to vector<8x32xf32>
    %567 = arith.addf %566, %565 : vector<8x32xf32>
    %568 = arith.divf %566, %567 : vector<8x32xf32>
    %569 = vector.extract_strided_slice %557 {offsets = [0, 128], sizes = [8, 32], strides = [1, 1]} : vector<8x384xf32> to vector<8x32xf32>
    %570 = vector.extract_strided_slice %560 {offsets = [0, 128], sizes = [8, 32], strides = [1, 1]} : vector<8x384xf32> to vector<8x32xf32>
    %571 = arith.addf %569, %570 : vector<8x32xf32>
    %572 = arith.negf %571 : vector<8x32xf32>
    %573 = math.exp %572 : vector<8x32xf32>
    %cst_171 = arith.constant 1.000000e+00 : f32
    %574 = vector.broadcast %cst_171 : f32 to vector<8x32xf32>
    %575 = arith.addf %574, %573 : vector<8x32xf32>
    %576 = arith.divf %574, %575 : vector<8x32xf32>
    %577 = vector.extract_strided_slice %557 {offsets = [0, 256], sizes = [8, 32], strides = [1, 1]} : vector<8x384xf32> to vector<8x32xf32>
    %578 = vector.extract_strided_slice %560 {offsets = [0, 256], sizes = [8, 32], strides = [1, 1]} : vector<8x384xf32> to vector<8x32xf32>
    %579 = arith.mulf %568, %578 : vector<8x32xf32>
    %580 = arith.addf %577, %579 : vector<8x32xf32>
    %581 = math.tanh %580 : vector<8x32xf32>
    %cst_172 = arith.constant 1.000000e+00 : f32
    %582 = vector.broadcast %cst_172 : f32 to vector<8x32xf32>
    %583 = arith.subf %582, %576 : vector<8x32xf32>
    %584 = arith.mulf %583, %581 : vector<8x32xf32>
    %585 = arith.mulf %576, %523 : vector<8x32xf32>
    %586 = arith.addf %584, %585 : vector<8x32xf32>
    %c0_173 = arith.constant 0 : index
    %c0_174 = arith.constant 0 : index
    %587 = vector.load %arg6[%c0_173, %c0_174] : memref<32x384xf32, #tpu.memory_space<vmem>>, vector<32x384xf32>
    %cst_175 = arith.constant dense<0.000000e+00> : vector<8x384xf32>
    %588 = tpu.matmul %523, %587, %cst_175 {dimension_numbers = #tpu.dot_dimension_numbers<[1], [0], [0], [1], [0, 0, 1, 1], [], []>} : vector<8x32xf32>, vector<32x384xf32>, vector<8x384xf32> -> vector<8x384xf32>
    %589 = arith.addf %588, %16 : vector<8x384xf32>
    %c0_176 = arith.constant 0 : index
    %c0_177 = arith.constant 0 : index
    %590 = vector.load %arg7[%c0_176, %c0_177] : memref<32x384xf32, #tpu.memory_space<vmem>>, vector<32x384xf32>
    %cst_178 = arith.constant dense<0.000000e+00> : vector<8x384xf32>
    %591 = tpu.matmul %555, %590, %cst_178 {dimension_numbers = #tpu.dot_dimension_numbers<[1], [0], [0], [1], [0, 0, 1, 1], [], []>} : vector<8x32xf32>, vector<32x384xf32>, vector<8x384xf32> -> vector<8x384xf32>
    %592 = arith.addf %591, %13 : vector<8x384xf32>
    %593 = vector.extract_strided_slice %589 {offsets = [0, 0], sizes = [8, 32], strides = [1, 1]} : vector<8x384xf32> to vector<8x32xf32>
    %594 = vector.extract_strided_slice %592 {offsets = [0, 0], sizes = [8, 32], strides = [1, 1]} : vector<8x384xf32> to vector<8x32xf32>
    %595 = arith.addf %593, %594 : vector<8x32xf32>
    %596 = arith.negf %595 : vector<8x32xf32>
    %597 = math.exp %596 : vector<8x32xf32>
    %cst_179 = arith.constant 1.000000e+00 : f32
    %598 = vector.broadcast %cst_179 : f32 to vector<8x32xf32>
    %599 = arith.addf %598, %597 : vector<8x32xf32>
    %600 = arith.divf %598, %599 : vector<8x32xf32>
    %601 = vector.extract_strided_slice %589 {offsets = [0, 128], sizes = [8, 32], strides = [1, 1]} : vector<8x384xf32> to vector<8x32xf32>
    %602 = vector.extract_strided_slice %592 {offsets = [0, 128], sizes = [8, 32], strides = [1, 1]} : vector<8x384xf32> to vector<8x32xf32>
    %603 = arith.addf %601, %602 : vector<8x32xf32>
    %604 = arith.negf %603 : vector<8x32xf32>
    %605 = math.exp %604 : vector<8x32xf32>
    %cst_180 = arith.constant 1.000000e+00 : f32
    %606 = vector.broadcast %cst_180 : f32 to vector<8x32xf32>
    %607 = arith.addf %606, %605 : vector<8x32xf32>
    %608 = arith.divf %606, %607 : vector<8x32xf32>
    %609 = vector.extract_strided_slice %589 {offsets = [0, 256], sizes = [8, 32], strides = [1, 1]} : vector<8x384xf32> to vector<8x32xf32>
    %610 = vector.extract_strided_slice %592 {offsets = [0, 256], sizes = [8, 32], strides = [1, 1]} : vector<8x384xf32> to vector<8x32xf32>
    %611 = arith.mulf %600, %610 : vector<8x32xf32>
    %612 = arith.addf %609, %611 : vector<8x32xf32>
    %613 = math.tanh %612 : vector<8x32xf32>
    %cst_181 = arith.constant 1.000000e+00 : f32
    %614 = vector.broadcast %cst_181 : f32 to vector<8x32xf32>
    %615 = arith.subf %614, %608 : vector<8x32xf32>
    %616 = arith.mulf %615, %613 : vector<8x32xf32>
    %617 = arith.mulf %608, %555 : vector<8x32xf32>
    %618 = arith.addf %616, %617 : vector<8x32xf32>
    %c0_182 = arith.constant 0 : index
    %c0_183 = arith.constant 0 : index
    %619 = vector.load %arg6[%c0_182, %c0_183] : memref<32x384xf32, #tpu.memory_space<vmem>>, vector<32x384xf32>
    %cst_184 = arith.constant dense<0.000000e+00> : vector<8x384xf32>
    %620 = tpu.matmul %586, %619, %cst_184 {dimension_numbers = #tpu.dot_dimension_numbers<[1], [0], [0], [1], [0, 0, 1, 1], [], []>} : vector<8x32xf32>, vector<32x384xf32>, vector<8x384xf32> -> vector<8x384xf32>
    %621 = arith.addf %620, %16 : vector<8x384xf32>
    %c0_185 = arith.constant 0 : index
    %c0_186 = arith.constant 0 : index
    %622 = vector.load %arg7[%c0_185, %c0_186] : memref<32x384xf32, #tpu.memory_space<vmem>>, vector<32x384xf32>
    %cst_187 = arith.constant dense<0.000000e+00> : vector<8x384xf32>
    %623 = tpu.matmul %618, %622, %cst_187 {dimension_numbers = #tpu.dot_dimension_numbers<[1], [0], [0], [1], [0, 0, 1, 1], [], []>} : vector<8x32xf32>, vector<32x384xf32>, vector<8x384xf32> -> vector<8x384xf32>
    %624 = arith.addf %623, %13 : vector<8x384xf32>
    %625 = vector.extract_strided_slice %621 {offsets = [0, 0], sizes = [8, 32], strides = [1, 1]} : vector<8x384xf32> to vector<8x32xf32>
    %626 = vector.extract_strided_slice %624 {offsets = [0, 0], sizes = [8, 32], strides = [1, 1]} : vector<8x384xf32> to vector<8x32xf32>
    %627 = arith.addf %625, %626 : vector<8x32xf32>
    %628 = arith.negf %627 : vector<8x32xf32>
    %629 = math.exp %628 : vector<8x32xf32>
    %cst_188 = arith.constant 1.000000e+00 : f32
    %630 = vector.broadcast %cst_188 : f32 to vector<8x32xf32>
    %631 = arith.addf %630, %629 : vector<8x32xf32>
    %632 = arith.divf %630, %631 : vector<8x32xf32>
    %633 = vector.extract_strided_slice %621 {offsets = [0, 128], sizes = [8, 32], strides = [1, 1]} : vector<8x384xf32> to vector<8x32xf32>
    %634 = vector.extract_strided_slice %624 {offsets = [0, 128], sizes = [8, 32], strides = [1, 1]} : vector<8x384xf32> to vector<8x32xf32>
    %635 = arith.addf %633, %634 : vector<8x32xf32>
    %636 = arith.negf %635 : vector<8x32xf32>
    %637 = math.exp %636 : vector<8x32xf32>
    %cst_189 = arith.constant 1.000000e+00 : f32
    %638 = vector.broadcast %cst_189 : f32 to vector<8x32xf32>
    %639 = arith.addf %638, %637 : vector<8x32xf32>
    %640 = arith.divf %638, %639 : vector<8x32xf32>
    %641 = vector.extract_strided_slice %621 {offsets = [0, 256], sizes = [8, 32], strides = [1, 1]} : vector<8x384xf32> to vector<8x32xf32>
    %642 = vector.extract_strided_slice %624 {offsets = [0, 256], sizes = [8, 32], strides = [1, 1]} : vector<8x384xf32> to vector<8x32xf32>
    %643 = arith.mulf %632, %642 : vector<8x32xf32>
    %644 = arith.addf %641, %643 : vector<8x32xf32>
    %645 = math.tanh %644 : vector<8x32xf32>
    %cst_190 = arith.constant 1.000000e+00 : f32
    %646 = vector.broadcast %cst_190 : f32 to vector<8x32xf32>
    %647 = arith.subf %646, %640 : vector<8x32xf32>
    %648 = arith.mulf %647, %645 : vector<8x32xf32>
    %649 = arith.mulf %640, %618 : vector<8x32xf32>
    %650 = arith.addf %648, %649 : vector<8x32xf32>
    %c0_191 = arith.constant 0 : index
    %c0_192 = arith.constant 0 : index
    %651 = vector.load %arg10[%c0_191, %c0_192] : memref<1x32xf32, #tpu.memory_space<vmem>>, vector<1x32xf32>
    %652 = vector.broadcast %651 : vector<1x32xf32> to vector<8x32xf32>
    %653 = arith.mulf %650, %652 : vector<8x32xf32>
    %cst_193 = arith.constant dense<0.000000e+00> : vector<8xf32>
    %654 = vector.multi_reduction <add>, %653, %cst_193 [1] : vector<8x32xf32> to vector<8xf32>
    %655 = vector.shape_cast %654 : vector<8xf32> to vector<8x1xf32>
    %c0_194 = arith.constant 0 : index
    %c0_195 = arith.constant 0 : index
    %656 = vector.load %arg11[%c0_194, %c0_195] : memref<1x1xf32, #tpu.memory_space<vmem>>, vector<1x1xf32>
    %657 = vector.broadcast %656 : vector<1x1xf32> to vector<8x1xf32>
    %658 = arith.addf %655, %657 : vector<8x1xf32>
    %cst_196 = arith.constant 0.000000e+00 : f32
    %659 = vector.broadcast %cst_196 : f32 to vector<8x1xf32>
    %660 = arith.maximumf %658, %659 : vector<8x1xf32>
    %c0_197 = arith.constant 0 : index
    %c0_198 = arith.constant 0 : index
    %661 = vector.load %arg12[%c0_197, %c0_198] : memref<8x1xf32, #tpu.memory_space<vmem>>, vector<8x1xf32>
    tpu.vector_store %arg12[%c0_197, %c0_198], %660 {strides = array<i32>} : memref<8x1xf32, #tpu.memory_space<vmem>>, vector<8x1xf32>,
    return
  }
}

</mosaic_0001>

<llo_original>
// kernel: gru_model_forward.1
$region0: #{gru_model_forward.1}
  #allocation0 [shape = 'u32[]', space=smem, size = 0x4, offset = 0x4, fixed_abs, tag = 'smem constant byte address 0x4 - core index']
  #allocation1 [shape = 'u32[72,128]{1,0:T(1,128)}', space=vmem, size = 0x9000, scoped, tag = 'internal scratch']
  #allocation2 [shape = 'f32[10,8,384]{2,1,0:T(8,128)}', space=vmem, size = 0x1e000, scoped, tag = 'scratch operand']
  #allocation3 [shape = 'f32[1,1]{1,0:T(1,128)S(1)}', space=vmem, size = 0x200, scoped, tag = 'scoped memory for gru_model_forward.1']
  %s0 = inlined_call_operand.vmem [shape: f32[80,8], index: 0, kind: input, shape index: {}]
  %s1 = inlined_call_operand.vmem [shape: f32[2,8,32], index: 1, kind: input, shape index: {}]
  %s2 = inlined_call_operand.vmem [shape: f32[8,384], index: 2, kind: input, shape index: {}]
  %s3 = inlined_call_operand.vmem [shape: f32[32,384], index: 3, kind: input, shape index: {}]
  %s4 = inlined_call_operand.vmem [shape: f32[1,384], index: 4, kind: input, shape index: {}]
  %s5 = inlined_call_operand.vmem [shape: f32[1,384], index: 5, kind: input, shape index: {}]
  %s6 = inlined_call_operand.vmem [shape: f32[32,384], index: 6, kind: input, shape index: {}]
  %s7 = inlined_call_operand.vmem [shape: f32[32,384], index: 7, kind: input, shape index: {}]
  %s8 = inlined_call_operand.vmem [shape: f32[1,384], index: 8, kind: input, shape index: {}]
  %s9 = inlined_call_operand.vmem [shape: f32[1,384], index: 9, kind: input, shape index: {}]
  %s10 = inlined_call_operand.vmem [shape: f32[1,32], index: 10, kind: input, shape index: {}]
  %s11 = inlined_call_operand.<no memory space> [shape: f32[1,1], index: 11, kind: input, shape index: {}]
  %s12 = inlined_call_operand.vmem [shape: f32[8,1], index: 12, kind: output, shape index: {}]
  %s13 = sld [smem:[#allocation0]]
  $region58: #{gru_model_forward.1} parent=0
    _
  %s15 = ssub.s32 1, %s13
  %s16 = scalar_select 0, %s15, %s13
  %v17 = vstv %s11
  %18 = vst [vmem:[#allocation3] sm:$0x1] %v17
  // Predicated region
  $region2: #{gru_model_forward.1} parent=0 // pred_check
    _
  $region3: #{gru_model_forward.1} parent=0 // pred_check_branch
    %20 = sbr.rel (0) target = $region5
  $region4: #{gru_model_forward.1} parent=0 // pred_region
    _
  $region5: #{gru_model_forward.1} parent=0 // pred_fallthru
    _
  // Predicated region
  $region6: #{gru_model_forward.1} parent=0 // pred_check
    _
  $region7: #{gru_model_forward.1} parent=0 // pred_check_branch
    %22 = sbr.rel (0) target = $region9
  $region8: #{gru_model_forward.1} parent=0 // pred_region
    _
  $region9: #{gru_model_forward.1} parent=0 // pred_fallthru
    _
  // Predicated region
  $region10: #{gru_model_forward.1} parent=0 // pred_check
    _
  $region11: #{gru_model_forward.1} parent=0 // pred_check_branch
    %24 = sbr.rel (0) target = $region13
  $region12: #{gru_model_forward.1} parent=0 // pred_region
    _
  $region13: #{gru_model_forward.1} parent=0 // pred_fallthru
    _
  // Predicated region
  $region14: #{gru_model_forward.1} parent=0 // pred_check
    _
  $region15: #{gru_model_forward.1} parent=0 // pred_check_branch
    %26 = sbr.rel (0) target = $region17
  $region16: #{gru_model_forward.1} parent=0 // pred_region
    _
  $region17: #{gru_model_forward.1} parent=0 // pred_fallthru
    _
  // Predicated region
  $region18: #{gru_model_forward.1} parent=0 // pred_check
    _
  $region19: #{gru_model_forward.1} parent=0 // pred_check_branch
    %28 = sbr.rel (0) target = $region21
  $region20: #{gru_model_forward.1} parent=0 // pred_region
    _
  $region21: #{gru_model_forward.1} parent=0 // pred_fallthru
    _
  // Predicated region
  $region22: #{gru_model_forward.1} parent=0 // pred_check
    _
  $region23: #{gru_model_forward.1} parent=0 // pred_check_branch
    %30 = sbr.rel (0) target = $region25
  $region24: #{gru_model_forward.1} parent=0 // pred_region
    _
  $region25: #{gru_model_forward.1} parent=0 // pred_fallthru
    _
  // Predicated region
  $region26: #{gru_model_forward.1} parent=0 // pred_check
    _
  $region27: #{gru_model_forward.1} parent=0 // pred_check_branch
    %32 = sbr.rel (0) target = $region29
  $region28: #{gru_model_forward.1} parent=0 // pred_region
    _
  $region29: #{gru_model_forward.1} parent=0 // pred_fallthru
    _
  // Predicated region
  $region30: #{gru_model_forward.1} parent=0 // pred_check
    _
  $region31: #{gru_model_forward.1} parent=0 // pred_check_branch
    %34 = sbr.rel (0) target = $region33
  $region32: #{gru_model_forward.1} parent=0 // pred_region
    _
  $region33: #{gru_model_forward.1} parent=0 // pred_fallthru
    _
  // Predicated region
  $region34: #{gru_model_forward.1} parent=0 // pred_check
    _
  $region35: #{gru_model_forward.1} parent=0 // pred_check_branch
    %36 = sbr.rel (0) target = $region37
  $region36: #{gru_model_forward.1} parent=0 // pred_region
    _
  $region37: #{gru_model_forward.1} parent=0 // pred_fallthru
    _
  // Predicated region
  $region38: #{gru_model_forward.1} parent=0 // pred_check
    _
  $region39: #{gru_model_forward.1} parent=0 // pred_check_branch
    %38 = sbr.rel (0) target = $region41
  $region40: #{gru_model_forward.1} parent=0 // pred_region
    _
  $region41: #{gru_model_forward.1} parent=0 // pred_fallthru
    _
  // Predicated region
  $region42: #{gru_model_forward.1} parent=0 // pred_check
    _
  $region43: #{gru_model_forward.1} parent=0 // pred_check_branch
    %40 = sbr.rel (0) target = $region45
  $region44: #{gru_model_forward.1} parent=0 // pred_region
    _
  $region45: #{gru_model_forward.1} parent=0 // pred_fallthru
    _
  // Predicated region
  $region46: #{gru_model_forward.1} parent=0 // pred_check
    _
  $region47: #{gru_model_forward.1} parent=0 // pred_check_branch
    %42 = sbr.rel (0) target = $region49
  $region48: #{gru_model_forward.1} parent=0 // pred_region
    _
  $region49: #{gru_model_forward.1} parent=0 // pred_fallthru
    _
  %v43 = vld [vmem:[%s0] sm:$0xff]
  %v44 = vld [vmem:[%s0 + $0x8] sm:$0xff]
  %v45 = vld [vmem:[%s0 + $0x10] sm:$0xff]
  %v46 = vld [vmem:[%s0 + $0x18] sm:$0xff]
  %v47 = vld [vmem:[%s0 + $0x20] sm:$0xff]
  %v48 = vld [vmem:[%s0 + $0x28] sm:$0xff]
  %v49 = vld [vmem:[%s0 + $0x30] sm:$0xff]
  %v50 = vld [vmem:[%s0 + $0x38] sm:$0xff]
  %v51 = vld [vmem:[%s0 + $0x40] sm:$0xff]
  %v52 = vld [vmem:[%s0 + $0x48] sm:$0xff]
  %v53 = vld [vmem:[%s2] sm:$0xff]
  %v54 = vld [vmem:[%s2 + $0x8] sm:$0xff]
  %v55 = vld [vmem:[%s2 + $0x10] sm:$0xff]
  %v56 = vld [vmem:[%s4] sm:$0x7]
  %v58 = vperm.slane %v56, 0
  %v59 = vperm.slane %v56, 1
  %v60 = vperm.slane %v56, 2
  %vm64 = vcmask 64512
  %v66 = vsel %vm64, %v43, 0
  %v69 = vsel %vm64, %v44, 0
  %v72 = vsel %vm64, %v45, 0
  %v75 = vsel %vm64, %v46, 0
  %v78 = vsel %vm64, %v47, 0
  %v81 = vsel %vm64, %v48, 0
  %v84 = vsel %vm64, %v49, 0
  %v87 = vsel %vm64, %v50, 0
  %v90 = vsel %vm64, %v51, 0
  %v93 = vsel %vm64, %v52, 0
  %95 = vmatpush.msra.mxu0 0.0
  %96 = vmatpush.msra.mxu0 0.0
  %97 = vmatpush.msra.mxu0 0.0
  %98 = vmatpush.msra.mxu0 0.0
  %99 = vmatpush.msra.mxu0 0.0
  %100 = vmatpush.msra.mxu0 0.0
  %101 = vmatpush.msra.mxu0 0.0
  %102 = vmatpush.msra.mxu0 0.0
  %103 = vmatpush.msra.mxu0 0.0
  %104 = vmatpush.msra.mxu0 0.0
  %105 = vmatpush.msra.mxu0 0.0
  %106 = vmatpush.msra.mxu0 0.0
  %107 = vmatpush.msra.mxu0 0.0
  %108 = vmatpush.msra.mxu0 0.0
  %109 = vmatpush.msra.mxu0 0.0
  %110 = vmatpush.msra.mxu0 %v53
  %111 = vmatmul.f32.gmra.mxu0 %v66
  %v112 = vpop.f32.mrf.mxu0
  %v113 = vadd.f32 %v58, %v112
  %114 = vmatmul.f32.gmra.mxu0 %v69
  %v115 = vpop.f32.mrf.mxu0
  %v116 = vadd.f32 %v58, %v115
  %117 = vmatmul.f32.gmra.mxu0 %v72
  %v118 = vpop.f32.mrf.mxu0
  %v119 = vadd.f32 %v58, %v118
  %120 = vmatmul.f32.gmra.mxu0 %v75
  %v121 = vpop.f32.mrf.mxu0
  %v122 = vadd.f32 %v58, %v121
  %123 = vmatmul.f32.gmra.mxu0 %v78
  %v124 = vpop.f32.mrf.mxu0
  %v125 = vadd.f32 %v58, %v124
  %126 = vmatmul.f32.gmra.mxu0 %v81
  %v127 = vpop.f32.mrf.mxu0
  %v128 = vadd.f32 %v58, %v127
  %129 = vmatmul.f32.gmra.mxu0 %v84
  %v130 = vpop.f32.mrf.mxu0
  %v131 = vadd.f32 %v58, %v130
  %132 = vmatmul.f32.gmra.mxu0 %v87
  %v133 = vpop.f32.mrf.mxu0
  %v134 = vadd.f32 %v58, %v133
  %135 = vmatmul.f32.gmra.mxu0 %v90
  %v136 = vpop.f32.mrf.mxu0
  %v137 = vadd.f32 %v58, %v136
  %138 = vmatmul.f32.gmra.mxu0 %v93
  %v139 = vpop.f32.mrf.mxu0
  %v140 = vadd.f32 %v58, %v139
  %141 = vdwg.mxu0
  %142 = vmatpush.msra.mxu0 0.0
  %143 = vmatpush.msra.mxu0 0.0
  %144 = vmatpush.msra.mxu0 0.0
  %145 = vmatpush.msra.mxu0 0.0
  %146 = vmatpush.msra.mxu0 0.0
  %147 = vmatpush.msra.mxu0 0.0
  %148 = vmatpush.msra.mxu0 0.0
  %149 = vmatpush.msra.mxu0 0.0
  %150 = vmatpush.msra.mxu0 0.0
  %151 = vmatpush.msra.mxu0 0.0
  %152 = vmatpush.msra.mxu0 0.0
  %153 = vmatpush.msra.mxu0 0.0
  %154 = vmatpush.msra.mxu0 0.0
  %155 = vmatpush.msra.mxu0 0.0
  %156 = vmatpush.msra.mxu0 0.0
  %157 = vmatpush.msra.mxu0 %v54
  %158 = vmatmul.f32.gmra.mxu0 %v66
  %v159 = vpop.f32.mrf.mxu0
  %v160 = vadd.f32 %v59, %v159
  %161 = vmatmul.f32.gmra.mxu0 %v69
  %v162 = vpop.f32.mrf.mxu0
  %v163 = vadd.f32 %v59, %v162
  %164 = vmatmul.f32.gmra.mxu0 %v72
  %v165 = vpop.f32.mrf.mxu0
  %v166 = vadd.f32 %v59, %v165
  %167 = vmatmul.f32.gmra.mxu0 %v75
  %v168 = vpop.f32.mrf.mxu0
  %v169 = vadd.f32 %v59, %v168
  %170 = vmatmul.f32.gmra.mxu0 %v78
  %v171 = vpop.f32.mrf.mxu0
  %v172 = vadd.f32 %v59, %v171
  %173 = vmatmul.f32.gmra.mxu0 %v81
  %v174 = vpop.f32.mrf.mxu0
  %v175 = vadd.f32 %v59, %v174
  %176 = vmatmul.f32.gmra.mxu0 %v84
  %v177 = vpop.f32.mrf.mxu0
  %v178 = vadd.f32 %v59, %v177
  %179 = vmatmul.f32.gmra.mxu0 %v87
  %v180 = vpop.f32.mrf.mxu0
  %v181 = vadd.f32 %v59, %v180
  %182 = vmatmul.f32.gmra.mxu0 %v90
  %v183 = vpop.f32.mrf.mxu0
  %v184 = vadd.f32 %v59, %v183
  %185 = vmatmul.f32.gmra.mxu0 %v93
  %v186 = vpop.f32.mrf.mxu0
  %v187 = vadd.f32 %v59, %v186
  %188 = vdwg.mxu0
  %189 = vmatpush.msra.mxu0 0.0
  %190 = vmatpush.msra.mxu0 0.0
  %191 = vmatpush.msra.mxu0 0.0
  %192 = vmatpush.msra.mxu0 0.0
  %193 = vmatpush.msra.mxu0 0.0
  %194 = vmatpush.msra.mxu0 0.0
  %195 = vmatpush.msra.mxu0 0.0
  %196 = vmatpush.msra.mxu0 0.0
  %197 = vmatpush.msra.mxu0 0.0
  %198 = vmatpush.msra.mxu0 0.0
  %199 = vmatpush.msra.mxu0 0.0
  %200 = vmatpush.msra.mxu0 0.0
  %201 = vmatpush.msra.mxu0 0.0
  %202 = vmatpush.msra.mxu0 0.0
  %203 = vmatpush.msra.mxu0 0.0
  %204 = vmatpush.msra.mxu0 %v55
  %205 = vmatmul.f32.gmra.mxu0 %v66
  %v206 = vpop.f32.mrf.mxu0
  %v207 = vadd.f32 %v60, %v206
  %208 = vmatmul.f32.gmra.mxu0 %v69
  %v209 = vpop.f32.mrf.mxu0
  %v210 = vadd.f32 %v60, %v209
  %211 = vmatmul.f32.gmra.mxu0 %v72
  %v212 = vpop.f32.mrf.mxu0
  %v213 = vadd.f32 %v60, %v212
  %214 = vmatmul.f32.gmra.mxu0 %v75
  %v215 = vpop.f32.mrf.mxu0
  %v216 = vadd.f32 %v60, %v215
  %217 = vmatmul.f32.gmra.mxu0 %v78
  %v218 = vpop.f32.mrf.mxu0
  %v219 = vadd.f32 %v60, %v218
  %220 = vmatmul.f32.gmra.mxu0 %v81
  %v221 = vpop.f32.mrf.mxu0
  %v222 = vadd.f32 %v60, %v221
  %223 = vmatmul.f32.gmra.mxu0 %v84
  %v224 = vpop.f32.mrf.mxu0
  %v225 = vadd.f32 %v60, %v224
  %226 = vmatmul.f32.gmra.mxu0 %v87
  %v227 = vpop.f32.mrf.mxu0
  %v228 = vadd.f32 %v60, %v227
  %229 = vmatmul.f32.gmra.mxu0 %v90
  %v230 = vpop.f32.mrf.mxu0
  %v231 = vadd.f32 %v60, %v230
  %232 = vmatmul.f32.gmra.mxu0 %v93
  %v233 = vpop.f32.mrf.mxu0
  %v234 = vadd.f32 %v60, %v233
  %235 = vdwg.mxu0
  %236 = vst [vmem:[#allocation2] sm:$0xff] %v113
  %237 = vst [vmem:[#allocation2 + $0x8] sm:$0xff] %v160
  %238 = vst [vmem:[#allocation2 + $0x10] sm:$0xff] %v207
  %239 = vst [vmem:[#allocation2 + $0x18] sm:$0xff] %v116
  %240 = vst [vmem:[#allocation2 + $0x20] sm:$0xff] %v163
  %241 = vst [vmem:[#allocation2 + $0x28] sm:$0xff] %v210
  %242 = vst [vmem:[#allocation2 + $0x30] sm:$0xff] %v119
  %243 = vst [vmem:[#allocation2 + $0x38] sm:$0xff] %v166
  %244 = vst [vmem:[#allocation2 + $0x40] sm:$0xff] %v213
  %245 = vst [vmem:[#allocation2 + $0x48] sm:$0xff] %v122
  %246 = vst [vmem:[#allocation2 + $0x50] sm:$0xff] %v169
  %247 = vst [vmem:[#allocation2 + $0x58] sm:$0xff] %v216
  %248 = vst [vmem:[#allocation2 + $0x60] sm:$0xff] %v125
  %249 = vst [vmem:[#allocation2 + $0x68] sm:$0xff] %v172
  %250 = vst [vmem:[#allocation2 + $0x70] sm:$0xff] %v219
  %251 = vst [vmem:[#allocation2 + $0x78] sm:$0xff] %v128
  %252 = vst [vmem:[#allocation2 + $0x80] sm:$0xff] %v175
  %253 = vst [vmem:[#allocation2 + $0x88] sm:$0xff] %v222
  %254 = vst [vmem:[#allocation2 + $0x90] sm:$0xff] %v131
  %255 = vst [vmem:[#allocation2 + $0x98] sm:$0xff] %v178
  %256 = vst [vmem:[#allocation2 + $0xa0] sm:$0xff] %v225
  %257 = vst [vmem:[#allocation2 + $0xa8] sm:$0xff] %v134
  %258 = vst [vmem:[#allocation2 + $0xb0] sm:$0xff] %v181
  %259 = vst [vmem:[#allocation2 + $0xb8] sm:$0xff] %v228
  %260 = vst [vmem:[#allocation2 + $0xc0] sm:$0xff] %v137
  %261 = vst [vmem:[#allocation2 + $0xc8] sm:$0xff] %v184
  %262 = vst [vmem:[#allocation2 + $0xd0] sm:$0xff] %v231
  %263 = vst [vmem:[#allocation2 + $0xd8] sm:$0xff] %v140
  %264 = vst [vmem:[#allocation2 + $0xe0] sm:$0xff] %v187
  %265 = vst [vmem:[#allocation2 + $0xe8] sm:$0xff] %v234
  %v266 = vld [vmem:[%s5] sm:$0x7]
  %v268 = vperm.slane %v266, 0
  %v269 = vperm.slane %v266, 1
  %v270 = vperm.slane %v266, 2
  %v274 = vld [vmem:[%s9] sm:$0x7]
  %v276 = vperm.slane %v274, 0
  %v277 = vperm.slane %v274, 1
  %v278 = vperm.slane %v274, 2
  %v282 = vld [vmem:[%s8] sm:$0x7]
  %v284 = vperm.slane %v282, 0
  %v285 = vperm.slane %v282, 1
  %v286 = vperm.slane %v282, 2
  %v290 = vld [vmem:[%s1] sm:$0xff]
  %s291 = scalar_lea.vmem %s1, 8
  %v292 = vld [vmem:[%s291] sm:$0xff]
  %v293 = vld [vmem:[#allocation2] sm:$0xff]
  %v294 = vld [vmem:[#allocation2 + $0x8] sm:$0xff]
  %v295 = vld [vmem:[#allocation2 + $0x10] sm:$0xff]
  %v296 = vld [vmem:[%s3] sm:$0xff]
  %v297 = vld [vmem:[%s3 + $0x8] sm:$0xff]
  %v298 = vld [vmem:[%s3 + $0x10] sm:$0xff]
  %v299 = vld [vmem:[%s3 + $0x18] sm:$0xff]
  %v300 = vld [vmem:[%s3 + $0x20] sm:$0xff]
  %v301 = vld [vmem:[%s3 + $0x28] sm:$0xff]
  %v302 = vld [vmem:[%s3 + $0x30] sm:$0xff]
  %v303 = vld [vmem:[%s3 + $0x38] sm:$0xff]
  %v304 = vld [vmem:[%s3 + $0x40] sm:$0xff]
  %v305 = vld [vmem:[%s3 + $0x48] sm:$0xff]
  %v306 = vld [vmem:[%s3 + $0x50] sm:$0xff]
  %v307 = vld [vmem:[%s3 + $0x58] sm:$0xff]
  %vm308 = vcmask 261120
  %v310 = vsel %vm308, %v290, 0
  %312 = vmatpush.msra.mxu0 0.0
  %313 = vmatpush.msra.mxu0 0.0
  %314 = vmatpush.msra.mxu0 0.0
  %315 = vmatpush.msra.mxu0 0.0
  %316 = vmatpush.msra.mxu0 0.0
  %317 = vmatpush.msra.mxu0 0.0
  %318 = vmatpush.msra.mxu0 0.0
  %319 = vmatpush.msra.mxu0 0.0
  %320 = vmatpush.msra.mxu0 0.0
  %321 = vmatpush.msra.mxu0 0.0
  %322 = vmatpush.msra.mxu0 0.0
  %323 = vmatpush.msra.mxu0 0.0
  %324 = vmatpush.msra.mxu0 %v305
  %325 = vmatpush.msra.mxu0 %v302
  %326 = vmatpush.msra.mxu0 %v299
  %327 = vmatpush.msra.mxu0 %v296
  %328 = vmatmul.f32.gmra.mxu0 %v310
  %v329 = vpop.f32.mrf.mxu0
  %v330 = vadd.f32 %v268, %v329
  %331 = vdwg.mxu0
  %332 = vmatpush.msra.mxu0 0.0
  %333 = vmatpush.msra.mxu0 0.0
  %334 = vmatpush.msra.mxu0 0.0
  %335 = vmatpush.msra.mxu0 0.0
  %336 = vmatpush.msra.mxu0 0.0
  %337 = vmatpush.msra.mxu0 0.0
  %338 = vmatpush.msra.mxu0 0.0
  %339 = vmatpush.msra.mxu0 0.0
  %340 = vmatpush.msra.mxu0 0.0
  %341 = vmatpush.msra.mxu0 0.0
  %342 = vmatpush.msra.mxu0 0.0
  %343 = vmatpush.msra.mxu0 0.0
  %344 = vmatpush.msra.mxu0 %v306
  %345 = vmatpush.msra.mxu0 %v303
  %346 = vmatpush.msra.mxu0 %v300
  %347 = vmatpush.msra.mxu0 %v297
  %348 = vmatmul.f32.gmra.mxu0 %v310
  %v349 = vpop.f32.mrf.mxu0
  %v350 = vadd.f32 %v269, %v349
  %351 = vdwg.mxu0
  %352 = vmatpush.msra.mxu0 0.0
  %353 = vmatpush.msra.mxu0 0.0
  %354 = vmatpush.msra.mxu0 0.0
  %355 = vmatpush.msra.mxu0 0.0
  %356 = vmatpush.msra.mxu0 0.0
  %357 = vmatpush.msra.mxu0 0.0
  %358 = vmatpush.msra.mxu0 0.0
  %359 = vmatpush.msra.mxu0 0.0
  %360 = vmatpush.msra.mxu0 0.0
  %361 = vmatpush.msra.mxu0 0.0
  %362 = vmatpush.msra.mxu0 0.0
  %363 = vmatpush.msra.mxu0 0.0
  %364 = vmatpush.msra.mxu0 %v307
  %365 = vmatpush.msra.mxu0 %v304
  %366 = vmatpush.msra.mxu0 %v301
  %367 = vmatpush.msra.mxu0 %v298
  %368 = vmatmul.f32.gmra.mxu0 %v310
  %v369 = vpop.f32.mrf.mxu0
  %v370 = vadd.f32 %v270, %v369
  %371 = vdwg.mxu0
  %v372 = vadd.f32 %v293, %v330
  %v373 = vxor.u32 %v372, 2147483648
  %v374 = vmul.f32 %v373, 1.442695
  %v375 = vpow.pop %v374
  %v376 = vadd.f32 %v375, 1.0
  %v377 = vrcp.pop %v376
  %v378 = vmul.f32 %v376, %v377
  %v379 = vsub.f32 1.0, %v378
  %v380 = vmul.f32 %v377, %v379
  %v381 = vadd.f32 %v377, %v380
  %vm382 = vweird.f32 %v376
  %vm383 = vweird.f32 %v377
  %vm384 = vmor %vm382, %vm383
  %v385 = vsel %vm384, %v377, %v381
  %v386 = vand.u32 2147483647, %v376
  %vm387 = vcmp.eq.f32.partialorder %v386, 8.507059e+37
  %v388 = vand.u32 %v376, 2147483648
  %v389 = vor.u32 1.1754944e-38, %v388
  %v390 = vsel %vm387, %v389, %v385
  %v391 = vmul.f32 1.0, %v390
  %v392 = vadd.f32 %v294, %v350
  %v393 = vxor.u32 %v392, 2147483648
  %v394 = vmul.f32 %v393, 1.442695
  %v395 = vpow.pop %v394
  %v396 = vadd.f32 %v395, 1.0
  %v397 = vrcp.pop %v396
  %v398 = vmul.f32 %v396, %v397
  %v399 = vsub.f32 1.0, %v398
  %v400 = vmul.f32 %v397, %v399
  %v401 = vadd.f32 %v397, %v400
  %vm402 = vweird.f32 %v396
  %vm403 = vweird.f32 %v397
  %vm404 = vmor %vm402, %vm403
  %v405 = vsel %vm404, %v397, %v401
  %v406 = vand.u32 2147483647, %v396
  %vm407 = vcmp.eq.f32.partialorder %v406, 8.507059e+37
  %v408 = vand.u32 %v396, 2147483648
  %v409 = vor.u32 1.1754944e-38, %v408
  %v410 = vsel %vm407, %v409, %v405
  %v411 = vmul.f32 1.0, %v410
  %v412 = vmul.f32 %v391, %v370
  %v413 = vadd.f32 %v295, %v412
  %v414 = vtanh.pop %v413
  %v415 = vsub.f32 1.0, %v411
  %v416 = vmul.f32 %v415, %v414
  %v417 = vmul.f32 %v411, %v290
  %v418 = vadd.f32 %v416, %v417
  %s419 = scalar_lea.vmem [#allocation2], 24
  %v420 = vld [vmem:[%s419] sm:$0xff]
  %v421 = vld [vmem:[%s419 + $0x8] sm:$0xff]
  %v422 = vld [vmem:[%s419 + $0x10] sm:$0xff]
  %v424 = vsel %vm308, %v418, 0
  %426 = vmatpush.msra.mxu0 0.0
  %427 = vmatpush.msra.mxu0 0.0
  %428 = vmatpush.msra.mxu0 0.0
  %429 = vmatpush.msra.mxu0 0.0
  %430 = vmatpush.msra.mxu0 0.0
  %431 = vmatpush.msra.mxu0 0.0
  %432 = vmatpush.msra.mxu0 0.0
  %433 = vmatpush.msra.mxu0 0.0
  %434 = vmatpush.msra.mxu0 0.0
  %435 = vmatpush.msra.mxu0 0.0
  %436 = vmatpush.msra.mxu0 0.0
  %437 = vmatpush.msra.mxu0 0.0
  %438 = vmatpush.msra.mxu0 %v305
  %439 = vmatpush.msra.mxu0 %v302
  %440 = vmatpush.msra.mxu0 %v299
  %441 = vmatpush.msra.mxu0 %v296
  %442 = vmatmul.f32.gmra.mxu0 %v424
  %v443 = vpop.f32.mrf.mxu0
  %v444 = vadd.f32 %v268, %v443
  %445 = vdwg.mxu0
  %446 = vmatpush.msra.mxu0 0.0
  %447 = vmatpush.msra.mxu0 0.0
  %448 = vmatpush.msra.mxu0 0.0
  %449 = vmatpush.msra.mxu0 0.0
  %450 = vmatpush.msra.mxu0 0.0
  %451 = vmatpush.msra.mxu0 0.0
  %452 = vmatpush.msra.mxu0 0.0
  %453 = vmatpush.msra.mxu0 0.0
  %454 = vmatpush.msra.mxu0 0.0
  %455 = vmatpush.msra.mxu0 0.0
  %456 = vmatpush.msra.mxu0 0.0
  %457 = vmatpush.msra.mxu0 0.0
  %458 = vmatpush.msra.mxu0 %v306
  %459 = vmatpush.msra.mxu0 %v303
  %460 = vmatpush.msra.mxu0 %v300
  %461 = vmatpush.msra.mxu0 %v297
  %462 = vmatmul.f32.gmra.mxu0 %v424
  %v463 = vpop.f32.mrf.mxu0
  %v464 = vadd.f32 %v269, %v463
  %465 = vdwg.mxu0
  %466 = vmatpush.msra.mxu0 0.0
  %467 = vmatpush.msra.mxu0 0.0
  %468 = vmatpush.msra.mxu0 0.0
  %469 = vmatpush.msra.mxu0 0.0
  %470 = vmatpush.msra.mxu0 0.0
  %471 = vmatpush.msra.mxu0 0.0
  %472 = vmatpush.msra.mxu0 0.0
  %473 = vmatpush.msra.mxu0 0.0
  %474 = vmatpush.msra.mxu0 0.0
  %475 = vmatpush.msra.mxu0 0.0
  %476 = vmatpush.msra.mxu0 0.0
  %477 = vmatpush.msra.mxu0 0.0
  %478 = vmatpush.msra.mxu0 %v307
  %479 = vmatpush.msra.mxu0 %v304
  %480 = vmatpush.msra.mxu0 %v301
  %481 = vmatpush.msra.mxu0 %v298
  %482 = vmatmul.f32.gmra.mxu0 %v424
  %v483 = vpop.f32.mrf.mxu0
  %v484 = vadd.f32 %v270, %v483
  %485 = vdwg.mxu0
  %v486 = vadd.f32 %v420, %v444
  %v487 = vxor.u32 %v486, 2147483648
  %v488 = vmul.f32 %v487, 1.442695
  %v489 = vpow.pop %v488
  %v490 = vadd.f32 %v489, 1.0
  %v491 = vrcp.pop %v490
  %v492 = vmul.f32 %v490, %v491
  %v493 = vsub.f32 1.0, %v492
  %v494 = vmul.f32 %v491, %v493
  %v495 = vadd.f32 %v491, %v494
  %vm496 = vweird.f32 %v490
  %vm497 = vweird.f32 %v491
  %vm498 = vmor %vm496, %vm497
  %v499 = vsel %vm498, %v491, %v495
  %v500 = vand.u32 2147483647, %v490
  %vm501 = vcmp.eq.f32.partialorder %v500, 8.507059e+37
  %v502 = vand.u32 %v490, 2147483648
  %v503 = vor.u32 1.1754944e-38, %v502
  %v504 = vsel %vm501, %v503, %v499
  %v505 = vmul.f32 1.0, %v504
  %v506 = vadd.f32 %v421, %v464
  %v507 = vxor.u32 %v506, 2147483648
  %v508 = vmul.f32 %v507, 1.442695
  %v509 = vpow.pop %v508
  %v510 = vadd.f32 %v509, 1.0
  %v511 = vrcp.pop %v510
  %v512 = vmul.f32 %v510, %v511
  %v513 = vsub.f32 1.0, %v512
  %v514 = vmul.f32 %v511, %v513
  %v515 = vadd.f32 %v511, %v514
  %vm516 = vweird.f32 %v510
  %vm517 = vweird.f32 %v511
  %vm518 = vmor %vm516, %vm517
  %v519 = vsel %vm518, %v511, %v515
  %v520 = vand.u32 2147483647, %v510
  %vm521 = vcmp.eq.f32.partialorder %v520, 8.507059e+37
  %v522 = vand.u32 %v510, 2147483648
  %v523 = vor.u32 1.1754944e-38, %v522
  %v524 = vsel %vm521, %v523, %v519
  %v525 = vmul.f32 1.0, %v524
  %v526 = vmul.f32 %v505, %v484
  %v527 = vadd.f32 %v422, %v526
  %v528 = vtanh.pop %v527
  %v529 = vsub.f32 1.0, %v525
  %v530 = vmul.f32 %v529, %v528
  %v531 = vmul.f32 %v525, %v418
  %v532 = vadd.f32 %v530, %v531
  %v533 = vld [vmem:[%s6] sm:$0xff]
  %v534 = vld [vmem:[%s6 + $0x8] sm:$0xff]
  %v535 = vld [vmem:[%s6 + $0x10] sm:$0xff]
  %v536 = vld [vmem:[%s6 + $0x18] sm:$0xff]
  %v537 = vld [vmem:[%s6 + $0x20] sm:$0xff]
  %v538 = vld [vmem:[%s6 + $0x28] sm:$0xff]
  %v539 = vld [vmem:[%s6 + $0x30] sm:$0xff]
  %v540 = vld [vmem:[%s6 + $0x38] sm:$0xff]
  %v541 = vld [vmem:[%s6 + $0x40] sm:$0xff]
  %v542 = vld [vmem:[%s6 + $0x48] sm:$0xff]
  %v543 = vld [vmem:[%s6 + $0x50] sm:$0xff]
  %v544 = vld [vmem:[%s6 + $0x58] sm:$0xff]
  %545 = vmatpush.msra.mxu0 0.0
  %546 = vmatpush.msra.mxu0 0.0
  %547 = vmatpush.msra.mxu0 0.0
  %548 = vmatpush.msra.mxu0 0.0
  %549 = vmatpush.msra.mxu0 0.0
  %550 = vmatpush.msra.mxu0 0.0
  %551 = vmatpush.msra.mxu0 0.0
  %552 = vmatpush.msra.mxu0 0.0
  %553 = vmatpush.msra.mxu0 0.0
  %554 = vmatpush.msra.mxu0 0.0
  %555 = vmatpush.msra.mxu0 0.0
  %556 = vmatpush.msra.mxu0 0.0
  %557 = vmatpush.msra.mxu0 %v542
  %558 = vmatpush.msra.mxu0 %v539
  %559 = vmatpush.msra.mxu0 %v536
  %560 = vmatpush.msra.mxu0 %v533
  %561 = vmatmul.f32.gmra.mxu0 %v424
  %v562 = vpop.f32.mrf.mxu0
  %v563 = vadd.f32 %v284, %v562
  %564 = vdwg.mxu0
  %565 = vmatpush.msra.mxu0 0.0
  %566 = vmatpush.msra.mxu0 0.0
  %567 = vmatpush.msra.mxu0 0.0
  %568 = vmatpush.msra.mxu0 0.0
  %569 = vmatpush.msra.mxu0 0.0
  %570 = vmatpush.msra.mxu0 0.0
  %571 = vmatpush.msra.mxu0 0.0
  %572 = vmatpush.msra.mxu0 0.0
  %573 = vmatpush.msra.mxu0 0.0
  %574 = vmatpush.msra.mxu0 0.0
  %575 = vmatpush.msra.mxu0 0.0
  %576 = vmatpush.msra.mxu0 0.0
  %577 = vmatpush.msra.mxu0 %v543
  %578 = vmatpush.msra.mxu0 %v540
  %579 = vmatpush.msra.mxu0 %v537
  %580 = vmatpush.msra.mxu0 %v534
  %581 = vmatmul.f32.gmra.mxu0 %v424
  %v582 = vpop.f32.mrf.mxu0
  %v583 = vadd.f32 %v285, %v582
  %584 = vdwg.mxu0
  %585 = vmatpush.msra.mxu0 0.0
  %586 = vmatpush.msra.mxu0 0.0
  %587 = vmatpush.msra.mxu0 0.0
  %588 = vmatpush.msra.mxu0 0.0
  %589 = vmatpush.msra.mxu0 0.0
  %590 = vmatpush.msra.mxu0 0.0
  %591 = vmatpush.msra.mxu0 0.0
  %592 = vmatpush.msra.mxu0 0.0
  %593 = vmatpush.msra.mxu0 0.0
  %594 = vmatpush.msra.mxu0 0.0
  %595 = vmatpush.msra.mxu0 0.0
  %596 = vmatpush.msra.mxu0 0.0
  %597 = vmatpush.msra.mxu0 %v544
  %598 = vmatpush.msra.mxu0 %v541
  %599 = vmatpush.msra.mxu0 %v538
  %600 = vmatpush.msra.mxu0 %v535
  %601 = vmatmul.f32.gmra.mxu0 %v424
  %v602 = vpop.f32.mrf.mxu0
  %v603 = vadd.f32 %v286, %v602
  %604 = vdwg.mxu0
  %v605 = vld [vmem:[%s7] sm:$0xff]
  %v606 = vld [vmem:[%s7 + $0x8] sm:$0xff]
  %v607 = vld [vmem:[%s7 + $0x10] sm:$0xff]
  %v608 = vld [vmem:[%s7 + $0x18] sm:$0xff]
  %v609 = vld [vmem:[%s7 + $0x20] sm:$0xff]
  %v610 = vld [vmem:[%s7 + $0x28] sm:$0xff]
  %v611 = vld [vmem:[%s7 + $0x30] sm:$0xff]
  %v612 = vld [vmem:[%s7 + $0x38] sm:$0xff]
  %v613 = vld [vmem:[%s7 + $0x40] sm:$0xff]
  %v614 = vld [vmem:[%s7 + $0x48] sm:$0xff]
  %v615 = vld [vmem:[%s7 + $0x50] sm:$0xff]
  %v616 = vld [vmem:[%s7 + $0x58] sm:$0xff]
  %v618 = vsel %vm308, %v292, 0
  %620 = vmatpush.msra.mxu0 0.0
  %621 = vmatpush.msra.mxu0 0.0
  %622 = vmatpush.msra.mxu0 0.0
  %623 = vmatpush.msra.mxu0 0.0
  %624 = vmatpush.msra.mxu0 0.0
  %625 = vmatpush.msra.mxu0 0.0
  %626 = vmatpush.msra.mxu0 0.0
  %627 = vmatpush.msra.mxu0 0.0
  %628 = vmatpush.msra.mxu0 0.0
  %629 = vmatpush.msra.mxu0 0.0
  %630 = vmatpush.msra.mxu0 0.0
  %631 = vmatpush.msra.mxu0 0.0
  %632 = vmatpush.msra.mxu0 %v614
  %633 = vmatpush.msra.mxu0 %v611
  %634 = vmatpush.msra.mxu0 %v608
  %635 = vmatpush.msra.mxu0 %v605
  %636 = vmatmul.f32.gmra.mxu0 %v618
  %v637 = vpop.f32.mrf.mxu0
  %v638 = vadd.f32 %v276, %v637
  %639 = vdwg.mxu0
  %640 = vmatpush.msra.mxu0 0.0
  %641 = vmatpush.msra.mxu0 0.0
  %642 = vmatpush.msra.mxu0 0.0
  %643 = vmatpush.msra.mxu0 0.0
  %644 = vmatpush.msra.mxu0 0.0
  %645 = vmatpush.msra.mxu0 0.0
  %646 = vmatpush.msra.mxu0 0.0
  %647 = vmatpush.msra.mxu0 0.0
  %648 = vmatpush.msra.mxu0 0.0
  %649 = vmatpush.msra.mxu0 0.0
  %650 = vmatpush.msra.mxu0 0.0
  %651 = vmatpush.msra.mxu0 0.0
  %652 = vmatpush.msra.mxu0 %v615
  %653 = vmatpush.msra.mxu0 %v612
  %654 = vmatpush.msra.mxu0 %v609
  %655 = vmatpush.msra.mxu0 %v606
  %656 = vmatmul.f32.gmra.mxu0 %v618
  %v657 = vpop.f32.mrf.mxu0
  %v658 = vadd.f32 %v277, %v657
  %659 = vdwg.mxu0
  %660 = vmatpush.msra.mxu0 0.0
  %661 = vmatpush.msra.mxu0 0.0
  %662 = vmatpush.msra.mxu0 0.0
  %663 = vmatpush.msra.mxu0 0.0
  %664 = vmatpush.msra.mxu0 0.0
  %665 = vmatpush.msra.mxu0 0.0
  %666 = vmatpush.msra.mxu0 0.0
  %667 = vmatpush.msra.mxu0 0.0
  %668 = vmatpush.msra.mxu0 0.0
  %669 = vmatpush.msra.mxu0 0.0
  %670 = vmatpush.msra.mxu0 0.0
  %671 = vmatpush.msra.mxu0 0.0
  %672 = vmatpush.msra.mxu0 %v616
  %673 = vmatpush.msra.mxu0 %v613
  %674 = vmatpush.msra.mxu0 %v610
  %675 = vmatpush.msra.mxu0 %v607
  %676 = vmatmul.f32.gmra.mxu0 %v618
  %v677 = vpop.f32.mrf.mxu0
  %v678 = vadd.f32 %v278, %v677
  %679 = vdwg.mxu0
  %v680 = vadd.f32 %v563, %v638
  %v681 = vxor.u32 %v680, 2147483648
  %v682 = vmul.f32 %v681, 1.442695
  %v683 = vpow.pop %v682
  %v684 = vadd.f32 %v683, 1.0
  %v685 = vrcp.pop %v684
  %v686 = vmul.f32 %v684, %v685
  %v687 = vsub.f32 1.0, %v686
  %v688 = vmul.f32 %v685, %v687
  %v689 = vadd.f32 %v685, %v688
  %vm690 = vweird.f32 %v684
  %vm691 = vweird.f32 %v685
  %vm692 = vmor %vm690, %vm691
  %v693 = vsel %vm692, %v685, %v689
  %v694 = vand.u32 2147483647, %v684
  %vm695 = vcmp.eq.f32.partialorder %v694, 8.507059e+37
  %v696 = vand.u32 %v684, 2147483648
  %v697 = vor.u32 1.1754944e-38, %v696
  %v698 = vsel %vm695, %v697, %v693
  %v699 = vmul.f32 1.0, %v698
  %v700 = vadd.f32 %v583, %v658
  %v701 = vxor.u32 %v700, 2147483648
  %v702 = vmul.f32 %v701, 1.442695
  %v703 = vpow.pop %v702
  %v704 = vadd.f32 %v703, 1.0
  %v705 = vrcp.pop %v704
  %v706 = vmul.f32 %v704, %v705
  %v707 = vsub.f32 1.0, %v706
  %v708 = vmul.f32 %v705, %v707
  %v709 = vadd.f32 %v705, %v708
  %vm710 = vweird.f32 %v704
  %vm711 = vweird.f32 %v705
  %vm712 = vmor %vm710, %vm711
  %v713 = vsel %vm712, %v705, %v709
  %v714 = vand.u32 2147483647, %v704
  %vm715 = vcmp.eq.f32.partialorder %v714, 8.507059e+37
  %v716 = vand.u32 %v704, 2147483648
  %v717 = vor.u32 1.1754944e-38, %v716
  %v718 = vsel %vm715, %v717, %v713
  %v719 = vmul.f32 1.0, %v718
  %v720 = vmul.f32 %v699, %v678
  %v721 = vadd.f32 %v603, %v720
  %v722 = vtanh.pop %v721
  %v723 = vsub.f32 1.0, %v719
  %v724 = vmul.f32 %v723, %v722
  %v725 = vmul.f32 %v719, %v292
  %v726 = vadd.f32 %v724, %v725
  %s727 = scalar_lea.vmem [#allocation2], 48
  %v728 = vld [vmem:[%s727] sm:$0xff]
  %v729 = vld [vmem:[%s727 + $0x8] sm:$0xff]
  %v730 = vld [vmem:[%s727 + $0x10] sm:$0xff]
  %v732 = vsel %vm308, %v532, 0
  %734 = vmatpush.msra.mxu0 0.0
  %735 = vmatpush.msra.mxu0 0.0
  %736 = vmatpush.msra.mxu0 0.0
  %737 = vmatpush.msra.mxu0 0.0
  %738 = vmatpush.msra.mxu0 0.0
  %739 = vmatpush.msra.mxu0 0.0
  %740 = vmatpush.msra.mxu0 0.0
  %741 = vmatpush.msra.mxu0 0.0
  %742 = vmatpush.msra.mxu0 0.0
  %743 = vmatpush.msra.mxu0 0.0
  %744 = vmatpush.msra.mxu0 0.0
  %745 = vmatpush.msra.mxu0 0.0
  %746 = vmatpush.msra.mxu0 %v305
  %747 = vmatpush.msra.mxu0 %v302
  %748 = vmatpush.msra.mxu0 %v299
  %749 = vmatpush.msra.mxu0 %v296
  %750 = vmatmul.f32.gmra.mxu0 %v732
  %v751 = vpop.f32.mrf.mxu0
  %v752 = vadd.f32 %v268, %v751
  %753 = vdwg.mxu0
  %754 = vmatpush.msra.mxu0 0.0
  %755 = vmatpush.msra.mxu0 0.0
  %756 = vmatpush.msra.mxu0 0.0
  %757 = vmatpush.msra.mxu0 0.0
  %758 = vmatpush.msra.mxu0 0.0
  %759 = vmatpush.msra.mxu0 0.0
  %760 = vmatpush.msra.mxu0 0.0
  %761 = vmatpush.msra.mxu0 0.0
  %762 = vmatpush.msra.mxu0 0.0
  %763 = vmatpush.msra.mxu0 0.0
  %764 = vmatpush.msra.mxu0 0.0
  %765 = vmatpush.msra.mxu0 0.0
  %766 = vmatpush.msra.mxu0 %v306
  %767 = vmatpush.msra.mxu0 %v303
  %768 = vmatpush.msra.mxu0 %v300
  %769 = vmatpush.msra.mxu0 %v297
  %770 = vmatmul.f32.gmra.mxu0 %v732
  %v771 = vpop.f32.mrf.mxu0
  %v772 = vadd.f32 %v269, %v771
  %773 = vdwg.mxu0
  %774 = vmatpush.msra.mxu0 0.0
  %775 = vmatpush.msra.mxu0 0.0
  %776 = vmatpush.msra.mxu0 0.0
  %777 = vmatpush.msra.mxu0 0.0
  %778 = vmatpush.msra.mxu0 0.0
  %779 = vmatpush.msra.mxu0 0.0
  %780 = vmatpush.msra.mxu0 0.0
  %781 = vmatpush.msra.mxu0 0.0
  %782 = vmatpush.msra.mxu0 0.0
  %783 = vmatpush.msra.mxu0 0.0
  %784 = vmatpush.msra.mxu0 0.0
  %785 = vmatpush.msra.mxu0 0.0
  %786 = vmatpush.msra.mxu0 %v307
  %787 = vmatpush.msra.mxu0 %v304
  %788 = vmatpush.msra.mxu0 %v301
  %789 = vmatpush.msra.mxu0 %v298
  %790 = vmatmul.f32.gmra.mxu0 %v732
  %v791 = vpop.f32.mrf.mxu0
  %v792 = vadd.f32 %v270, %v791
  %793 = vdwg.mxu0
  %v794 = vadd.f32 %v728, %v752
  %v795 = vxor.u32 %v794, 2147483648
  %v796 = vmul.f32 %v795, 1.442695
  %v797 = vpow.pop %v796
  %v798 = vadd.f32 %v797, 1.0
  %v799 = vrcp.pop %v798
  %v800 = vmul.f32 %v798, %v799
  %v801 = vsub.f32 1.0, %v800
  %v802 = vmul.f32 %v799, %v801
  %v803 = vadd.f32 %v799, %v802
  %vm804 = vweird.f32 %v798
  %vm805 = vweird.f32 %v799
  %vm806 = vmor %vm804, %vm805
  %v807 = vsel %vm806, %v799, %v803
  %v808 = vand.u32 2147483647, %v798
  %vm809 = vcmp.eq.f32.partialorder %v808, 8.507059e+37
  %v810 = vand.u32 %v798, 2147483648
  %v811 = vor.u32 1.1754944e-38, %v810
  %v812 = vsel %vm809, %v811, %v807
  %v813 = vmul.f32 1.0, %v812
  %v814 = vadd.f32 %v729, %v772
  %v815 = vxor.u32 %v814, 2147483648
  %v816 = vmul.f32 %v815, 1.442695
  %v817 = vpow.pop %v816
  %v818 = vadd.f32 %v817, 1.0
  %v819 = vrcp.pop %v818
  %v820 = vmul.f32 %v818, %v819
  %v821 = vsub.f32 1.0, %v820
  %v822 = vmul.f32 %v819, %v821
  %v823 = vadd.f32 %v819, %v822
  %vm824 = vweird.f32 %v818
  %vm825 = vweird.f32 %v819
  %vm826 = vmor %vm824, %vm825
  %v827 = vsel %vm826, %v819, %v823
  %v828 = vand.u32 2147483647, %v818
  %vm829 = vcmp.eq.f32.partialorder %v828, 8.507059e+37
  %v830 = vand.u32 %v818, 2147483648
  %v831 = vor.u32 1.1754944e-38, %v830
  %v832 = vsel %vm829, %v831, %v827
  %v833 = vmul.f32 1.0, %v832
  %v834 = vmul.f32 %v813, %v792
  %v835 = vadd.f32 %v730, %v834
  %v836 = vtanh.pop %v835
  %v837 = vsub.f32 1.0, %v833
  %v838 = vmul.f32 %v837, %v836
  %v839 = vmul.f32 %v833, %v532
  %v840 = vadd.f32 %v838, %v839
  %841 = vmatpush.msra.mxu0 0.0
  %842 = vmatpush.msra.mxu0 0.0
  %843 = vmatpush.msra.mxu0 0.0
  %844 = vmatpush.msra.mxu0 0.0
  %845 = vmatpush.msra.mxu0 0.0
  %846 = vmatpush.msra.mxu0 0.0
  %847 = vmatpush.msra.mxu0 0.0
  %848 = vmatpush.msra.mxu0 0.0
  %849 = vmatpush.msra.mxu0 0.0
  %850 = vmatpush.msra.mxu0 0.0
  %851 = vmatpush.msra.mxu0 0.0
  %852 = vmatpush.msra.mxu0 0.0
  %853 = vmatpush.msra.mxu0 %v542
  %854 = vmatpush.msra.mxu0 %v539
  %855 = vmatpush.msra.mxu0 %v536
  %856 = vmatpush.msra.mxu0 %v533
  %857 = vmatmul.f32.gmra.mxu0 %v732
  %v858 = vpop.f32.mrf.mxu0
  %v859 = vadd.f32 %v284, %v858
  %860 = vdwg.mxu0
  %861 = vmatpush.msra.mxu0 0.0
  %862 = vmatpush.msra.mxu0 0.0
  %863 = vmatpush.msra.mxu0 0.0
  %864 = vmatpush.msra.mxu0 0.0
  %865 = vmatpush.msra.mxu0 0.0
  %866 = vmatpush.msra.mxu0 0.0
  %867 = vmatpush.msra.mxu0 0.0
  %868 = vmatpush.msra.mxu0 0.0
  %869 = vmatpush.msra.mxu0 0.0
  %870 = vmatpush.msra.mxu0 0.0
  %871 = vmatpush.msra.mxu0 0.0
  %872 = vmatpush.msra.mxu0 0.0
  %873 = vmatpush.msra.mxu0 %v543
  %874 = vmatpush.msra.mxu0 %v540
  %875 = vmatpush.msra.mxu0 %v537
  %876 = vmatpush.msra.mxu0 %v534
  %877 = vmatmul.f32.gmra.mxu0 %v732
  %v878 = vpop.f32.mrf.mxu0
  %v879 = vadd.f32 %v285, %v878
  %880 = vdwg.mxu0
  %881 = vmatpush.msra.mxu0 0.0
  %882 = vmatpush.msra.mxu0 0.0
  %883 = vmatpush.msra.mxu0 0.0
  %884 = vmatpush.msra.mxu0 0.0
  %885 = vmatpush.msra.mxu0 0.0
  %886 = vmatpush.msra.mxu0 0.0
  %887 = vmatpush.msra.mxu0 0.0
  %888 = vmatpush.msra.mxu0 0.0
  %889 = vmatpush.msra.mxu0 0.0
  %890 = vmatpush.msra.mxu0 0.0
  %891 = vmatpush.msra.mxu0 0.0
  %892 = vmatpush.msra.mxu0 0.0
  %893 = vmatpush.msra.mxu0 %v544
  %894 = vmatpush.msra.mxu0 %v541
  %895 = vmatpush.msra.mxu0 %v538
  %896 = vmatpush.msra.mxu0 %v535
  %897 = vmatmul.f32.gmra.mxu0 %v732
  %v898 = vpop.f32.mrf.mxu0
  %v899 = vadd.f32 %v286, %v898
  %900 = vdwg.mxu0
  %v902 = vsel %vm308, %v726, 0
  %904 = vmatpush.msra.mxu0 0.0
  %905 = vmatpush.msra.mxu0 0.0
  %906 = vmatpush.msra.mxu0 0.0
  %907 = vmatpush.msra.mxu0 0.0
  %908 = vmatpush.msra.mxu0 0.0
  %909 = vmatpush.msra.mxu0 0.0
  %910 = vmatpush.msra.mxu0 0.0
  %911 = vmatpush.msra.mxu0 0.0
  %912 = vmatpush.msra.mxu0 0.0
  %913 = vmatpush.msra.mxu0 0.0
  %914 = vmatpush.msra.mxu0 0.0
  %915 = vmatpush.msra.mxu0 0.0
  %916 = vmatpush.msra.mxu0 %v614
  %917 = vmatpush.msra.mxu0 %v611
  %918 = vmatpush.msra.mxu0 %v608
  %919 = vmatpush.msra.mxu0 %v605
  %920 = vmatmul.f32.gmra.mxu0 %v902
  %v921 = vpop.f32.mrf.mxu0
  %v922 = vadd.f32 %v276, %v921
  %923 = vdwg.mxu0
  %924 = vmatpush.msra.mxu0 0.0
  %925 = vmatpush.msra.mxu0 0.0
  %926 = vmatpush.msra.mxu0 0.0
  %927 = vmatpush.msra.mxu0 0.0
  %928 = vmatpush.msra.mxu0 0.0
  %929 = vmatpush.msra.mxu0 0.0
  %930 = vmatpush.msra.mxu0 0.0
  %931 = vmatpush.msra.mxu0 0.0
  %932 = vmatpush.msra.mxu0 0.0
  %933 = vmatpush.msra.mxu0 0.0
  %934 = vmatpush.msra.mxu0 0.0
  %935 = vmatpush.msra.mxu0 0.0
  %936 = vmatpush.msra.mxu0 %v615
  %937 = vmatpush.msra.mxu0 %v612
  %938 = vmatpush.msra.mxu0 %v609
  %939 = vmatpush.msra.mxu0 %v606
  %940 = vmatmul.f32.gmra.mxu0 %v902
  %v941 = vpop.f32.mrf.mxu0
  %v942 = vadd.f32 %v277, %v941
  %943 = vdwg.mxu0
  %944 = vmatpush.msra.mxu0 0.0
  %945 = vmatpush.msra.mxu0 0.0
  %946 = vmatpush.msra.mxu0 0.0
  %947 = vmatpush.msra.mxu0 0.0
  %948 = vmatpush.msra.mxu0 0.0
  %949 = vmatpush.msra.mxu0 0.0
  %950 = vmatpush.msra.mxu0 0.0
  %951 = vmatpush.msra.mxu0 0.0
  %952 = vmatpush.msra.mxu0 0.0
  %953 = vmatpush.msra.mxu0 0.0
  %954 = vmatpush.msra.mxu0 0.0
  %955 = vmatpush.msra.mxu0 0.0
  %956 = vmatpush.msra.mxu0 %v616
  %957 = vmatpush.msra.mxu0 %v613
  %958 = vmatpush.msra.mxu0 %v610
  %959 = vmatpush.msra.mxu0 %v607
  %960 = vmatmul.f32.gmra.mxu0 %v902
  %v961 = vpop.f32.mrf.mxu0
  %v962 = vadd.f32 %v278, %v961
  %963 = vdwg.mxu0
  %v964 = vadd.f32 %v859, %v922
  %v965 = vxor.u32 %v964, 2147483648
  %v966 = vmul.f32 %v965, 1.442695
  %v967 = vpow.pop %v966
  %v968 = vadd.f32 %v967, 1.0
  %v969 = vrcp.pop %v968
  %v970 = vmul.f32 %v968, %v969
  %v971 = vsub.f32 1.0, %v970
  %v972 = vmul.f32 %v969, %v971
  %v973 = vadd.f32 %v969, %v972
  %vm974 = vweird.f32 %v968
  %vm975 = vweird.f32 %v969
  %vm976 = vmor %vm974, %vm975
  %v977 = vsel %vm976, %v969, %v973
  %v978 = vand.u32 2147483647, %v968
  %vm979 = vcmp.eq.f32.partialorder %v978, 8.507059e+37
  %v980 = vand.u32 %v968, 2147483648
  %v981 = vor.u32 1.1754944e-38, %v980
  %v982 = vsel %vm979, %v981, %v977
  %v983 = vmul.f32 1.0, %v982
  %v984 = vadd.f32 %v879, %v942
  %v985 = vxor.u32 %v984, 2147483648
  %v986 = vmul.f32 %v985, 1.442695
  %v987 = vpow.pop %v986
  %v988 = vadd.f32 %v987, 1.0
  %v989 = vrcp.pop %v988
  %v990 = vmul.f32 %v988, %v989
  %v991 = vsub.f32 1.0, %v990
  %v992 = vmul.f32 %v989, %v991
  %v993 = vadd.f32 %v989, %v992
  %vm994 = vweird.f32 %v988
  %vm995 = vweird.f32 %v989
  %vm996 = vmor %vm994, %vm995
  %v997 = vsel %vm996, %v989, %v993
  %v998 = vand.u32 2147483647, %v988
  %vm999 = vcmp.eq.f32.partialorder %v998, 8.507059e+37
  %v1000 = vand.u32 %v988, 2147483648
  %v1001 = vor.u32 1.1754944e-38, %v1000
  %v1002 = vsel %vm999, %v1001, %v997
  %v1003 = vmul.f32 1.0, %v1002
  %v1004 = vmul.f32 %v983, %v962
  %v1005 = vadd.f32 %v899, %v1004
  %v1006 = vtanh.pop %v1005
  %v1007 = vsub.f32 1.0, %v1003
  %v1008 = vmul.f32 %v1007, %v1006
  %v1009 = vmul.f32 %v1003, %v726
  %v1010 = vadd.f32 %v1008, %v1009
  %s1011 = scalar_lea.vmem [#allocation2], 72
  %v1012 = vld [vmem:[%s1011] sm:$0xff]
  %v1013 = vld [vmem:[%s1011 + $0x8] sm:$0xff]
  %v1014 = vld [vmem:[%s1011 + $0x10] sm:$0xff]
  %v1016 = vsel %vm308, %v840, 0
  %1018 = vmatpush.msra.mxu0 0.0
  %1019 = vmatpush.msra.mxu0 0.0
  %1020 = vmatpush.msra.mxu0 0.0
  %1021 = vmatpush.msra.mxu0 0.0
  %1022 = vmatpush.msra.mxu0 0.0
  %1023 = vmatpush.msra.mxu0 0.0
  %1024 = vmatpush.msra.mxu0 0.0
  %1025 = vmatpush.msra.mxu0 0.0
  %1026 = vmatpush.msra.mxu0 0.0
  %1027 = vmatpush.msra.mxu0 0.0
  %1028 = vmatpush.msra.mxu0 0.0
  %1029 = vmatpush.msra.mxu0 0.0
  %1030 = vmatpush.msra.mxu0 %v305
  %1031 = vmatpush.msra.mxu0 %v302
  %1032 = vmatpush.msra.mxu0 %v299
  %1033 = vmatpush.msra.mxu0 %v296
  %1034 = vmatmul.f32.gmra.mxu0 %v1016
  %v1035 = vpop.f32.mrf.mxu0
  %v1036 = vadd.f32 %v268, %v1035
  %1037 = vdwg.mxu0
  %1038 = vmatpush.msra.mxu0 0.0
  %1039 = vmatpush.msra.mxu0 0.0
  %1040 = vmatpush.msra.mxu0 0.0
  %1041 = vmatpush.msra.mxu0 0.0
  %1042 = vmatpush.msra.mxu0 0.0
  %1043 = vmatpush.msra.mxu0 0.0
  %1044 = vmatpush.msra.mxu0 0.0
  %1045 = vmatpush.msra.mxu0 0.0
  %1046 = vmatpush.msra.mxu0 0.0
  %1047 = vmatpush.msra.mxu0 0.0
  %1048 = vmatpush.msra.mxu0 0.0
  %1049 = vmatpush.msra.mxu0 0.0
  %1050 = vmatpush.msra.mxu0 %v306
  %1051 = vmatpush.msra.mxu0 %v303
  %1052 = vmatpush.msra.mxu0 %v300
  %1053 = vmatpush.msra.mxu0 %v297
  %1054 = vmatmul.f32.gmra.mxu0 %v1016
  %v1055 = vpop.f32.mrf.mxu0
  %v1056 = vadd.f32 %v269, %v1055
  %1057 = vdwg.mxu0
  %1058 = vmatpush.msra.mxu0 0.0
  %1059 = vmatpush.msra.mxu0 0.0
  %1060 = vmatpush.msra.mxu0 0.0
  %1061 = vmatpush.msra.mxu0 0.0
  %1062 = vmatpush.msra.mxu0 0.0
  %1063 = vmatpush.msra.mxu0 0.0
  %1064 = vmatpush.msra.mxu0 0.0
  %1065 = vmatpush.msra.mxu0 0.0
  %1066 = vmatpush.msra.mxu0 0.0
  %1067 = vmatpush.msra.mxu0 0.0
  %1068 = vmatpush.msra.mxu0 0.0
  %1069 = vmatpush.msra.mxu0 0.0
  %1070 = vmatpush.msra.mxu0 %v307
  %1071 = vmatpush.msra.mxu0 %v304
  %1072 = vmatpush.msra.mxu0 %v301
  %1073 = vmatpush.msra.mxu0 %v298
  %1074 = vmatmul.f32.gmra.mxu0 %v1016
  %v1075 = vpop.f32.mrf.mxu0
  %v1076 = vadd.f32 %v270, %v1075
  %1077 = vdwg.mxu0
  %v1078 = vadd.f32 %v1012, %v1036
  %v1079 = vxor.u32 %v1078, 2147483648
  %v1080 = vmul.f32 %v1079, 1.442695
  %v1081 = vpow.pop %v1080
  %v1082 = vadd.f32 %v1081, 1.0
  %v1083 = vrcp.pop %v1082
  %v1084 = vmul.f32 %v1082, %v1083
  %v1085 = vsub.f32 1.0, %v1084
  %v1086 = vmul.f32 %v1083, %v1085
  %v1087 = vadd.f32 %v1083, %v1086
  %vm1088 = vweird.f32 %v1082
  %vm1089 = vweird.f32 %v1083
  %vm1090 = vmor %vm1088, %vm1089
  %v1091 = vsel %vm1090, %v1083, %v1087
  %v1092 = vand.u32 2147483647, %v1082
  %vm1093 = vcmp.eq.f32.partialorder %v1092, 8.507059e+37
  %v1094 = vand.u32 %v1082, 2147483648
  %v1095 = vor.u32 1.1754944e-38, %v1094
  %v1096 = vsel %vm1093, %v1095, %v1091
  %v1097 = vmul.f32 1.0, %v1096
  %v1098 = vadd.f32 %v1013, %v1056
  %v1099 = vxor.u32 %v1098, 2147483648
  %v1100 = vmul.f32 %v1099, 1.442695
  %v1101 = vpow.pop %v1100
  %v1102 = vadd.f32 %v1101, 1.0
  %v1103 = vrcp.pop %v1102
  %v1104 = vmul.f32 %v1102, %v1103
  %v1105 = vsub.f32 1.0, %v1104
  %v1106 = vmul.f32 %v1103, %v1105
  %v1107 = vadd.f32 %v1103, %v1106
  %vm1108 = vweird.f32 %v1102
  %vm1109 = vweird.f32 %v1103
  %vm1110 = vmor %vm1108, %vm1109
  %v1111 = vsel %vm1110, %v1103, %v1107
  %v1112 = vand.u32 2147483647, %v1102
  %vm1113 = vcmp.eq.f32.partialorder %v1112, 8.507059e+37
  %v1114 = vand.u32 %v1102, 2147483648
  %v1115 = vor.u32 1.1754944e-38, %v1114
  %v1116 = vsel %vm1113, %v1115, %v1111
  %v1117 = vmul.f32 1.0, %v1116
  %v1118 = vmul.f32 %v1097, %v1076
  %v1119 = vadd.f32 %v1014, %v1118
  %v1120 = vtanh.pop %v1119
  %v1121 = vsub.f32 1.0, %v1117
  %v1122 = vmul.f32 %v1121, %v1120
  %v1123 = vmul.f32 %v1117, %v840
  %v1124 = vadd.f32 %v1122, %v1123
  %1125 = vmatpush.msra.mxu0 0.0
  %1126 = vmatpush.msra.mxu0 0.0
  %1127 = vmatpush.msra.mxu0 0.0
  %1128 = vmatpush.msra.mxu0 0.0
  %1129 = vmatpush.msra.mxu0 0.0
  %1130 = vmatpush.msra.mxu0 0.0
  %1131 = vmatpush.msra.mxu0 0.0
  %1132 = vmatpush.msra.mxu0 0.0
  %1133 = vmatpush.msra.mxu0 0.0
  %1134 = vmatpush.msra.mxu0 0.0
  %1135 = vmatpush.msra.mxu0 0.0
  %1136 = vmatpush.msra.mxu0 0.0
  %1137 = vmatpush.msra.mxu0 %v542
  %1138 = vmatpush.msra.mxu0 %v539
  %1139 = vmatpush.msra.mxu0 %v536
  %1140 = vmatpush.msra.mxu0 %v533
  %1141 = vmatmul.f32.gmra.mxu0 %v1016
  %v1142 = vpop.f32.mrf.mxu0
  %v1143 = vadd.f32 %v284, %v1142
  %1144 = vdwg.mxu0
  %1145 = vmatpush.msra.mxu0 0.0
  %1146 = vmatpush.msra.mxu0 0.0
  %1147 = vmatpush.msra.mxu0 0.0
  %1148 = vmatpush.msra.mxu0 0.0
  %1149 = vmatpush.msra.mxu0 0.0
  %1150 = vmatpush.msra.mxu0 0.0
  %1151 = vmatpush.msra.mxu0 0.0
  %1152 = vmatpush.msra.mxu0 0.0
  %1153 = vmatpush.msra.mxu0 0.0
  %1154 = vmatpush.msra.mxu0 0.0
  %1155 = vmatpush.msra.mxu0 0.0
  %1156 = vmatpush.msra.mxu0 0.0
  %1157 = vmatpush.msra.mxu0 %v543
  %1158 = vmatpush.msra.mxu0 %v540
  %1159 = vmatpush.msra.mxu0 %v537
  %1160 = vmatpush.msra.mxu0 %v534
  %1161 = vmatmul.f32.gmra.mxu0 %v1016
  %v1162 = vpop.f32.mrf.mxu0
  %v1163 = vadd.f32 %v285, %v1162
  %1164 = vdwg.mxu0
  %1165 = vmatpush.msra.mxu0 0.0
  %1166 = vmatpush.msra.mxu0 0.0
  %1167 = vmatpush.msra.mxu0 0.0
  %1168 = vmatpush.msra.mxu0 0.0
  %1169 = vmatpush.msra.mxu0 0.0
  %1170 = vmatpush.msra.mxu0 0.0
  %1171 = vmatpush.msra.mxu0 0.0
  %1172 = vmatpush.msra.mxu0 0.0
  %1173 = vmatpush.msra.mxu0 0.0
  %1174 = vmatpush.msra.mxu0 0.0
  %1175 = vmatpush.msra.mxu0 0.0
  %1176 = vmatpush.msra.mxu0 0.0
  %1177 = vmatpush.msra.mxu0 %v544
  %1178 = vmatpush.msra.mxu0 %v541
  %1179 = vmatpush.msra.mxu0 %v538
  %1180 = vmatpush.msra.mxu0 %v535
  %1181 = vmatmul.f32.gmra.mxu0 %v1016
  %v1182 = vpop.f32.mrf.mxu0
  %v1183 = vadd.f32 %v286, %v1182
  %1184 = vdwg.mxu0
  %v1186 = vsel %vm308, %v1010, 0
  %1188 = vmatpush.msra.mxu0 0.0
  %1189 = vmatpush.msra.mxu0 0.0
  %1190 = vmatpush.msra.mxu0 0.0
  %1191 = vmatpush.msra.mxu0 0.0
  %1192 = vmatpush.msra.mxu0 0.0
  %1193 = vmatpush.msra.mxu0 0.0
  %1194 = vmatpush.msra.mxu0 0.0
  %1195 = vmatpush.msra.mxu0 0.0
  %1196 = vmatpush.msra.mxu0 0.0
  %1197 = vmatpush.msra.mxu0 0.0
  %1198 = vmatpush.msra.mxu0 0.0
  %1199 = vmatpush.msra.mxu0 0.0
  %1200 = vmatpush.msra.mxu0 %v614
  %1201 = vmatpush.msra.mxu0 %v611
  %1202 = vmatpush.msra.mxu0 %v608
  %1203 = vmatpush.msra.mxu0 %v605
  %1204 = vmatmul.f32.gmra.mxu0 %v1186
  %v1205 = vpop.f32.mrf.mxu0
  %v1206 = vadd.f32 %v276, %v1205
  %1207 = vdwg.mxu0
  %1208 = vmatpush.msra.mxu0 0.0
  %1209 = vmatpush.msra.mxu0 0.0
  %1210 = vmatpush.msra.mxu0 0.0
  %1211 = vmatpush.msra.mxu0 0.0
  %1212 = vmatpush.msra.mxu0 0.0
  %1213 = vmatpush.msra.mxu0 0.0
  %1214 = vmatpush.msra.mxu0 0.0
  %1215 = vmatpush.msra.mxu0 0.0
  %1216 = vmatpush.msra.mxu0 0.0
  %1217 = vmatpush.msra.mxu0 0.0
  %1218 = vmatpush.msra.mxu0 0.0
  %1219 = vmatpush.msra.mxu0 0.0
  %1220 = vmatpush.msra.mxu0 %v615
  %1221 = vmatpush.msra.mxu0 %v612
  %1222 = vmatpush.msra.mxu0 %v609
  %1223 = vmatpush.msra.mxu0 %v606
  %1224 = vmatmul.f32.gmra.mxu0 %v1186
  %v1225 = vpop.f32.mrf.mxu0
  %v1226 = vadd.f32 %v277, %v1225
  %1227 = vdwg.mxu0
  %1228 = vmatpush.msra.mxu0 0.0
  %1229 = vmatpush.msra.mxu0 0.0
  %1230 = vmatpush.msra.mxu0 0.0
  %1231 = vmatpush.msra.mxu0 0.0
  %1232 = vmatpush.msra.mxu0 0.0
  %1233 = vmatpush.msra.mxu0 0.0
  %1234 = vmatpush.msra.mxu0 0.0
  %1235 = vmatpush.msra.mxu0 0.0
  %1236 = vmatpush.msra.mxu0 0.0
  %1237 = vmatpush.msra.mxu0 0.0
  %1238 = vmatpush.msra.mxu0 0.0
  %1239 = vmatpush.msra.mxu0 0.0
  %1240 = vmatpush.msra.mxu0 %v616
  %1241 = vmatpush.msra.mxu0 %v613
  %1242 = vmatpush.msra.mxu0 %v610
  %1243 = vmatpush.msra.mxu0 %v607
  %1244 = vmatmul.f32.gmra.mxu0 %v1186
  %v1245 = vpop.f32.mrf.mxu0
  %v1246 = vadd.f32 %v278, %v1245
  %1247 = vdwg.mxu0
  %v1248 = vadd.f32 %v1143, %v1206
  %v1249 = vxor.u32 %v1248, 2147483648
  %v1250 = vmul.f32 %v1249, 1.442695
  %v1251 = vpow.pop %v1250
  %v1252 = vadd.f32 %v1251, 1.0
  %v1253 = vrcp.pop %v1252
  %v1254 = vmul.f32 %v1252, %v1253
  %v1255 = vsub.f32 1.0, %v1254
  %v1256 = vmul.f32 %v1253, %v1255
  %v1257 = vadd.f32 %v1253, %v1256
  %vm1258 = vweird.f32 %v1252
  %vm1259 = vweird.f32 %v1253
  %vm1260 = vmor %vm1258, %vm1259
  %v1261 = vsel %vm1260, %v1253, %v1257
  %v1262 = vand.u32 2147483647, %v1252
  %vm1263 = vcmp.eq.f32.partialorder %v1262, 8.507059e+37
  %v1264 = vand.u32 %v1252, 2147483648
  %v1265 = vor.u32 1.1754944e-38, %v1264
  %v1266 = vsel %vm1263, %v1265, %v1261
  %v1267 = vmul.f32 1.0, %v1266
  %v1268 = vadd.f32 %v1163, %v1226
  %v1269 = vxor.u32 %v1268, 2147483648
  %v1270 = vmul.f32 %v1269, 1.442695
  %v1271 = vpow.pop %v1270
  %v1272 = vadd.f32 %v1271, 1.0
  %v1273 = vrcp.pop %v1272
  %v1274 = vmul.f32 %v1272, %v1273
  %v1275 = vsub.f32 1.0, %v1274
  %v1276 = vmul.f32 %v1273, %v1275
  %v1277 = vadd.f32 %v1273, %v1276
  %vm1278 = vweird.f32 %v1272
  %vm1279 = vweird.f32 %v1273
  %vm1280 = vmor %vm1278, %vm1279
  %v1281 = vsel %vm1280, %v1273, %v1277
  %v1282 = vand.u32 2147483647, %v1272
  %vm1283 = vcmp.eq.f32.partialorder %v1282, 8.507059e+37
  %v1284 = vand.u32 %v1272, 2147483648
  %v1285 = vor.u32 1.1754944e-38, %v1284
  %v1286 = vsel %vm1283, %v1285, %v1281
  %v1287 = vmul.f32 1.0, %v1286
  %v1288 = vmul.f32 %v1267, %v1246
  %v1289 = vadd.f32 %v1183, %v1288
  %v1290 = vtanh.pop %v1289
  %v1291 = vsub.f32 1.0, %v1287
  %v1292 = vmul.f32 %v1291, %v1290
  %v1293 = vmul.f32 %v1287, %v1010
  %v1294 = vadd.f32 %v1292, %v1293
  %s1295 = scalar_lea.vmem [#allocation2], 96
  %v1296 = vld [vmem:[%s1295] sm:$0xff]
  %v1297 = vld [vmem:[%s1295 + $0x8] sm:$0xff]
  %v1298 = vld [vmem:[%s1295 + $0x10] sm:$0xff]
  %v1300 = vsel %vm308, %v1124, 0
  %1302 = vmatpush.msra.mxu0 0.0
  %1303 = vmatpush.msra.mxu0 0.0
  %1304 = vmatpush.msra.mxu0 0.0
  %1305 = vmatpush.msra.mxu0 0.0
  %1306 = vmatpush.msra.mxu0 0.0
  %1307 = vmatpush.msra.mxu0 0.0
  %1308 = vmatpush.msra.mxu0 0.0
  %1309 = vmatpush.msra.mxu0 0.0
  %1310 = vmatpush.msra.mxu0 0.0
  %1311 = vmatpush.msra.mxu0 0.0
  %1312 = vmatpush.msra.mxu0 0.0
  %1313 = vmatpush.msra.mxu0 0.0
  %1314 = vmatpush.msra.mxu0 %v305
  %1315 = vmatpush.msra.mxu0 %v302
  %1316 = vmatpush.msra.mxu0 %v299
  %1317 = vmatpush.msra.mxu0 %v296
  %1318 = vmatmul.f32.gmra.mxu0 %v1300
  %v1319 = vpop.f32.mrf.mxu0
  %v1320 = vadd.f32 %v268, %v1319
  %1321 = vdwg.mxu0
  %1322 = vmatpush.msra.mxu0 0.0
  %1323 = vmatpush.msra.mxu0 0.0
  %1324 = vmatpush.msra.mxu0 0.0
  %1325 = vmatpush.msra.mxu0 0.0
  %1326 = vmatpush.msra.mxu0 0.0
  %1327 = vmatpush.msra.mxu0 0.0
  %1328 = vmatpush.msra.mxu0 0.0
  %1329 = vmatpush.msra.mxu0 0.0
  %1330 = vmatpush.msra.mxu0 0.0
  %1331 = vmatpush.msra.mxu0 0.0
  %1332 = vmatpush.msra.mxu0 0.0
  %1333 = vmatpush.msra.mxu0 0.0
  %1334 = vmatpush.msra.mxu0 %v306
  %1335 = vmatpush.msra.mxu0 %v303
  %1336 = vmatpush.msra.mxu0 %v300
  %1337 = vmatpush.msra.mxu0 %v297
  %1338 = vmatmul.f32.gmra.mxu0 %v1300
  %v1339 = vpop.f32.mrf.mxu0
  %v1340 = vadd.f32 %v269, %v1339
  %1341 = vdwg.mxu0
  %1342 = vmatpush.msra.mxu0 0.0
  %1343 = vmatpush.msra.mxu0 0.0
  %1344 = vmatpush.msra.mxu0 0.0
  %1345 = vmatpush.msra.mxu0 0.0
  %1346 = vmatpush.msra.mxu0 0.0
  %1347 = vmatpush.msra.mxu0 0.0
  %1348 = vmatpush.msra.mxu0 0.0
  %1349 = vmatpush.msra.mxu0 0.0
  %1350 = vmatpush.msra.mxu0 0.0
  %1351 = vmatpush.msra.mxu0 0.0
  %1352 = vmatpush.msra.mxu0 0.0
  %1353 = vmatpush.msra.mxu0 0.0
  %1354 = vmatpush.msra.mxu0 %v307
  %1355 = vmatpush.msra.mxu0 %v304
  %1356 = vmatpush.msra.mxu0 %v301
  %1357 = vmatpush.msra.mxu0 %v298
  %1358 = vmatmul.f32.gmra.mxu0 %v1300
  %v1359 = vpop.f32.mrf.mxu0
  %v1360 = vadd.f32 %v270, %v1359
  %1361 = vdwg.mxu0
  %v1362 = vadd.f32 %v1296, %v1320
  %v1363 = vxor.u32 %v1362, 2147483648
  %v1364 = vmul.f32 %v1363, 1.442695
  %v1365 = vpow.pop %v1364
  %v1366 = vadd.f32 %v1365, 1.0
  %v1367 = vrcp.pop %v1366
  %v1368 = vmul.f32 %v1366, %v1367
  %v1369 = vsub.f32 1.0, %v1368
  %v1370 = vmul.f32 %v1367, %v1369
  %v1371 = vadd.f32 %v1367, %v1370
  %vm1372 = vweird.f32 %v1366
  %vm1373 = vweird.f32 %v1367
  %vm1374 = vmor %vm1372, %vm1373
  %v1375 = vsel %vm1374, %v1367, %v1371
  %v1376 = vand.u32 2147483647, %v1366
  %vm1377 = vcmp.eq.f32.partialorder %v1376, 8.507059e+37
  %v1378 = vand.u32 %v1366, 2147483648
  %v1379 = vor.u32 1.1754944e-38, %v1378
  %v1380 = vsel %vm1377, %v1379, %v1375
  %v1381 = vmul.f32 1.0, %v1380
  %v1382 = vadd.f32 %v1297, %v1340
  %v1383 = vxor.u32 %v1382, 2147483648
  %v1384 = vmul.f32 %v1383, 1.442695
  %v1385 = vpow.pop %v1384
  %v1386 = vadd.f32 %v1385, 1.0
  %v1387 = vrcp.pop %v1386
  %v1388 = vmul.f32 %v1386, %v1387
  %v1389 = vsub.f32 1.0, %v1388
  %v1390 = vmul.f32 %v1387, %v1389
  %v1391 = vadd.f32 %v1387, %v1390
  %vm1392 = vweird.f32 %v1386
  %vm1393 = vweird.f32 %v1387
  %vm1394 = vmor %vm1392, %vm1393
  %v1395 = vsel %vm1394, %v1387, %v1391
  %v1396 = vand.u32 2147483647, %v1386
  %vm1397 = vcmp.eq.f32.partialorder %v1396, 8.507059e+37
  %v1398 = vand.u32 %v1386, 2147483648
  %v1399 = vor.u32 1.1754944e-38, %v1398
  %v1400 = vsel %vm1397, %v1399, %v1395
  %v1401 = vmul.f32 1.0, %v1400
  %v1402 = vmul.f32 %v1381, %v1360
  %v1403 = vadd.f32 %v1298, %v1402
  %v1404 = vtanh.pop %v1403
  %v1405 = vsub.f32 1.0, %v1401
  %v1406 = vmul.f32 %v1405, %v1404
  %v1407 = vmul.f32 %v1401, %v1124
  %v1408 = vadd.f32 %v1406, %v1407
  %1409 = vmatpush.msra.mxu0 0.0
  %1410 = vmatpush.msra.mxu0 0.0
  %1411 = vmatpush.msra.mxu0 0.0
  %1412 = vmatpush.msra.mxu0 0.0
  %1413 = vmatpush.msra.mxu0 0.0
  %1414 = vmatpush.msra.mxu0 0.0
  %1415 = vmatpush.msra.mxu0 0.0
  %1416 = vmatpush.msra.mxu0 0.0
  %1417 = vmatpush.msra.mxu0 0.0
  %1418 = vmatpush.msra.mxu0 0.0
  %1419 = vmatpush.msra.mxu0 0.0
  %1420 = vmatpush.msra.mxu0 0.0
  %1421 = vmatpush.msra.mxu0 %v542
  %1422 = vmatpush.msra.mxu0 %v539
  %1423 = vmatpush.msra.mxu0 %v536
  %1424 = vmatpush.msra.mxu0 %v533
  %1425 = vmatmul.f32.gmra.mxu0 %v1300
  %v1426 = vpop.f32.mrf.mxu0
  %v1427 = vadd.f32 %v284, %v1426
  %1428 = vdwg.mxu0
  %1429 = vmatpush.msra.mxu0 0.0
  %1430 = vmatpush.msra.mxu0 0.0
  %1431 = vmatpush.msra.mxu0 0.0
  %1432 = vmatpush.msra.mxu0 0.0
  %1433 = vmatpush.msra.mxu0 0.0
  %1434 = vmatpush.msra.mxu0 0.0
  %1435 = vmatpush.msra.mxu0 0.0
  %1436 = vmatpush.msra.mxu0 0.0
  %1437 = vmatpush.msra.mxu0 0.0
  %1438 = vmatpush.msra.mxu0 0.0
  %1439 = vmatpush.msra.mxu0 0.0
  %1440 = vmatpush.msra.mxu0 0.0
  %1441 = vmatpush.msra.mxu0 %v543
  %1442 = vmatpush.msra.mxu0 %v540
  %1443 = vmatpush.msra.mxu0 %v537
  %1444 = vmatpush.msra.mxu0 %v534
  %1445 = vmatmul.f32.gmra.mxu0 %v1300
  %v1446 = vpop.f32.mrf.mxu0
  %v1447 = vadd.f32 %v285, %v1446
  %1448 = vdwg.mxu0
  %1449 = vmatpush.msra.mxu0 0.0
  %1450 = vmatpush.msra.mxu0 0.0
  %1451 = vmatpush.msra.mxu0 0.0
  %1452 = vmatpush.msra.mxu0 0.0
  %1453 = vmatpush.msra.mxu0 0.0
  %1454 = vmatpush.msra.mxu0 0.0
  %1455 = vmatpush.msra.mxu0 0.0
  %1456 = vmatpush.msra.mxu0 0.0
  %1457 = vmatpush.msra.mxu0 0.0
  %1458 = vmatpush.msra.mxu0 0.0
  %1459 = vmatpush.msra.mxu0 0.0
  %1460 = vmatpush.msra.mxu0 0.0
  %1461 = vmatpush.msra.mxu0 %v544
  %1462 = vmatpush.msra.mxu0 %v541
  %1463 = vmatpush.msra.mxu0 %v538
  %1464 = vmatpush.msra.mxu0 %v535
  %1465 = vmatmul.f32.gmra.mxu0 %v1300
  %v1466 = vpop.f32.mrf.mxu0
  %v1467 = vadd.f32 %v286, %v1466
  %1468 = vdwg.mxu0
  %v1470 = vsel %vm308, %v1294, 0
  %1472 = vmatpush.msra.mxu0 0.0
  %1473 = vmatpush.msra.mxu0 0.0
  %1474 = vmatpush.msra.mxu0 0.0
  %1475 = vmatpush.msra.mxu0 0.0
  %1476 = vmatpush.msra.mxu0 0.0
  %1477 = vmatpush.msra.mxu0 0.0
  %1478 = vmatpush.msra.mxu0 0.0
  %1479 = vmatpush.msra.mxu0 0.0
  %1480 = vmatpush.msra.mxu0 0.0
  %1481 = vmatpush.msra.mxu0 0.0
  %1482 = vmatpush.msra.mxu0 0.0
  %1483 = vmatpush.msra.mxu0 0.0
  %1484 = vmatpush.msra.mxu0 %v614
  %1485 = vmatpush.msra.mxu0 %v611
  %1486 = vmatpush.msra.mxu0 %v608
  %1487 = vmatpush.msra.mxu0 %v605
  %1488 = vmatmul.f32.gmra.mxu0 %v1470
  %v1489 = vpop.f32.mrf.mxu0
  %v1490 = vadd.f32 %v276, %v1489
  %1491 = vdwg.mxu0
  %1492 = vmatpush.msra.mxu0 0.0
  %1493 = vmatpush.msra.mxu0 0.0
  %1494 = vmatpush.msra.mxu0 0.0
  %1495 = vmatpush.msra.mxu0 0.0
  %1496 = vmatpush.msra.mxu0 0.0
  %1497 = vmatpush.msra.mxu0 0.0
  %1498 = vmatpush.msra.mxu0 0.0
  %1499 = vmatpush.msra.mxu0 0.0
  %1500 = vmatpush.msra.mxu0 0.0
  %1501 = vmatpush.msra.mxu0 0.0
  %1502 = vmatpush.msra.mxu0 0.0
  %1503 = vmatpush.msra.mxu0 0.0
  %1504 = vmatpush.msra.mxu0 %v615
  %1505 = vmatpush.msra.mxu0 %v612
  %1506 = vmatpush.msra.mxu0 %v609
  %1507 = vmatpush.msra.mxu0 %v606
  %1508 = vmatmul.f32.gmra.mxu0 %v1470
  %v1509 = vpop.f32.mrf.mxu0
  %v1510 = vadd.f32 %v277, %v1509
  %1511 = vdwg.mxu0
  %1512 = vmatpush.msra.mxu0 0.0
  %1513 = vmatpush.msra.mxu0 0.0
  %1514 = vmatpush.msra.mxu0 0.0
  %1515 = vmatpush.msra.mxu0 0.0
  %1516 = vmatpush.msra.mxu0 0.0
  %1517 = vmatpush.msra.mxu0 0.0
  %1518 = vmatpush.msra.mxu0 0.0
  %1519 = vmatpush.msra.mxu0 0.0
  %1520 = vmatpush.msra.mxu0 0.0
  %1521 = vmatpush.msra.mxu0 0.0
  %1522 = vmatpush.msra.mxu0 0.0
  %1523 = vmatpush.msra.mxu0 0.0
  %1524 = vmatpush.msra.mxu0 %v616
  %1525 = vmatpush.msra.mxu0 %v613
  %1526 = vmatpush.msra.mxu0 %v610
  %1527 = vmatpush.msra.mxu0 %v607
  %1528 = vmatmul.f32.gmra.mxu0 %v1470
  %v1529 = vpop.f32.mrf.mxu0
  %v1530 = vadd.f32 %v278, %v1529
  %1531 = vdwg.mxu0
  %v1532 = vadd.f32 %v1427, %v1490
  %v1533 = vxor.u32 %v1532, 2147483648
  %v1534 = vmul.f32 %v1533, 1.442695
  %v1535 = vpow.pop %v1534
  %v1536 = vadd.f32 %v1535, 1.0
  %v1537 = vrcp.pop %v1536
  %v1538 = vmul.f32 %v1536, %v1537
  %v1539 = vsub.f32 1.0, %v1538
  %v1540 = vmul.f32 %v1537, %v1539
  %v1541 = vadd.f32 %v1537, %v1540
  %vm1542 = vweird.f32 %v1536
  %vm1543 = vweird.f32 %v1537
  %vm1544 = vmor %vm1542, %vm1543
  %v1545 = vsel %vm1544, %v1537, %v1541
  %v1546 = vand.u32 2147483647, %v1536
  %vm1547 = vcmp.eq.f32.partialorder %v1546, 8.507059e+37
  %v1548 = vand.u32 %v1536, 2147483648
  %v1549 = vor.u32 1.1754944e-38, %v1548
  %v1550 = vsel %vm1547, %v1549, %v1545
  %v1551 = vmul.f32 1.0, %v1550
  %v1552 = vadd.f32 %v1447, %v1510
  %v1553 = vxor.u32 %v1552, 2147483648
  %v1554 = vmul.f32 %v1553, 1.442695
  %v1555 = vpow.pop %v1554
  %v1556 = vadd.f32 %v1555, 1.0
  %v1557 = vrcp.pop %v1556
  %v1558 = vmul.f32 %v1556, %v1557
  %v1559 = vsub.f32 1.0, %v1558
  %v1560 = vmul.f32 %v1557, %v1559
  %v1561 = vadd.f32 %v1557, %v1560
  %vm1562 = vweird.f32 %v1556
  %vm1563 = vweird.f32 %v1557
  %vm1564 = vmor %vm1562, %vm1563
  %v1565 = vsel %vm1564, %v1557, %v1561
  %v1566 = vand.u32 2147483647, %v1556
  %vm1567 = vcmp.eq.f32.partialorder %v1566, 8.507059e+37
  %v1568 = vand.u32 %v1556, 2147483648
  %v1569 = vor.u32 1.1754944e-38, %v1568
  %v1570 = vsel %vm1567, %v1569, %v1565
  %v1571 = vmul.f32 1.0, %v1570
  %v1572 = vmul.f32 %v1551, %v1530
  %v1573 = vadd.f32 %v1467, %v1572
  %v1574 = vtanh.pop %v1573
  %v1575 = vsub.f32 1.0, %v1571
  %v1576 = vmul.f32 %v1575, %v1574
  %v1577 = vmul.f32 %v1571, %v1294
  %v1578 = vadd.f32 %v1576, %v1577
  %s1579 = scalar_lea.vmem [#allocation2], 120
  %v1580 = vld [vmem:[%s1579] sm:$0xff]
  %v1581 = vld [vmem:[%s1579 + $0x8] sm:$0xff]
  %v1582 = vld [vmem:[%s1579 + $0x10] sm:$0xff]
  %v1584 = vsel %vm308, %v1408, 0
  %1586 = vmatpush.msra.mxu0 0.0
  %1587 = vmatpush.msra.mxu0 0.0
  %1588 = vmatpush.msra.mxu0 0.0
  %1589 = vmatpush.msra.mxu0 0.0
  %1590 = vmatpush.msra.mxu0 0.0
  %1591 = vmatpush.msra.mxu0 0.0
  %1592 = vmatpush.msra.mxu0 0.0
  %1593 = vmatpush.msra.mxu0 0.0
  %1594 = vmatpush.msra.mxu0 0.0
  %1595 = vmatpush.msra.mxu0 0.0
  %1596 = vmatpush.msra.mxu0 0.0
  %1597 = vmatpush.msra.mxu0 0.0
  %1598 = vmatpush.msra.mxu0 %v305
  %1599 = vmatpush.msra.mxu0 %v302
  %1600 = vmatpush.msra.mxu0 %v299
  %1601 = vmatpush.msra.mxu0 %v296
  %1602 = vmatmul.f32.gmra.mxu0 %v1584
  %v1603 = vpop.f32.mrf.mxu0
  %v1604 = vadd.f32 %v268, %v1603
  %1605 = vdwg.mxu0
  %1606 = vmatpush.msra.mxu0 0.0
  %1607 = vmatpush.msra.mxu0 0.0
  %1608 = vmatpush.msra.mxu0 0.0
  %1609 = vmatpush.msra.mxu0 0.0
  %1610 = vmatpush.msra.mxu0 0.0
  %1611 = vmatpush.msra.mxu0 0.0
  %1612 = vmatpush.msra.mxu0 0.0
  %1613 = vmatpush.msra.mxu0 0.0
  %1614 = vmatpush.msra.mxu0 0.0
  %1615 = vmatpush.msra.mxu0 0.0
  %1616 = vmatpush.msra.mxu0 0.0
  %1617 = vmatpush.msra.mxu0 0.0
  %1618 = vmatpush.msra.mxu0 %v306
  %1619 = vmatpush.msra.mxu0 %v303
  %1620 = vmatpush.msra.mxu0 %v300
  %1621 = vmatpush.msra.mxu0 %v297
  %1622 = vmatmul.f32.gmra.mxu0 %v1584
  %v1623 = vpop.f32.mrf.mxu0
  %v1624 = vadd.f32 %v269, %v1623
  %1625 = vdwg.mxu0
  %1626 = vmatpush.msra.mxu0 0.0
  %1627 = vmatpush.msra.mxu0 0.0
  %1628 = vmatpush.msra.mxu0 0.0
  %1629 = vmatpush.msra.mxu0 0.0
  %1630 = vmatpush.msra.mxu0 0.0
  %1631 = vmatpush.msra.mxu0 0.0
  %1632 = vmatpush.msra.mxu0 0.0
  %1633 = vmatpush.msra.mxu0 0.0
  %1634 = vmatpush.msra.mxu0 0.0
  %1635 = vmatpush.msra.mxu0 0.0
  %1636 = vmatpush.msra.mxu0 0.0
  %1637 = vmatpush.msra.mxu0 0.0
  %1638 = vmatpush.msra.mxu0 %v307
  %1639 = vmatpush.msra.mxu0 %v304
  %1640 = vmatpush.msra.mxu0 %v301
  %1641 = vmatpush.msra.mxu0 %v298
  %1642 = vmatmul.f32.gmra.mxu0 %v1584
  %v1643 = vpop.f32.mrf.mxu0
  %v1644 = vadd.f32 %v270, %v1643
  %1645 = vdwg.mxu0
  %v1646 = vadd.f32 %v1580, %v1604
  %v1647 = vxor.u32 %v1646, 2147483648
  %v1648 = vmul.f32 %v1647, 1.442695
  %v1649 = vpow.pop %v1648
  %v1650 = vadd.f32 %v1649, 1.0
  %v1651 = vrcp.pop %v1650
  %v1652 = vmul.f32 %v1650, %v1651
  %v1653 = vsub.f32 1.0, %v1652
  %v1654 = vmul.f32 %v1651, %v1653
  %v1655 = vadd.f32 %v1651, %v1654
  %vm1656 = vweird.f32 %v1650
  %vm1657 = vweird.f32 %v1651
  %vm1658 = vmor %vm1656, %vm1657
  %v1659 = vsel %vm1658, %v1651, %v1655
  %v1660 = vand.u32 2147483647, %v1650
  %vm1661 = vcmp.eq.f32.partialorder %v1660, 8.507059e+37
  %v1662 = vand.u32 %v1650, 2147483648
  %v1663 = vor.u32 1.1754944e-38, %v1662
  %v1664 = vsel %vm1661, %v1663, %v1659
  %v1665 = vmul.f32 1.0, %v1664
  %v1666 = vadd.f32 %v1581, %v1624
  %v1667 = vxor.u32 %v1666, 2147483648
  %v1668 = vmul.f32 %v1667, 1.442695
  %v1669 = vpow.pop %v1668
  %v1670 = vadd.f32 %v1669, 1.0
  %v1671 = vrcp.pop %v1670
  %v1672 = vmul.f32 %v1670, %v1671
  %v1673 = vsub.f32 1.0, %v1672
  %v1674 = vmul.f32 %v1671, %v1673
  %v1675 = vadd.f32 %v1671, %v1674
  %vm1676 = vweird.f32 %v1670
  %vm1677 = vweird.f32 %v1671
  %vm1678 = vmor %vm1676, %vm1677
  %v1679 = vsel %vm1678, %v1671, %v1675
  %v1680 = vand.u32 2147483647, %v1670
  %vm1681 = vcmp.eq.f32.partialorder %v1680, 8.507059e+37
  %v1682 = vand.u32 %v1670, 2147483648
  %v1683 = vor.u32 1.1754944e-38, %v1682
  %v1684 = vsel %vm1681, %v1683, %v1679
  %v1685 = vmul.f32 1.0, %v1684
  %v1686 = vmul.f32 %v1665, %v1644
  %v1687 = vadd.f32 %v1582, %v1686
  %v1688 = vtanh.pop %v1687
  %v1689 = vsub.f32 1.0, %v1685
  %v1690 = vmul.f32 %v1689, %v1688
  %v1691 = vmul.f32 %v1685, %v1408
  %v1692 = vadd.f32 %v1690, %v1691
  %1693 = vmatpush.msra.mxu0 0.0
  %1694 = vmatpush.msra.mxu0 0.0
  %1695 = vmatpush.msra.mxu0 0.0
  %1696 = vmatpush.msra.mxu0 0.0
  %1697 = vmatpush.msra.mxu0 0.0
  %1698 = vmatpush.msra.mxu0 0.0
  %1699 = vmatpush.msra.mxu0 0.0
  %1700 = vmatpush.msra.mxu0 0.0
  %1701 = vmatpush.msra.mxu0 0.0
  %1702 = vmatpush.msra.mxu0 0.0
  %1703 = vmatpush.msra.mxu0 0.0
  %1704 = vmatpush.msra.mxu0 0.0
  %1705 = vmatpush.msra.mxu0 %v542
  %1706 = vmatpush.msra.mxu0 %v539
  %1707 = vmatpush.msra.mxu0 %v536
  %1708 = vmatpush.msra.mxu0 %v533
  %1709 = vmatmul.f32.gmra.mxu0 %v1584
  %v1710 = vpop.f32.mrf.mxu0
  %v1711 = vadd.f32 %v284, %v1710
  %1712 = vdwg.mxu0
  %1713 = vmatpush.msra.mxu0 0.0
  %1714 = vmatpush.msra.mxu0 0.0
  %1715 = vmatpush.msra.mxu0 0.0
  %1716 = vmatpush.msra.mxu0 0.0
  %1717 = vmatpush.msra.mxu0 0.0
  %1718 = vmatpush.msra.mxu0 0.0
  %1719 = vmatpush.msra.mxu0 0.0
  %1720 = vmatpush.msra.mxu0 0.0
  %1721 = vmatpush.msra.mxu0 0.0
  %1722 = vmatpush.msra.mxu0 0.0
  %1723 = vmatpush.msra.mxu0 0.0
  %1724 = vmatpush.msra.mxu0 0.0
  %1725 = vmatpush.msra.mxu0 %v543
  %1726 = vmatpush.msra.mxu0 %v540
  %1727 = vmatpush.msra.mxu0 %v537
  %1728 = vmatpush.msra.mxu0 %v534
  %1729 = vmatmul.f32.gmra.mxu0 %v1584
  %v1730 = vpop.f32.mrf.mxu0
  %v1731 = vadd.f32 %v285, %v1730
  %1732 = vdwg.mxu0
  %1733 = vmatpush.msra.mxu0 0.0
  %1734 = vmatpush.msra.mxu0 0.0
  %1735 = vmatpush.msra.mxu0 0.0
  %1736 = vmatpush.msra.mxu0 0.0
  %1737 = vmatpush.msra.mxu0 0.0
  %1738 = vmatpush.msra.mxu0 0.0
  %1739 = vmatpush.msra.mxu0 0.0
  %1740 = vmatpush.msra.mxu0 0.0
  %1741 = vmatpush.msra.mxu0 0.0
  %1742 = vmatpush.msra.mxu0 0.0
  %1743 = vmatpush.msra.mxu0 0.0
  %1744 = vmatpush.msra.mxu0 0.0
  %1745 = vmatpush.msra.mxu0 %v544
  %1746 = vmatpush.msra.mxu0 %v541
  %1747 = vmatpush.msra.mxu0 %v538
  %1748 = vmatpush.msra.mxu0 %v535
  %1749 = vmatmul.f32.gmra.mxu0 %v1584
  %v1750 = vpop.f32.mrf.mxu0
  %v1751 = vadd.f32 %v286, %v1750
  %1752 = vdwg.mxu0
  %v1754 = vsel %vm308, %v1578, 0
  %1756 = vmatpush.msra.mxu0 0.0
  %1757 = vmatpush.msra.mxu0 0.0
  %1758 = vmatpush.msra.mxu0 0.0
  %1759 = vmatpush.msra.mxu0 0.0
  %1760 = vmatpush.msra.mxu0 0.0
  %1761 = vmatpush.msra.mxu0 0.0
  %1762 = vmatpush.msra.mxu0 0.0
  %1763 = vmatpush.msra.mxu0 0.0
  %1764 = vmatpush.msra.mxu0 0.0
  %1765 = vmatpush.msra.mxu0 0.0
  %1766 = vmatpush.msra.mxu0 0.0
  %1767 = vmatpush.msra.mxu0 0.0
  %1768 = vmatpush.msra.mxu0 %v614
  %1769 = vmatpush.msra.mxu0 %v611
  %1770 = vmatpush.msra.mxu0 %v608
  %1771 = vmatpush.msra.mxu0 %v605
  %1772 = vmatmul.f32.gmra.mxu0 %v1754
  %v1773 = vpop.f32.mrf.mxu0
  %v1774 = vadd.f32 %v276, %v1773
  %1775 = vdwg.mxu0
  %1776 = vmatpush.msra.mxu0 0.0
  %1777 = vmatpush.msra.mxu0 0.0
  %1778 = vmatpush.msra.mxu0 0.0
  %1779 = vmatpush.msra.mxu0 0.0
  %1780 = vmatpush.msra.mxu0 0.0
  %1781 = vmatpush.msra.mxu0 0.0
  %1782 = vmatpush.msra.mxu0 0.0
  %1783 = vmatpush.msra.mxu0 0.0
  %1784 = vmatpush.msra.mxu0 0.0
  %1785 = vmatpush.msra.mxu0 0.0
  %1786 = vmatpush.msra.mxu0 0.0
  %1787 = vmatpush.msra.mxu0 0.0
  %1788 = vmatpush.msra.mxu0 %v615
  %1789 = vmatpush.msra.mxu0 %v612
  %1790 = vmatpush.msra.mxu0 %v609
  %1791 = vmatpush.msra.mxu0 %v606
  %1792 = vmatmul.f32.gmra.mxu0 %v1754
  %v1793 = vpop.f32.mrf.mxu0
  %v1794 = vadd.f32 %v277, %v1793
  %1795 = vdwg.mxu0
  %1796 = vmatpush.msra.mxu0 0.0
  %1797 = vmatpush.msra.mxu0 0.0
  %1798 = vmatpush.msra.mxu0 0.0
  %1799 = vmatpush.msra.mxu0 0.0
  %1800 = vmatpush.msra.mxu0 0.0
  %1801 = vmatpush.msra.mxu0 0.0
  %1802 = vmatpush.msra.mxu0 0.0
  %1803 = vmatpush.msra.mxu0 0.0
  %1804 = vmatpush.msra.mxu0 0.0
  %1805 = vmatpush.msra.mxu0 0.0
  %1806 = vmatpush.msra.mxu0 0.0
  %1807 = vmatpush.msra.mxu0 0.0
  %1808 = vmatpush.msra.mxu0 %v616
  %1809 = vmatpush.msra.mxu0 %v613
  %1810 = vmatpush.msra.mxu0 %v610
  %1811 = vmatpush.msra.mxu0 %v607
  %1812 = vmatmul.f32.gmra.mxu0 %v1754
  %v1813 = vpop.f32.mrf.mxu0
  %v1814 = vadd.f32 %v278, %v1813
  %1815 = vdwg.mxu0
  %v1816 = vadd.f32 %v1711, %v1774
  %v1817 = vxor.u32 %v1816, 2147483648
  %v1818 = vmul.f32 %v1817, 1.442695
  %v1819 = vpow.pop %v1818
  %v1820 = vadd.f32 %v1819, 1.0
  %v1821 = vrcp.pop %v1820
  %v1822 = vmul.f32 %v1820, %v1821
  %v1823 = vsub.f32 1.0, %v1822
  %v1824 = vmul.f32 %v1821, %v1823
  %v1825 = vadd.f32 %v1821, %v1824
  %vm1826 = vweird.f32 %v1820
  %vm1827 = vweird.f32 %v1821
  %vm1828 = vmor %vm1826, %vm1827
  %v1829 = vsel %vm1828, %v1821, %v1825
  %v1830 = vand.u32 2147483647, %v1820
  %vm1831 = vcmp.eq.f32.partialorder %v1830, 8.507059e+37
  %v1832 = vand.u32 %v1820, 2147483648
  %v1833 = vor.u32 1.1754944e-38, %v1832
  %v1834 = vsel %vm1831, %v1833, %v1829
  %v1835 = vmul.f32 1.0, %v1834
  %v1836 = vadd.f32 %v1731, %v1794
  %v1837 = vxor.u32 %v1836, 2147483648
  %v1838 = vmul.f32 %v1837, 1.442695
  %v1839 = vpow.pop %v1838
  %v1840 = vadd.f32 %v1839, 1.0
  %v1841 = vrcp.pop %v1840
  %v1842 = vmul.f32 %v1840, %v1841
  %v1843 = vsub.f32 1.0, %v1842
  %v1844 = vmul.f32 %v1841, %v1843
  %v1845 = vadd.f32 %v1841, %v1844
  %vm1846 = vweird.f32 %v1840
  %vm1847 = vweird.f32 %v1841
  %vm1848 = vmor %vm1846, %vm1847
  %v1849 = vsel %vm1848, %v1841, %v1845
  %v1850 = vand.u32 2147483647, %v1840
  %vm1851 = vcmp.eq.f32.partialorder %v1850, 8.507059e+37
  %v1852 = vand.u32 %v1840, 2147483648
  %v1853 = vor.u32 1.1754944e-38, %v1852
  %v1854 = vsel %vm1851, %v1853, %v1849
  %v1855 = vmul.f32 1.0, %v1854
  %v1856 = vmul.f32 %v1835, %v1814
  %v1857 = vadd.f32 %v1751, %v1856
  %v1858 = vtanh.pop %v1857
  %v1859 = vsub.f32 1.0, %v1855
  %v1860 = vmul.f32 %v1859, %v1858
  %v1861 = vmul.f32 %v1855, %v1578
  %v1862 = vadd.f32 %v1860, %v1861
  %s1863 = scalar_lea.vmem [#allocation2], 144
  %v1864 = vld [vmem:[%s1863] sm:$0xff]
  %v1865 = vld [vmem:[%s1863 + $0x8] sm:$0xff]
  %v1866 = vld [vmem:[%s1863 + $0x10] sm:$0xff]
  %v1868 = vsel %vm308, %v1692, 0
  %1870 = vmatpush.msra.mxu0 0.0
  %1871 = vmatpush.msra.mxu0 0.0
  %1872 = vmatpush.msra.mxu0 0.0
  %1873 = vmatpush.msra.mxu0 0.0
  %1874 = vmatpush.msra.mxu0 0.0
  %1875 = vmatpush.msra.mxu0 0.0
  %1876 = vmatpush.msra.mxu0 0.0
  %1877 = vmatpush.msra.mxu0 0.0
  %1878 = vmatpush.msra.mxu0 0.0
  %1879 = vmatpush.msra.mxu0 0.0
  %1880 = vmatpush.msra.mxu0 0.0
  %1881 = vmatpush.msra.mxu0 0.0
  %1882 = vmatpush.msra.mxu0 %v305
  %1883 = vmatpush.msra.mxu0 %v302
  %1884 = vmatpush.msra.mxu0 %v299
  %1885 = vmatpush.msra.mxu0 %v296
  %1886 = vmatmul.f32.gmra.mxu0 %v1868
  %v1887 = vpop.f32.mrf.mxu0
  %v1888 = vadd.f32 %v268, %v1887
  %1889 = vdwg.mxu0
  %1890 = vmatpush.msra.mxu0 0.0
  %1891 = vmatpush.msra.mxu0 0.0
  %1892 = vmatpush.msra.mxu0 0.0
  %1893 = vmatpush.msra.mxu0 0.0
  %1894 = vmatpush.msra.mxu0 0.0
  %1895 = vmatpush.msra.mxu0 0.0
  %1896 = vmatpush.msra.mxu0 0.0
  %1897 = vmatpush.msra.mxu0 0.0
  %1898 = vmatpush.msra.mxu0 0.0
  %1899 = vmatpush.msra.mxu0 0.0
  %1900 = vmatpush.msra.mxu0 0.0
  %1901 = vmatpush.msra.mxu0 0.0
  %1902 = vmatpush.msra.mxu0 %v306
  %1903 = vmatpush.msra.mxu0 %v303
  %1904 = vmatpush.msra.mxu0 %v300
  %1905 = vmatpush.msra.mxu0 %v297
  %1906 = vmatmul.f32.gmra.mxu0 %v1868
  %v1907 = vpop.f32.mrf.mxu0
  %v1908 = vadd.f32 %v269, %v1907
  %1909 = vdwg.mxu0
  %1910 = vmatpush.msra.mxu0 0.0
  %1911 = vmatpush.msra.mxu0 0.0
  %1912 = vmatpush.msra.mxu0 0.0
  %1913 = vmatpush.msra.mxu0 0.0
  %1914 = vmatpush.msra.mxu0 0.0
  %1915 = vmatpush.msra.mxu0 0.0
  %1916 = vmatpush.msra.mxu0 0.0
  %1917 = vmatpush.msra.mxu0 0.0
  %1918 = vmatpush.msra.mxu0 0.0
  %1919 = vmatpush.msra.mxu0 0.0
  %1920 = vmatpush.msra.mxu0 0.0
  %1921 = vmatpush.msra.mxu0 0.0
  %1922 = vmatpush.msra.mxu0 %v307
  %1923 = vmatpush.msra.mxu0 %v304
  %1924 = vmatpush.msra.mxu0 %v301
  %1925 = vmatpush.msra.mxu0 %v298
  %1926 = vmatmul.f32.gmra.mxu0 %v1868
  %v1927 = vpop.f32.mrf.mxu0
  %v1928 = vadd.f32 %v270, %v1927
  %1929 = vdwg.mxu0
  %v1930 = vadd.f32 %v1864, %v1888
  %v1931 = vxor.u32 %v1930, 2147483648
  %v1932 = vmul.f32 %v1931, 1.442695
  %v1933 = vpow.pop %v1932
  %v1934 = vadd.f32 %v1933, 1.0
  %v1935 = vrcp.pop %v1934
  %v1936 = vmul.f32 %v1934, %v1935
  %v1937 = vsub.f32 1.0, %v1936
  %v1938 = vmul.f32 %v1935, %v1937
  %v1939 = vadd.f32 %v1935, %v1938
  %vm1940 = vweird.f32 %v1934
  %vm1941 = vweird.f32 %v1935
  %vm1942 = vmor %vm1940, %vm1941
  %v1943 = vsel %vm1942, %v1935, %v1939
  %v1944 = vand.u32 2147483647, %v1934
  %vm1945 = vcmp.eq.f32.partialorder %v1944, 8.507059e+37
  %v1946 = vand.u32 %v1934, 2147483648
  %v1947 = vor.u32 1.1754944e-38, %v1946
  %v1948 = vsel %vm1945, %v1947, %v1943
  %v1949 = vmul.f32 1.0, %v1948
  %v1950 = vadd.f32 %v1865, %v1908
  %v1951 = vxor.u32 %v1950, 2147483648
  %v1952 = vmul.f32 %v1951, 1.442695
  %v1953 = vpow.pop %v1952
  %v1954 = vadd.f32 %v1953, 1.0
  %v1955 = vrcp.pop %v1954
  %v1956 = vmul.f32 %v1954, %v1955
  %v1957 = vsub.f32 1.0, %v1956
  %v1958 = vmul.f32 %v1955, %v1957
  %v1959 = vadd.f32 %v1955, %v1958
  %vm1960 = vweird.f32 %v1954
  %vm1961 = vweird.f32 %v1955
  %vm1962 = vmor %vm1960, %vm1961
  %v1963 = vsel %vm1962, %v1955, %v1959
  %v1964 = vand.u32 2147483647, %v1954
  %vm1965 = vcmp.eq.f32.partialorder %v1964, 8.507059e+37
  %v1966 = vand.u32 %v1954, 2147483648
  %v1967 = vor.u32 1.1754944e-38, %v1966
  %v1968 = vsel %vm1965, %v1967, %v1963
  %v1969 = vmul.f32 1.0, %v1968
  %v1970 = vmul.f32 %v1949, %v1928
  %v1971 = vadd.f32 %v1866, %v1970
  %v1972 = vtanh.pop %v1971
  %v1973 = vsub.f32 1.0, %v1969
  %v1974 = vmul.f32 %v1973, %v1972
  %v1975 = vmul.f32 %v1969, %v1692
  %v1976 = vadd.f32 %v1974, %v1975
  %1977 = vmatpush.msra.mxu0 0.0
  %1978 = vmatpush.msra.mxu0 0.0
  %1979 = vmatpush.msra.mxu0 0.0
  %1980 = vmatpush.msra.mxu0 0.0
  %1981 = vmatpush.msra.mxu0 0.0
  %1982 = vmatpush.msra.mxu0 0.0
  %1983 = vmatpush.msra.mxu0 0.0
  %1984 = vmatpush.msra.mxu0 0.0
  %1985 = vmatpush.msra.mxu0 0.0
  %1986 = vmatpush.msra.mxu0 0.0
  %1987 = vmatpush.msra.mxu0 0.0
  %1988 = vmatpush.msra.mxu0 0.0
  %1989 = vmatpush.msra.mxu0 %v542
  %1990 = vmatpush.msra.mxu0 %v539
  %1991 = vmatpush.msra.mxu0 %v536
  %1992 = vmatpush.msra.mxu0 %v533
  %1993 = vmatmul.f32.gmra.mxu0 %v1868
  %v1994 = vpop.f32.mrf.mxu0
  %v1995 = vadd.f32 %v284, %v1994
  %1996 = vdwg.mxu0
  %1997 = vmatpush.msra.mxu0 0.0
  %1998 = vmatpush.msra.mxu0 0.0
  %1999 = vmatpush.msra.mxu0 0.0
  %2000 = vmatpush.msra.mxu0 0.0
  %2001 = vmatpush.msra.mxu0 0.0
  %2002 = vmatpush.msra.mxu0 0.0
  %2003 = vmatpush.msra.mxu0 0.0
  %2004 = vmatpush.msra.mxu0 0.0
  %2005 = vmatpush.msra.mxu0 0.0
  %2006 = vmatpush.msra.mxu0 0.0
  %2007 = vmatpush.msra.mxu0 0.0
  %2008 = vmatpush.msra.mxu0 0.0
  %2009 = vmatpush.msra.mxu0 %v543
  %2010 = vmatpush.msra.mxu0 %v540
  %2011 = vmatpush.msra.mxu0 %v537
  %2012 = vmatpush.msra.mxu0 %v534
  %2013 = vmatmul.f32.gmra.mxu0 %v1868
  %v2014 = vpop.f32.mrf.mxu0
  %v2015 = vadd.f32 %v285, %v2014
  %2016 = vdwg.mxu0
  %2017 = vmatpush.msra.mxu0 0.0
  %2018 = vmatpush.msra.mxu0 0.0
  %2019 = vmatpush.msra.mxu0 0.0
  %2020 = vmatpush.msra.mxu0 0.0
  %2021 = vmatpush.msra.mxu0 0.0
  %2022 = vmatpush.msra.mxu0 0.0
  %2023 = vmatpush.msra.mxu0 0.0
  %2024 = vmatpush.msra.mxu0 0.0
  %2025 = vmatpush.msra.mxu0 0.0
  %2026 = vmatpush.msra.mxu0 0.0
  %2027 = vmatpush.msra.mxu0 0.0
  %2028 = vmatpush.msra.mxu0 0.0
  %2029 = vmatpush.msra.mxu0 %v544
  %2030 = vmatpush.msra.mxu0 %v541
  %2031 = vmatpush.msra.mxu0 %v538
  %2032 = vmatpush.msra.mxu0 %v535
  %2033 = vmatmul.f32.gmra.mxu0 %v1868
  %v2034 = vpop.f32.mrf.mxu0
  %v2035 = vadd.f32 %v286, %v2034
  %2036 = vdwg.mxu0
  %v2038 = vsel %vm308, %v1862, 0
  %2040 = vmatpush.msra.mxu0 0.0
  %2041 = vmatpush.msra.mxu0 0.0
  %2042 = vmatpush.msra.mxu0 0.0
  %2043 = vmatpush.msra.mxu0 0.0
  %2044 = vmatpush.msra.mxu0 0.0
  %2045 = vmatpush.msra.mxu0 0.0
  %2046 = vmatpush.msra.mxu0 0.0
  %2047 = vmatpush.msra.mxu0 0.0
  %2048 = vmatpush.msra.mxu0 0.0
  %2049 = vmatpush.msra.mxu0 0.0
  %2050 = vmatpush.msra.mxu0 0.0
  %2051 = vmatpush.msra.mxu0 0.0
  %2052 = vmatpush.msra.mxu0 %v614
  %2053 = vmatpush.msra.mxu0 %v611
  %2054 = vmatpush.msra.mxu0 %v608
  %2055 = vmatpush.msra.mxu0 %v605
  %2056 = vmatmul.f32.gmra.mxu0 %v2038
  %v2057 = vpop.f32.mrf.mxu0
  %v2058 = vadd.f32 %v276, %v2057
  %2059 = vdwg.mxu0
  %2060 = vmatpush.msra.mxu0 0.0
  %2061 = vmatpush.msra.mxu0 0.0
  %2062 = vmatpush.msra.mxu0 0.0
  %2063 = vmatpush.msra.mxu0 0.0
  %2064 = vmatpush.msra.mxu0 0.0
  %2065 = vmatpush.msra.mxu0 0.0
  %2066 = vmatpush.msra.mxu0 0.0
  %2067 = vmatpush.msra.mxu0 0.0
  %2068 = vmatpush.msra.mxu0 0.0
  %2069 = vmatpush.msra.mxu0 0.0
  %2070 = vmatpush.msra.mxu0 0.0
  %2071 = vmatpush.msra.mxu0 0.0
  %2072 = vmatpush.msra.mxu0 %v615
  %2073 = vmatpush.msra.mxu0 %v612
  %2074 = vmatpush.msra.mxu0 %v609
  %2075 = vmatpush.msra.mxu0 %v606
  %2076 = vmatmul.f32.gmra.mxu0 %v2038
  %v2077 = vpop.f32.mrf.mxu0
  %v2078 = vadd.f32 %v277, %v2077
  %2079 = vdwg.mxu0
  %2080 = vmatpush.msra.mxu0 0.0
  %2081 = vmatpush.msra.mxu0 0.0
  %2082 = vmatpush.msra.mxu0 0.0
  %2083 = vmatpush.msra.mxu0 0.0
  %2084 = vmatpush.msra.mxu0 0.0
  %2085 = vmatpush.msra.mxu0 0.0
  %2086 = vmatpush.msra.mxu0 0.0
  %2087 = vmatpush.msra.mxu0 0.0
  %2088 = vmatpush.msra.mxu0 0.0
  %2089 = vmatpush.msra.mxu0 0.0
  %2090 = vmatpush.msra.mxu0 0.0
  %2091 = vmatpush.msra.mxu0 0.0
  %2092 = vmatpush.msra.mxu0 %v616
  %2093 = vmatpush.msra.mxu0 %v613
  %2094 = vmatpush.msra.mxu0 %v610
  %2095 = vmatpush.msra.mxu0 %v607
  %2096 = vmatmul.f32.gmra.mxu0 %v2038
  %v2097 = vpop.f32.mrf.mxu0
  %v2098 = vadd.f32 %v278, %v2097
  %2099 = vdwg.mxu0
  %v2100 = vadd.f32 %v1995, %v2058
  %v2101 = vxor.u32 %v2100, 2147483648
  %v2102 = vmul.f32 %v2101, 1.442695
  %v2103 = vpow.pop %v2102
  %v2104 = vadd.f32 %v2103, 1.0
  %v2105 = vrcp.pop %v2104
  %v2106 = vmul.f32 %v2104, %v2105
  %v2107 = vsub.f32 1.0, %v2106
  %v2108 = vmul.f32 %v2105, %v2107
  %v2109 = vadd.f32 %v2105, %v2108
  %vm2110 = vweird.f32 %v2104
  %vm2111 = vweird.f32 %v2105
  %vm2112 = vmor %vm2110, %vm2111
  %v2113 = vsel %vm2112, %v2105, %v2109
  %v2114 = vand.u32 2147483647, %v2104
  %vm2115 = vcmp.eq.f32.partialorder %v2114, 8.507059e+37
  %v2116 = vand.u32 %v2104, 2147483648
  %v2117 = vor.u32 1.1754944e-38, %v2116
  %v2118 = vsel %vm2115, %v2117, %v2113
  %v2119 = vmul.f32 1.0, %v2118
  %v2120 = vadd.f32 %v2015, %v2078
  %v2121 = vxor.u32 %v2120, 2147483648
  %v2122 = vmul.f32 %v2121, 1.442695
  %v2123 = vpow.pop %v2122
  %v2124 = vadd.f32 %v2123, 1.0
  %v2125 = vrcp.pop %v2124
  %v2126 = vmul.f32 %v2124, %v2125
  %v2127 = vsub.f32 1.0, %v2126
  %v2128 = vmul.f32 %v2125, %v2127
  %v2129 = vadd.f32 %v2125, %v2128
  %vm2130 = vweird.f32 %v2124
  %vm2131 = vweird.f32 %v2125
  %vm2132 = vmor %vm2130, %vm2131
  %v2133 = vsel %vm2132, %v2125, %v2129
  %v2134 = vand.u32 2147483647, %v2124
  %vm2135 = vcmp.eq.f32.partialorder %v2134, 8.507059e+37
  %v2136 = vand.u32 %v2124, 2147483648
  %v2137 = vor.u32 1.1754944e-38, %v2136
  %v2138 = vsel %vm2135, %v2137, %v2133
  %v2139 = vmul.f32 1.0, %v2138
  %v2140 = vmul.f32 %v2119, %v2098
  %v2141 = vadd.f32 %v2035, %v2140
  %v2142 = vtanh.pop %v2141
  %v2143 = vsub.f32 1.0, %v2139
  %v2144 = vmul.f32 %v2143, %v2142
  %v2145 = vmul.f32 %v2139, %v1862
  %v2146 = vadd.f32 %v2144, %v2145
  %s2147 = scalar_lea.vmem [#allocation2], 168
  %v2148 = vld [vmem:[%s2147] sm:$0xff]
  %v2149 = vld [vmem:[%s2147 + $0x8] sm:$0xff]
  %v2150 = vld [vmem:[%s2147 + $0x10] sm:$0xff]
  %v2152 = vsel %vm308, %v1976, 0
  %2154 = vmatpush.msra.mxu0 0.0
  %2155 = vmatpush.msra.mxu0 0.0
  %2156 = vmatpush.msra.mxu0 0.0
  %2157 = vmatpush.msra.mxu0 0.0
  %2158 = vmatpush.msra.mxu0 0.0
  %2159 = vmatpush.msra.mxu0 0.0
  %2160 = vmatpush.msra.mxu0 0.0
  %2161 = vmatpush.msra.mxu0 0.0
  %2162 = vmatpush.msra.mxu0 0.0
  %2163 = vmatpush.msra.mxu0 0.0
  %2164 = vmatpush.msra.mxu0 0.0
  %2165 = vmatpush.msra.mxu0 0.0
  %2166 = vmatpush.msra.mxu0 %v305
  %2167 = vmatpush.msra.mxu0 %v302
  %2168 = vmatpush.msra.mxu0 %v299
  %2169 = vmatpush.msra.mxu0 %v296
  %2170 = vmatmul.f32.gmra.mxu0 %v2152
  %v2171 = vpop.f32.mrf.mxu0
  %v2172 = vadd.f32 %v268, %v2171
  %2173 = vdwg.mxu0
  %2174 = vmatpush.msra.mxu0 0.0
  %2175 = vmatpush.msra.mxu0 0.0
  %2176 = vmatpush.msra.mxu0 0.0
  %2177 = vmatpush.msra.mxu0 0.0
  %2178 = vmatpush.msra.mxu0 0.0
  %2179 = vmatpush.msra.mxu0 0.0
  %2180 = vmatpush.msra.mxu0 0.0
  %2181 = vmatpush.msra.mxu0 0.0
  %2182 = vmatpush.msra.mxu0 0.0
  %2183 = vmatpush.msra.mxu0 0.0
  %2184 = vmatpush.msra.mxu0 0.0
  %2185 = vmatpush.msra.mxu0 0.0
  %2186 = vmatpush.msra.mxu0 %v306
  %2187 = vmatpush.msra.mxu0 %v303
  %2188 = vmatpush.msra.mxu0 %v300
  %2189 = vmatpush.msra.mxu0 %v297
  %2190 = vmatmul.f32.gmra.mxu0 %v2152
  %v2191 = vpop.f32.mrf.mxu0
  %v2192 = vadd.f32 %v269, %v2191
  %2193 = vdwg.mxu0
  %2194 = vmatpush.msra.mxu0 0.0
  %2195 = vmatpush.msra.mxu0 0.0
  %2196 = vmatpush.msra.mxu0 0.0
  %2197 = vmatpush.msra.mxu0 0.0
  %2198 = vmatpush.msra.mxu0 0.0
  %2199 = vmatpush.msra.mxu0 0.0
  %2200 = vmatpush.msra.mxu0 0.0
  %2201 = vmatpush.msra.mxu0 0.0
  %2202 = vmatpush.msra.mxu0 0.0
  %2203 = vmatpush.msra.mxu0 0.0
  %2204 = vmatpush.msra.mxu0 0.0
  %2205 = vmatpush.msra.mxu0 0.0
  %2206 = vmatpush.msra.mxu0 %v307
  %2207 = vmatpush.msra.mxu0 %v304
  %2208 = vmatpush.msra.mxu0 %v301
  %2209 = vmatpush.msra.mxu0 %v298
  %2210 = vmatmul.f32.gmra.mxu0 %v2152
  %v2211 = vpop.f32.mrf.mxu0
  %v2212 = vadd.f32 %v270, %v2211
  %2213 = vdwg.mxu0
  %v2214 = vadd.f32 %v2148, %v2172
  %v2215 = vxor.u32 %v2214, 2147483648
  %v2216 = vmul.f32 %v2215, 1.442695
  %v2217 = vpow.pop %v2216
  %v2218 = vadd.f32 %v2217, 1.0
  %v2219 = vrcp.pop %v2218
  %v2220 = vmul.f32 %v2218, %v2219
  %v2221 = vsub.f32 1.0, %v2220
  %v2222 = vmul.f32 %v2219, %v2221
  %v2223 = vadd.f32 %v2219, %v2222
  %vm2224 = vweird.f32 %v2218
  %vm2225 = vweird.f32 %v2219
  %vm2226 = vmor %vm2224, %vm2225
  %v2227 = vsel %vm2226, %v2219, %v2223
  %v2228 = vand.u32 2147483647, %v2218
  %vm2229 = vcmp.eq.f32.partialorder %v2228, 8.507059e+37
  %v2230 = vand.u32 %v2218, 2147483648
  %v2231 = vor.u32 1.1754944e-38, %v2230
  %v2232 = vsel %vm2229, %v2231, %v2227
  %v2233 = vmul.f32 1.0, %v2232
  %v2234 = vadd.f32 %v2149, %v2192
  %v2235 = vxor.u32 %v2234, 2147483648
  %v2236 = vmul.f32 %v2235, 1.442695
  %v2237 = vpow.pop %v2236
  %v2238 = vadd.f32 %v2237, 1.0
  %v2239 = vrcp.pop %v2238
  %v2240 = vmul.f32 %v2238, %v2239
  %v2241 = vsub.f32 1.0, %v2240
  %v2242 = vmul.f32 %v2239, %v2241
  %v2243 = vadd.f32 %v2239, %v2242
  %vm2244 = vweird.f32 %v2238
  %vm2245 = vweird.f32 %v2239
  %vm2246 = vmor %vm2244, %vm2245
  %v2247 = vsel %vm2246, %v2239, %v2243
  %v2248 = vand.u32 2147483647, %v2238
  %vm2249 = vcmp.eq.f32.partialorder %v2248, 8.507059e+37
  %v2250 = vand.u32 %v2238, 2147483648
  %v2251 = vor.u32 1.1754944e-38, %v2250
  %v2252 = vsel %vm2249, %v2251, %v2247
  %v2253 = vmul.f32 1.0, %v2252
  %v2254 = vmul.f32 %v2233, %v2212
  %v2255 = vadd.f32 %v2150, %v2254
  %v2256 = vtanh.pop %v2255
  %v2257 = vsub.f32 1.0, %v2253
  %v2258 = vmul.f32 %v2257, %v2256
  %v2259 = vmul.f32 %v2253, %v1976
  %v2260 = vadd.f32 %v2258, %v2259
  %2261 = vmatpush.msra.mxu0 0.0
  %2262 = vmatpush.msra.mxu0 0.0
  %2263 = vmatpush.msra.mxu0 0.0
  %2264 = vmatpush.msra.mxu0 0.0
  %2265 = vmatpush.msra.mxu0 0.0
  %2266 = vmatpush.msra.mxu0 0.0
  %2267 = vmatpush.msra.mxu0 0.0
  %2268 = vmatpush.msra.mxu0 0.0
  %2269 = vmatpush.msra.mxu0 0.0
  %2270 = vmatpush.msra.mxu0 0.0
  %2271 = vmatpush.msra.mxu0 0.0
  %2272 = vmatpush.msra.mxu0 0.0
  %2273 = vmatpush.msra.mxu0 %v542
  %2274 = vmatpush.msra.mxu0 %v539
  %2275 = vmatpush.msra.mxu0 %v536
  %2276 = vmatpush.msra.mxu0 %v533
  %2277 = vmatmul.f32.gmra.mxu0 %v2152
  %v2278 = vpop.f32.mrf.mxu0
  %v2279 = vadd.f32 %v284, %v2278
  %2280 = vdwg.mxu0
  %2281 = vmatpush.msra.mxu0 0.0
  %2282 = vmatpush.msra.mxu0 0.0
  %2283 = vmatpush.msra.mxu0 0.0
  %2284 = vmatpush.msra.mxu0 0.0
  %2285 = vmatpush.msra.mxu0 0.0
  %2286 = vmatpush.msra.mxu0 0.0
  %2287 = vmatpush.msra.mxu0 0.0
  %2288 = vmatpush.msra.mxu0 0.0
  %2289 = vmatpush.msra.mxu0 0.0
  %2290 = vmatpush.msra.mxu0 0.0
  %2291 = vmatpush.msra.mxu0 0.0
  %2292 = vmatpush.msra.mxu0 0.0
  %2293 = vmatpush.msra.mxu0 %v543
  %2294 = vmatpush.msra.mxu0 %v540
  %2295 = vmatpush.msra.mxu0 %v537
  %2296 = vmatpush.msra.mxu0 %v534
  %2297 = vmatmul.f32.gmra.mxu0 %v2152
  %v2298 = vpop.f32.mrf.mxu0
  %v2299 = vadd.f32 %v285, %v2298
  %2300 = vdwg.mxu0
  %2301 = vmatpush.msra.mxu0 0.0
  %2302 = vmatpush.msra.mxu0 0.0
  %2303 = vmatpush.msra.mxu0 0.0
  %2304 = vmatpush.msra.mxu0 0.0
  %2305 = vmatpush.msra.mxu0 0.0
  %2306 = vmatpush.msra.mxu0 0.0
  %2307 = vmatpush.msra.mxu0 0.0
  %2308 = vmatpush.msra.mxu0 0.0
  %2309 = vmatpush.msra.mxu0 0.0
  %2310 = vmatpush.msra.mxu0 0.0
  %2311 = vmatpush.msra.mxu0 0.0
  %2312 = vmatpush.msra.mxu0 0.0
  %2313 = vmatpush.msra.mxu0 %v544
  %2314 = vmatpush.msra.mxu0 %v541
  %2315 = vmatpush.msra.mxu0 %v538
  %2316 = vmatpush.msra.mxu0 %v535
  %2317 = vmatmul.f32.gmra.mxu0 %v2152
  %v2318 = vpop.f32.mrf.mxu0
  %v2319 = vadd.f32 %v286, %v2318
  %2320 = vdwg.mxu0
  %v2322 = vsel %vm308, %v2146, 0
  %2324 = vmatpush.msra.mxu0 0.0
  %2325 = vmatpush.msra.mxu0 0.0
  %2326 = vmatpush.msra.mxu0 0.0
  %2327 = vmatpush.msra.mxu0 0.0
  %2328 = vmatpush.msra.mxu0 0.0
  %2329 = vmatpush.msra.mxu0 0.0
  %2330 = vmatpush.msra.mxu0 0.0
  %2331 = vmatpush.msra.mxu0 0.0
  %2332 = vmatpush.msra.mxu0 0.0
  %2333 = vmatpush.msra.mxu0 0.0
  %2334 = vmatpush.msra.mxu0 0.0
  %2335 = vmatpush.msra.mxu0 0.0
  %2336 = vmatpush.msra.mxu0 %v614
  %2337 = vmatpush.msra.mxu0 %v611
  %2338 = vmatpush.msra.mxu0 %v608
  %2339 = vmatpush.msra.mxu0 %v605
  %2340 = vmatmul.f32.gmra.mxu0 %v2322
  %v2341 = vpop.f32.mrf.mxu0
  %v2342 = vadd.f32 %v276, %v2341
  %2343 = vdwg.mxu0
  %2344 = vmatpush.msra.mxu0 0.0
  %2345 = vmatpush.msra.mxu0 0.0
  %2346 = vmatpush.msra.mxu0 0.0
  %2347 = vmatpush.msra.mxu0 0.0
  %2348 = vmatpush.msra.mxu0 0.0
  %2349 = vmatpush.msra.mxu0 0.0
  %2350 = vmatpush.msra.mxu0 0.0
  %2351 = vmatpush.msra.mxu0 0.0
  %2352 = vmatpush.msra.mxu0 0.0
  %2353 = vmatpush.msra.mxu0 0.0
  %2354 = vmatpush.msra.mxu0 0.0
  %2355 = vmatpush.msra.mxu0 0.0
  %2356 = vmatpush.msra.mxu0 %v615
  %2357 = vmatpush.msra.mxu0 %v612
  %2358 = vmatpush.msra.mxu0 %v609
  %2359 = vmatpush.msra.mxu0 %v606
  %2360 = vmatmul.f32.gmra.mxu0 %v2322
  %v2361 = vpop.f32.mrf.mxu0
  %v2362 = vadd.f32 %v277, %v2361
  %2363 = vdwg.mxu0
  %2364 = vmatpush.msra.mxu0 0.0
  %2365 = vmatpush.msra.mxu0 0.0
  %2366 = vmatpush.msra.mxu0 0.0
  %2367 = vmatpush.msra.mxu0 0.0
  %2368 = vmatpush.msra.mxu0 0.0
  %2369 = vmatpush.msra.mxu0 0.0
  %2370 = vmatpush.msra.mxu0 0.0
  %2371 = vmatpush.msra.mxu0 0.0
  %2372 = vmatpush.msra.mxu0 0.0
  %2373 = vmatpush.msra.mxu0 0.0
  %2374 = vmatpush.msra.mxu0 0.0
  %2375 = vmatpush.msra.mxu0 0.0
  %2376 = vmatpush.msra.mxu0 %v616
  %2377 = vmatpush.msra.mxu0 %v613
  %2378 = vmatpush.msra.mxu0 %v610
  %2379 = vmatpush.msra.mxu0 %v607
  %2380 = vmatmul.f32.gmra.mxu0 %v2322
  %v2381 = vpop.f32.mrf.mxu0
  %v2382 = vadd.f32 %v278, %v2381
  %2383 = vdwg.mxu0
  %v2384 = vadd.f32 %v2279, %v2342
  %v2385 = vxor.u32 %v2384, 2147483648
  %v2386 = vmul.f32 %v2385, 1.442695
  %v2387 = vpow.pop %v2386
  %v2388 = vadd.f32 %v2387, 1.0
  %v2389 = vrcp.pop %v2388
  %v2390 = vmul.f32 %v2388, %v2389
  %v2391 = vsub.f32 1.0, %v2390
  %v2392 = vmul.f32 %v2389, %v2391
  %v2393 = vadd.f32 %v2389, %v2392
  %vm2394 = vweird.f32 %v2388
  %vm2395 = vweird.f32 %v2389
  %vm2396 = vmor %vm2394, %vm2395
  %v2397 = vsel %vm2396, %v2389, %v2393
  %v2398 = vand.u32 2147483647, %v2388
  %vm2399 = vcmp.eq.f32.partialorder %v2398, 8.507059e+37
  %v2400 = vand.u32 %v2388, 2147483648
  %v2401 = vor.u32 1.1754944e-38, %v2400
  %v2402 = vsel %vm2399, %v2401, %v2397
  %v2403 = vmul.f32 1.0, %v2402
  %v2404 = vadd.f32 %v2299, %v2362
  %v2405 = vxor.u32 %v2404, 2147483648
  %v2406 = vmul.f32 %v2405, 1.442695
  %v2407 = vpow.pop %v2406
  %v2408 = vadd.f32 %v2407, 1.0
  %v2409 = vrcp.pop %v2408
  %v2410 = vmul.f32 %v2408, %v2409
  %v2411 = vsub.f32 1.0, %v2410
  %v2412 = vmul.f32 %v2409, %v2411
  %v2413 = vadd.f32 %v2409, %v2412
  %vm2414 = vweird.f32 %v2408
  %vm2415 = vweird.f32 %v2409
  %vm2416 = vmor %vm2414, %vm2415
  %v2417 = vsel %vm2416, %v2409, %v2413
  %v2418 = vand.u32 2147483647, %v2408
  %vm2419 = vcmp.eq.f32.partialorder %v2418, 8.507059e+37
  %v2420 = vand.u32 %v2408, 2147483648
  %v2421 = vor.u32 1.1754944e-38, %v2420
  %v2422 = vsel %vm2419, %v2421, %v2417
  %v2423 = vmul.f32 1.0, %v2422
  %v2424 = vmul.f32 %v2403, %v2382
  %v2425 = vadd.f32 %v2319, %v2424
  %v2426 = vtanh.pop %v2425
  %v2427 = vsub.f32 1.0, %v2423
  %v2428 = vmul.f32 %v2427, %v2426
  %v2429 = vmul.f32 %v2423, %v2146
  %v2430 = vadd.f32 %v2428, %v2429
  %s2431 = scalar_lea.vmem [#allocation2], 192
  %v2432 = vld [vmem:[%s2431] sm:$0xff]
  %v2433 = vld [vmem:[%s2431 + $0x8] sm:$0xff]
  %v2434 = vld [vmem:[%s2431 + $0x10] sm:$0xff]
  %v2436 = vsel %vm308, %v2260, 0
  %2438 = vmatpush.msra.mxu0 0.0
  %2439 = vmatpush.msra.mxu0 0.0
  %2440 = vmatpush.msra.mxu0 0.0
  %2441 = vmatpush.msra.mxu0 0.0
  %2442 = vmatpush.msra.mxu0 0.0
  %2443 = vmatpush.msra.mxu0 0.0
  %2444 = vmatpush.msra.mxu0 0.0
  %2445 = vmatpush.msra.mxu0 0.0
  %2446 = vmatpush.msra.mxu0 0.0
  %2447 = vmatpush.msra.mxu0 0.0
  %2448 = vmatpush.msra.mxu0 0.0
  %2449 = vmatpush.msra.mxu0 0.0
  %2450 = vmatpush.msra.mxu0 %v305
  %2451 = vmatpush.msra.mxu0 %v302
  %2452 = vmatpush.msra.mxu0 %v299
  %2453 = vmatpush.msra.mxu0 %v296
  %2454 = vmatmul.f32.gmra.mxu0 %v2436
  %v2455 = vpop.f32.mrf.mxu0
  %v2456 = vadd.f32 %v268, %v2455
  %2457 = vdwg.mxu0
  %2458 = vmatpush.msra.mxu0 0.0
  %2459 = vmatpush.msra.mxu0 0.0
  %2460 = vmatpush.msra.mxu0 0.0
  %2461 = vmatpush.msra.mxu0 0.0
  %2462 = vmatpush.msra.mxu0 0.0
  %2463 = vmatpush.msra.mxu0 0.0
  %2464 = vmatpush.msra.mxu0 0.0
  %2465 = vmatpush.msra.mxu0 0.0
  %2466 = vmatpush.msra.mxu0 0.0
  %2467 = vmatpush.msra.mxu0 0.0
  %2468 = vmatpush.msra.mxu0 0.0
  %2469 = vmatpush.msra.mxu0 0.0
  %2470 = vmatpush.msra.mxu0 %v306
  %2471 = vmatpush.msra.mxu0 %v303
  %2472 = vmatpush.msra.mxu0 %v300
  %2473 = vmatpush.msra.mxu0 %v297
  %2474 = vmatmul.f32.gmra.mxu0 %v2436
  %v2475 = vpop.f32.mrf.mxu0
  %v2476 = vadd.f32 %v269, %v2475
  %2477 = vdwg.mxu0
  %2478 = vmatpush.msra.mxu0 0.0
  %2479 = vmatpush.msra.mxu0 0.0
  %2480 = vmatpush.msra.mxu0 0.0
  %2481 = vmatpush.msra.mxu0 0.0
  %2482 = vmatpush.msra.mxu0 0.0
  %2483 = vmatpush.msra.mxu0 0.0
  %2484 = vmatpush.msra.mxu0 0.0
  %2485 = vmatpush.msra.mxu0 0.0
  %2486 = vmatpush.msra.mxu0 0.0
  %2487 = vmatpush.msra.mxu0 0.0
  %2488 = vmatpush.msra.mxu0 0.0
  %2489 = vmatpush.msra.mxu0 0.0
  %2490 = vmatpush.msra.mxu0 %v307
  %2491 = vmatpush.msra.mxu0 %v304
  %2492 = vmatpush.msra.mxu0 %v301
  %2493 = vmatpush.msra.mxu0 %v298
  %2494 = vmatmul.f32.gmra.mxu0 %v2436
  %v2495 = vpop.f32.mrf.mxu0
  %v2496 = vadd.f32 %v270, %v2495
  %2497 = vdwg.mxu0
  %v2498 = vadd.f32 %v2432, %v2456
  %v2499 = vxor.u32 %v2498, 2147483648
  %v2500 = vmul.f32 %v2499, 1.442695
  %v2501 = vpow.pop %v2500
  %v2502 = vadd.f32 %v2501, 1.0
  %v2503 = vrcp.pop %v2502
  %v2504 = vmul.f32 %v2502, %v2503
  %v2505 = vsub.f32 1.0, %v2504
  %v2506 = vmul.f32 %v2503, %v2505
  %v2507 = vadd.f32 %v2503, %v2506
  %vm2508 = vweird.f32 %v2502
  %vm2509 = vweird.f32 %v2503
  %vm2510 = vmor %vm2508, %vm2509
  %v2511 = vsel %vm2510, %v2503, %v2507
  %v2512 = vand.u32 2147483647, %v2502
  %vm2513 = vcmp.eq.f32.partialorder %v2512, 8.507059e+37
  %v2514 = vand.u32 %v2502, 2147483648
  %v2515 = vor.u32 1.1754944e-38, %v2514
  %v2516 = vsel %vm2513, %v2515, %v2511
  %v2517 = vmul.f32 1.0, %v2516
  %v2518 = vadd.f32 %v2433, %v2476
  %v2519 = vxor.u32 %v2518, 2147483648
  %v2520 = vmul.f32 %v2519, 1.442695
  %v2521 = vpow.pop %v2520
  %v2522 = vadd.f32 %v2521, 1.0
  %v2523 = vrcp.pop %v2522
  %v2524 = vmul.f32 %v2522, %v2523
  %v2525 = vsub.f32 1.0, %v2524
  %v2526 = vmul.f32 %v2523, %v2525
  %v2527 = vadd.f32 %v2523, %v2526
  %vm2528 = vweird.f32 %v2522
  %vm2529 = vweird.f32 %v2523
  %vm2530 = vmor %vm2528, %vm2529
  %v2531 = vsel %vm2530, %v2523, %v2527
  %v2532 = vand.u32 2147483647, %v2522
  %vm2533 = vcmp.eq.f32.partialorder %v2532, 8.507059e+37
  %v2534 = vand.u32 %v2522, 2147483648
  %v2535 = vor.u32 1.1754944e-38, %v2534
  %v2536 = vsel %vm2533, %v2535, %v2531
  %v2537 = vmul.f32 1.0, %v2536
  %v2538 = vmul.f32 %v2517, %v2496
  %v2539 = vadd.f32 %v2434, %v2538
  %v2540 = vtanh.pop %v2539
  %v2541 = vsub.f32 1.0, %v2537
  %v2542 = vmul.f32 %v2541, %v2540
  %v2543 = vmul.f32 %v2537, %v2260
  %v2544 = vadd.f32 %v2542, %v2543
  %2545 = vmatpush.msra.mxu0 0.0
  %2546 = vmatpush.msra.mxu0 0.0
  %2547 = vmatpush.msra.mxu0 0.0
  %2548 = vmatpush.msra.mxu0 0.0
  %2549 = vmatpush.msra.mxu0 0.0
  %2550 = vmatpush.msra.mxu0 0.0
  %2551 = vmatpush.msra.mxu0 0.0
  %2552 = vmatpush.msra.mxu0 0.0
  %2553 = vmatpush.msra.mxu0 0.0
  %2554 = vmatpush.msra.mxu0 0.0
  %2555 = vmatpush.msra.mxu0 0.0
  %2556 = vmatpush.msra.mxu0 0.0
  %2557 = vmatpush.msra.mxu0 %v542
  %2558 = vmatpush.msra.mxu0 %v539
  %2559 = vmatpush.msra.mxu0 %v536
  %2560 = vmatpush.msra.mxu0 %v533
  %2561 = vmatmul.f32.gmra.mxu0 %v2436
  %v2562 = vpop.f32.mrf.mxu0
  %v2563 = vadd.f32 %v284, %v2562
  %2564 = vdwg.mxu0
  %2565 = vmatpush.msra.mxu0 0.0
  %2566 = vmatpush.msra.mxu0 0.0
  %2567 = vmatpush.msra.mxu0 0.0
  %2568 = vmatpush.msra.mxu0 0.0
  %2569 = vmatpush.msra.mxu0 0.0
  %2570 = vmatpush.msra.mxu0 0.0
  %2571 = vmatpush.msra.mxu0 0.0
  %2572 = vmatpush.msra.mxu0 0.0
  %2573 = vmatpush.msra.mxu0 0.0
  %2574 = vmatpush.msra.mxu0 0.0
  %2575 = vmatpush.msra.mxu0 0.0
  %2576 = vmatpush.msra.mxu0 0.0
  %2577 = vmatpush.msra.mxu0 %v543
  %2578 = vmatpush.msra.mxu0 %v540
  %2579 = vmatpush.msra.mxu0 %v537
  %2580 = vmatpush.msra.mxu0 %v534
  %2581 = vmatmul.f32.gmra.mxu0 %v2436
  %v2582 = vpop.f32.mrf.mxu0
  %v2583 = vadd.f32 %v285, %v2582
  %2584 = vdwg.mxu0
  %2585 = vmatpush.msra.mxu0 0.0
  %2586 = vmatpush.msra.mxu0 0.0
  %2587 = vmatpush.msra.mxu0 0.0
  %2588 = vmatpush.msra.mxu0 0.0
  %2589 = vmatpush.msra.mxu0 0.0
  %2590 = vmatpush.msra.mxu0 0.0
  %2591 = vmatpush.msra.mxu0 0.0
  %2592 = vmatpush.msra.mxu0 0.0
  %2593 = vmatpush.msra.mxu0 0.0
  %2594 = vmatpush.msra.mxu0 0.0
  %2595 = vmatpush.msra.mxu0 0.0
  %2596 = vmatpush.msra.mxu0 0.0
  %2597 = vmatpush.msra.mxu0 %v544
  %2598 = vmatpush.msra.mxu0 %v541
  %2599 = vmatpush.msra.mxu0 %v538
  %2600 = vmatpush.msra.mxu0 %v535
  %2601 = vmatmul.f32.gmra.mxu0 %v2436
  %v2602 = vpop.f32.mrf.mxu0
  %v2603 = vadd.f32 %v286, %v2602
  %2604 = vdwg.mxu0
  %v2606 = vsel %vm308, %v2430, 0
  %2608 = vmatpush.msra.mxu0 0.0
  %2609 = vmatpush.msra.mxu0 0.0
  %2610 = vmatpush.msra.mxu0 0.0
  %2611 = vmatpush.msra.mxu0 0.0
  %2612 = vmatpush.msra.mxu0 0.0
  %2613 = vmatpush.msra.mxu0 0.0
  %2614 = vmatpush.msra.mxu0 0.0
  %2615 = vmatpush.msra.mxu0 0.0
  %2616 = vmatpush.msra.mxu0 0.0
  %2617 = vmatpush.msra.mxu0 0.0
  %2618 = vmatpush.msra.mxu0 0.0
  %2619 = vmatpush.msra.mxu0 0.0
  %2620 = vmatpush.msra.mxu0 %v614
  %2621 = vmatpush.msra.mxu0 %v611
  %2622 = vmatpush.msra.mxu0 %v608
  %2623 = vmatpush.msra.mxu0 %v605
  %2624 = vmatmul.f32.gmra.mxu0 %v2606
  %v2625 = vpop.f32.mrf.mxu0
  %v2626 = vadd.f32 %v276, %v2625
  %2627 = vdwg.mxu0
  %2628 = vmatpush.msra.mxu0 0.0
  %2629 = vmatpush.msra.mxu0 0.0
  %2630 = vmatpush.msra.mxu0 0.0
  %2631 = vmatpush.msra.mxu0 0.0
  %2632 = vmatpush.msra.mxu0 0.0
  %2633 = vmatpush.msra.mxu0 0.0
  %2634 = vmatpush.msra.mxu0 0.0
  %2635 = vmatpush.msra.mxu0 0.0
  %2636 = vmatpush.msra.mxu0 0.0
  %2637 = vmatpush.msra.mxu0 0.0
  %2638 = vmatpush.msra.mxu0 0.0
  %2639 = vmatpush.msra.mxu0 0.0
  %2640 = vmatpush.msra.mxu0 %v615
  %2641 = vmatpush.msra.mxu0 %v612
  %2642 = vmatpush.msra.mxu0 %v609
  %2643 = vmatpush.msra.mxu0 %v606
  %2644 = vmatmul.f32.gmra.mxu0 %v2606
  %v2645 = vpop.f32.mrf.mxu0
  %v2646 = vadd.f32 %v277, %v2645
  %2647 = vdwg.mxu0
  %2648 = vmatpush.msra.mxu0 0.0
  %2649 = vmatpush.msra.mxu0 0.0
  %2650 = vmatpush.msra.mxu0 0.0
  %2651 = vmatpush.msra.mxu0 0.0
  %2652 = vmatpush.msra.mxu0 0.0
  %2653 = vmatpush.msra.mxu0 0.0
  %2654 = vmatpush.msra.mxu0 0.0
  %2655 = vmatpush.msra.mxu0 0.0
  %2656 = vmatpush.msra.mxu0 0.0
  %2657 = vmatpush.msra.mxu0 0.0
  %2658 = vmatpush.msra.mxu0 0.0
  %2659 = vmatpush.msra.mxu0 0.0
  %2660 = vmatpush.msra.mxu0 %v616
  %2661 = vmatpush.msra.mxu0 %v613
  %2662 = vmatpush.msra.mxu0 %v610
  %2663 = vmatpush.msra.mxu0 %v607
  %2664 = vmatmul.f32.gmra.mxu0 %v2606
  %v2665 = vpop.f32.mrf.mxu0
  %v2666 = vadd.f32 %v278, %v2665
  %2667 = vdwg.mxu0
  %v2668 = vadd.f32 %v2563, %v2626
  %v2669 = vxor.u32 %v2668, 2147483648
  %v2670 = vmul.f32 %v2669, 1.442695
  %v2671 = vpow.pop %v2670
  %v2672 = vadd.f32 %v2671, 1.0
  %v2673 = vrcp.pop %v2672
  %v2674 = vmul.f32 %v2672, %v2673
  %v2675 = vsub.f32 1.0, %v2674
  %v2676 = vmul.f32 %v2673, %v2675
  %v2677 = vadd.f32 %v2673, %v2676
  %vm2678 = vweird.f32 %v2672
  %vm2679 = vweird.f32 %v2673
  %vm2680 = vmor %vm2678, %vm2679
  %v2681 = vsel %vm2680, %v2673, %v2677
  %v2682 = vand.u32 2147483647, %v2672
  %vm2683 = vcmp.eq.f32.partialorder %v2682, 8.507059e+37
  %v2684 = vand.u32 %v2672, 2147483648
  %v2685 = vor.u32 1.1754944e-38, %v2684
  %v2686 = vsel %vm2683, %v2685, %v2681
  %v2687 = vmul.f32 1.0, %v2686
  %v2688 = vadd.f32 %v2583, %v2646
  %v2689 = vxor.u32 %v2688, 2147483648
  %v2690 = vmul.f32 %v2689, 1.442695
  %v2691 = vpow.pop %v2690
  %v2692 = vadd.f32 %v2691, 1.0
  %v2693 = vrcp.pop %v2692
  %v2694 = vmul.f32 %v2692, %v2693
  %v2695 = vsub.f32 1.0, %v2694
  %v2696 = vmul.f32 %v2693, %v2695
  %v2697 = vadd.f32 %v2693, %v2696
  %vm2698 = vweird.f32 %v2692
  %vm2699 = vweird.f32 %v2693
  %vm2700 = vmor %vm2698, %vm2699
  %v2701 = vsel %vm2700, %v2693, %v2697
  %v2702 = vand.u32 2147483647, %v2692
  %vm2703 = vcmp.eq.f32.partialorder %v2702, 8.507059e+37
  %v2704 = vand.u32 %v2692, 2147483648
  %v2705 = vor.u32 1.1754944e-38, %v2704
  %v2706 = vsel %vm2703, %v2705, %v2701
  %v2707 = vmul.f32 1.0, %v2706
  %v2708 = vmul.f32 %v2687, %v2666
  %v2709 = vadd.f32 %v2603, %v2708
  %v2710 = vtanh.pop %v2709
  %v2711 = vsub.f32 1.0, %v2707
  %v2712 = vmul.f32 %v2711, %v2710
  %v2713 = vmul.f32 %v2707, %v2430
  %v2714 = vadd.f32 %v2712, %v2713
  %s2715 = scalar_lea.vmem [#allocation2], 216
  %v2716 = vld [vmem:[%s2715] sm:$0xff]
  %v2717 = vld [vmem:[%s2715 + $0x8] sm:$0xff]
  %v2718 = vld [vmem:[%s2715 + $0x10] sm:$0xff]
  %v2720 = vsel %vm308, %v2544, 0
  %2722 = vmatpush.msra.mxu0 0.0
  %2723 = vmatpush.msra.mxu0 0.0
  %2724 = vmatpush.msra.mxu0 0.0
  %2725 = vmatpush.msra.mxu0 0.0
  %2726 = vmatpush.msra.mxu0 0.0
  %2727 = vmatpush.msra.mxu0 0.0
  %2728 = vmatpush.msra.mxu0 0.0
  %2729 = vmatpush.msra.mxu0 0.0
  %2730 = vmatpush.msra.mxu0 0.0
  %2731 = vmatpush.msra.mxu0 0.0
  %2732 = vmatpush.msra.mxu0 0.0
  %2733 = vmatpush.msra.mxu0 0.0
  %2734 = vmatpush.msra.mxu0 %v305
  %2735 = vmatpush.msra.mxu0 %v302
  %2736 = vmatpush.msra.mxu0 %v299
  %2737 = vmatpush.msra.mxu0 %v296
  %2738 = vmatmul.f32.gmra.mxu0 %v2720
  %v2739 = vpop.f32.mrf.mxu0
  %v2740 = vadd.f32 %v268, %v2739
  %2741 = vdwg.mxu0
  %2742 = vmatpush.msra.mxu0 0.0
  %2743 = vmatpush.msra.mxu0 0.0
  %2744 = vmatpush.msra.mxu0 0.0
  %2745 = vmatpush.msra.mxu0 0.0
  %2746 = vmatpush.msra.mxu0 0.0
  %2747 = vmatpush.msra.mxu0 0.0
  %2748 = vmatpush.msra.mxu0 0.0
  %2749 = vmatpush.msra.mxu0 0.0
  %2750 = vmatpush.msra.mxu0 0.0
  %2751 = vmatpush.msra.mxu0 0.0
  %2752 = vmatpush.msra.mxu0 0.0
  %2753 = vmatpush.msra.mxu0 0.0
  %2754 = vmatpush.msra.mxu0 %v306
  %2755 = vmatpush.msra.mxu0 %v303
  %2756 = vmatpush.msra.mxu0 %v300
  %2757 = vmatpush.msra.mxu0 %v297
  %2758 = vmatmul.f32.gmra.mxu0 %v2720
  %v2759 = vpop.f32.mrf.mxu0
  %v2760 = vadd.f32 %v269, %v2759
  %2761 = vdwg.mxu0
  %2762 = vmatpush.msra.mxu0 0.0
  %2763 = vmatpush.msra.mxu0 0.0
  %2764 = vmatpush.msra.mxu0 0.0
  %2765 = vmatpush.msra.mxu0 0.0
  %2766 = vmatpush.msra.mxu0 0.0
  %2767 = vmatpush.msra.mxu0 0.0
  %2768 = vmatpush.msra.mxu0 0.0
  %2769 = vmatpush.msra.mxu0 0.0
  %2770 = vmatpush.msra.mxu0 0.0
  %2771 = vmatpush.msra.mxu0 0.0
  %2772 = vmatpush.msra.mxu0 0.0
  %2773 = vmatpush.msra.mxu0 0.0
  %2774 = vmatpush.msra.mxu0 %v307
  %2775 = vmatpush.msra.mxu0 %v304
  %2776 = vmatpush.msra.mxu0 %v301
  %2777 = vmatpush.msra.mxu0 %v298
  %2778 = vmatmul.f32.gmra.mxu0 %v2720
  %v2779 = vpop.f32.mrf.mxu0
  %v2780 = vadd.f32 %v270, %v2779
  %2781 = vdwg.mxu0
  %v2782 = vadd.f32 %v2716, %v2740
  %v2783 = vxor.u32 %v2782, 2147483648
  %v2784 = vmul.f32 %v2783, 1.442695
  %v2785 = vpow.pop %v2784
  %v2786 = vadd.f32 %v2785, 1.0
  %v2787 = vrcp.pop %v2786
  %v2788 = vmul.f32 %v2786, %v2787
  %v2789 = vsub.f32 1.0, %v2788
  %v2790 = vmul.f32 %v2787, %v2789
  %v2791 = vadd.f32 %v2787, %v2790
  %vm2792 = vweird.f32 %v2786
  %vm2793 = vweird.f32 %v2787
  %vm2794 = vmor %vm2792, %vm2793
  %v2795 = vsel %vm2794, %v2787, %v2791
  %v2796 = vand.u32 2147483647, %v2786
  %vm2797 = vcmp.eq.f32.partialorder %v2796, 8.507059e+37
  %v2798 = vand.u32 %v2786, 2147483648
  %v2799 = vor.u32 1.1754944e-38, %v2798
  %v2800 = vsel %vm2797, %v2799, %v2795
  %v2801 = vmul.f32 1.0, %v2800
  %v2802 = vadd.f32 %v2717, %v2760
  %v2803 = vxor.u32 %v2802, 2147483648
  %v2804 = vmul.f32 %v2803, 1.442695
  %v2805 = vpow.pop %v2804
  %v2806 = vadd.f32 %v2805, 1.0
  %v2807 = vrcp.pop %v2806
  %v2808 = vmul.f32 %v2806, %v2807
  %v2809 = vsub.f32 1.0, %v2808
  %v2810 = vmul.f32 %v2807, %v2809
  %v2811 = vadd.f32 %v2807, %v2810
  %vm2812 = vweird.f32 %v2806
  %vm2813 = vweird.f32 %v2807
  %vm2814 = vmor %vm2812, %vm2813
  %v2815 = vsel %vm2814, %v2807, %v2811
  %v2816 = vand.u32 2147483647, %v2806
  %vm2817 = vcmp.eq.f32.partialorder %v2816, 8.507059e+37
  %v2818 = vand.u32 %v2806, 2147483648
  %v2819 = vor.u32 1.1754944e-38, %v2818
  %v2820 = vsel %vm2817, %v2819, %v2815
  %v2821 = vmul.f32 1.0, %v2820
  %v2822 = vmul.f32 %v2801, %v2780
  %v2823 = vadd.f32 %v2718, %v2822
  %v2824 = vtanh.pop %v2823
  %v2825 = vsub.f32 1.0, %v2821
  %v2826 = vmul.f32 %v2825, %v2824
  %v2827 = vmul.f32 %v2821, %v2544
  %v2828 = vadd.f32 %v2826, %v2827
  %2829 = vmatpush.msra.mxu0 0.0
  %2830 = vmatpush.msra.mxu0 0.0
  %2831 = vmatpush.msra.mxu0 0.0
  %2832 = vmatpush.msra.mxu0 0.0
  %2833 = vmatpush.msra.mxu0 0.0
  %2834 = vmatpush.msra.mxu0 0.0
  %2835 = vmatpush.msra.mxu0 0.0
  %2836 = vmatpush.msra.mxu0 0.0
  %2837 = vmatpush.msra.mxu0 0.0
  %2838 = vmatpush.msra.mxu0 0.0
  %2839 = vmatpush.msra.mxu0 0.0
  %2840 = vmatpush.msra.mxu0 0.0
  %2841 = vmatpush.msra.mxu0 %v542
  %2842 = vmatpush.msra.mxu0 %v539
  %2843 = vmatpush.msra.mxu0 %v536
  %2844 = vmatpush.msra.mxu0 %v533
  %2845 = vmatmul.f32.gmra.mxu0 %v2720
  %v2846 = vpop.f32.mrf.mxu0
  %v2847 = vadd.f32 %v284, %v2846
  %2848 = vdwg.mxu0
  %2849 = vmatpush.msra.mxu0 0.0
  %2850 = vmatpush.msra.mxu0 0.0
  %2851 = vmatpush.msra.mxu0 0.0
  %2852 = vmatpush.msra.mxu0 0.0
  %2853 = vmatpush.msra.mxu0 0.0
  %2854 = vmatpush.msra.mxu0 0.0
  %2855 = vmatpush.msra.mxu0 0.0
  %2856 = vmatpush.msra.mxu0 0.0
  %2857 = vmatpush.msra.mxu0 0.0
  %2858 = vmatpush.msra.mxu0 0.0
  %2859 = vmatpush.msra.mxu0 0.0
  %2860 = vmatpush.msra.mxu0 0.0
  %2861 = vmatpush.msra.mxu0 %v543
  %2862 = vmatpush.msra.mxu0 %v540
  %2863 = vmatpush.msra.mxu0 %v537
  %2864 = vmatpush.msra.mxu0 %v534
  %2865 = vmatmul.f32.gmra.mxu0 %v2720
  %v2866 = vpop.f32.mrf.mxu0
  %v2867 = vadd.f32 %v285, %v2866
  %2868 = vdwg.mxu0
  %2869 = vmatpush.msra.mxu0 0.0
  %2870 = vmatpush.msra.mxu0 0.0
  %2871 = vmatpush.msra.mxu0 0.0
  %2872 = vmatpush.msra.mxu0 0.0
  %2873 = vmatpush.msra.mxu0 0.0
  %2874 = vmatpush.msra.mxu0 0.0
  %2875 = vmatpush.msra.mxu0 0.0
  %2876 = vmatpush.msra.mxu0 0.0
  %2877 = vmatpush.msra.mxu0 0.0
  %2878 = vmatpush.msra.mxu0 0.0
  %2879 = vmatpush.msra.mxu0 0.0
  %2880 = vmatpush.msra.mxu0 0.0
  %2881 = vmatpush.msra.mxu0 %v544
  %2882 = vmatpush.msra.mxu0 %v541
  %2883 = vmatpush.msra.mxu0 %v538
  %2884 = vmatpush.msra.mxu0 %v535
  %2885 = vmatmul.f32.gmra.mxu0 %v2720
  %v2886 = vpop.f32.mrf.mxu0
  %v2887 = vadd.f32 %v286, %v2886
  %2888 = vdwg.mxu0
  %v2890 = vsel %vm308, %v2714, 0
  %2892 = vmatpush.msra.mxu0 0.0
  %2893 = vmatpush.msra.mxu0 0.0
  %2894 = vmatpush.msra.mxu0 0.0
  %2895 = vmatpush.msra.mxu0 0.0
  %2896 = vmatpush.msra.mxu0 0.0
  %2897 = vmatpush.msra.mxu0 0.0
  %2898 = vmatpush.msra.mxu0 0.0
  %2899 = vmatpush.msra.mxu0 0.0
  %2900 = vmatpush.msra.mxu0 0.0
  %2901 = vmatpush.msra.mxu0 0.0
  %2902 = vmatpush.msra.mxu0 0.0
  %2903 = vmatpush.msra.mxu0 0.0
  %2904 = vmatpush.msra.mxu0 %v614
  %2905 = vmatpush.msra.mxu0 %v611
  %2906 = vmatpush.msra.mxu0 %v608
  %2907 = vmatpush.msra.mxu0 %v605
  %2908 = vmatmul.f32.gmra.mxu0 %v2890
  %v2909 = vpop.f32.mrf.mxu0
  %v2910 = vadd.f32 %v276, %v2909
  %2911 = vdwg.mxu0
  %2912 = vmatpush.msra.mxu0 0.0
  %2913 = vmatpush.msra.mxu0 0.0
  %2914 = vmatpush.msra.mxu0 0.0
  %2915 = vmatpush.msra.mxu0 0.0
  %2916 = vmatpush.msra.mxu0 0.0
  %2917 = vmatpush.msra.mxu0 0.0
  %2918 = vmatpush.msra.mxu0 0.0
  %2919 = vmatpush.msra.mxu0 0.0
  %2920 = vmatpush.msra.mxu0 0.0
  %2921 = vmatpush.msra.mxu0 0.0
  %2922 = vmatpush.msra.mxu0 0.0
  %2923 = vmatpush.msra.mxu0 0.0
  %2924 = vmatpush.msra.mxu0 %v615
  %2925 = vmatpush.msra.mxu0 %v612
  %2926 = vmatpush.msra.mxu0 %v609
  %2927 = vmatpush.msra.mxu0 %v606
  %2928 = vmatmul.f32.gmra.mxu0 %v2890
  %v2929 = vpop.f32.mrf.mxu0
  %v2930 = vadd.f32 %v277, %v2929
  %2931 = vdwg.mxu0
  %2932 = vmatpush.msra.mxu0 0.0
  %2933 = vmatpush.msra.mxu0 0.0
  %2934 = vmatpush.msra.mxu0 0.0
  %2935 = vmatpush.msra.mxu0 0.0
  %2936 = vmatpush.msra.mxu0 0.0
  %2937 = vmatpush.msra.mxu0 0.0
  %2938 = vmatpush.msra.mxu0 0.0
  %2939 = vmatpush.msra.mxu0 0.0
  %2940 = vmatpush.msra.mxu0 0.0
  %2941 = vmatpush.msra.mxu0 0.0
  %2942 = vmatpush.msra.mxu0 0.0
  %2943 = vmatpush.msra.mxu0 0.0
  %2944 = vmatpush.msra.mxu0 %v616
  %2945 = vmatpush.msra.mxu0 %v613
  %2946 = vmatpush.msra.mxu0 %v610
  %2947 = vmatpush.msra.mxu0 %v607
  %2948 = vmatmul.f32.gmra.mxu0 %v2890
  %v2949 = vpop.f32.mrf.mxu0
  %v2950 = vadd.f32 %v278, %v2949
  %2951 = vdwg.mxu0
  %v2952 = vadd.f32 %v2847, %v2910
  %v2953 = vxor.u32 %v2952, 2147483648
  %v2954 = vmul.f32 %v2953, 1.442695
  %v2955 = vpow.pop %v2954
  %v2956 = vadd.f32 %v2955, 1.0
  %v2957 = vrcp.pop %v2956
  %v2958 = vmul.f32 %v2956, %v2957
  %v2959 = vsub.f32 1.0, %v2958
  %v2960 = vmul.f32 %v2957, %v2959
  %v2961 = vadd.f32 %v2957, %v2960
  %vm2962 = vweird.f32 %v2956
  %vm2963 = vweird.f32 %v2957
  %vm2964 = vmor %vm2962, %vm2963
  %v2965 = vsel %vm2964, %v2957, %v2961
  %v2966 = vand.u32 2147483647, %v2956
  %vm2967 = vcmp.eq.f32.partialorder %v2966, 8.507059e+37
  %v2968 = vand.u32 %v2956, 2147483648
  %v2969 = vor.u32 1.1754944e-38, %v2968
  %v2970 = vsel %vm2967, %v2969, %v2965
  %v2971 = vmul.f32 1.0, %v2970
  %v2972 = vadd.f32 %v2867, %v2930
  %v2973 = vxor.u32 %v2972, 2147483648
  %v2974 = vmul.f32 %v2973, 1.442695
  %v2975 = vpow.pop %v2974
  %v2976 = vadd.f32 %v2975, 1.0
  %v2977 = vrcp.pop %v2976
  %v2978 = vmul.f32 %v2976, %v2977
  %v2979 = vsub.f32 1.0, %v2978
  %v2980 = vmul.f32 %v2977, %v2979
  %v2981 = vadd.f32 %v2977, %v2980
  %vm2982 = vweird.f32 %v2976
  %vm2983 = vweird.f32 %v2977
  %vm2984 = vmor %vm2982, %vm2983
  %v2985 = vsel %vm2984, %v2977, %v2981
  %v2986 = vand.u32 2147483647, %v2976
  %vm2987 = vcmp.eq.f32.partialorder %v2986, 8.507059e+37
  %v2988 = vand.u32 %v2976, 2147483648
  %v2989 = vor.u32 1.1754944e-38, %v2988
  %v2990 = vsel %vm2987, %v2989, %v2985
  %v2991 = vmul.f32 1.0, %v2990
  %v2992 = vmul.f32 %v2971, %v2950
  %v2993 = vadd.f32 %v2887, %v2992
  %v2994 = vtanh.pop %v2993
  %v2995 = vsub.f32 1.0, %v2991
  %v2996 = vmul.f32 %v2995, %v2994
  %v2997 = vmul.f32 %v2991, %v2714
  %v2998 = vadd.f32 %v2996, %v2997
  %v3000 = vsel %vm308, %v2828, 0
  %3002 = vmatpush.msra.mxu0 0.0
  %3003 = vmatpush.msra.mxu0 0.0
  %3004 = vmatpush.msra.mxu0 0.0
  %3005 = vmatpush.msra.mxu0 0.0
  %3006 = vmatpush.msra.mxu0 0.0
  %3007 = vmatpush.msra.mxu0 0.0
  %3008 = vmatpush.msra.mxu0 0.0
  %3009 = vmatpush.msra.mxu0 0.0
  %3010 = vmatpush.msra.mxu0 0.0
  %3011 = vmatpush.msra.mxu0 0.0
  %3012 = vmatpush.msra.mxu0 0.0
  %3013 = vmatpush.msra.mxu0 0.0
  %3014 = vmatpush.msra.mxu0 %v542
  %3015 = vmatpush.msra.mxu0 %v539
  %3016 = vmatpush.msra.mxu0 %v536
  %3017 = vmatpush.msra.mxu0 %v533
  %3018 = vmatmul.f32.gmra.mxu0 %v3000
  %v3019 = vpop.f32.mrf.mxu0
  %v3020 = vadd.f32 %v284, %v3019
  %3021 = vdwg.mxu0
  %3022 = vmatpush.msra.mxu0 0.0
  %3023 = vmatpush.msra.mxu0 0.0
  %3024 = vmatpush.msra.mxu0 0.0
  %3025 = vmatpush.msra.mxu0 0.0
  %3026 = vmatpush.msra.mxu0 0.0
  %3027 = vmatpush.msra.mxu0 0.0
  %3028 = vmatpush.msra.mxu0 0.0
  %3029 = vmatpush.msra.mxu0 0.0
  %3030 = vmatpush.msra.mxu0 0.0
  %3031 = vmatpush.msra.mxu0 0.0
  %3032 = vmatpush.msra.mxu0 0.0
  %3033 = vmatpush.msra.mxu0 0.0
  %3034 = vmatpush.msra.mxu0 %v543
  %3035 = vmatpush.msra.mxu0 %v540
  %3036 = vmatpush.msra.mxu0 %v537
  %3037 = vmatpush.msra.mxu0 %v534
  %3038 = vmatmul.f32.gmra.mxu0 %v3000
  %v3039 = vpop.f32.mrf.mxu0
  %v3040 = vadd.f32 %v285, %v3039
  %3041 = vdwg.mxu0
  %3042 = vmatpush.msra.mxu0 0.0
  %3043 = vmatpush.msra.mxu0 0.0
  %3044 = vmatpush.msra.mxu0 0.0
  %3045 = vmatpush.msra.mxu0 0.0
  %3046 = vmatpush.msra.mxu0 0.0
  %3047 = vmatpush.msra.mxu0 0.0
  %3048 = vmatpush.msra.mxu0 0.0
  %3049 = vmatpush.msra.mxu0 0.0
  %3050 = vmatpush.msra.mxu0 0.0
  %3051 = vmatpush.msra.mxu0 0.0
  %3052 = vmatpush.msra.mxu0 0.0
  %3053 = vmatpush.msra.mxu0 0.0
  %3054 = vmatpush.msra.mxu0 %v544
  %3055 = vmatpush.msra.mxu0 %v541
  %3056 = vmatpush.msra.mxu0 %v538
  %3057 = vmatpush.msra.mxu0 %v535
  %3058 = vmatmul.f32.gmra.mxu0 %v3000
  %v3059 = vpop.f32.mrf.mxu0
  %v3060 = vadd.f32 %v286, %v3059
  %3061 = vdwg.mxu0
  %v3063 = vsel %vm308, %v2998, 0
  %3065 = vmatpush.msra.mxu0 0.0
  %3066 = vmatpush.msra.mxu0 0.0
  %3067 = vmatpush.msra.mxu0 0.0
  %3068 = vmatpush.msra.mxu0 0.0
  %3069 = vmatpush.msra.mxu0 0.0
  %3070 = vmatpush.msra.mxu0 0.0
  %3071 = vmatpush.msra.mxu0 0.0
  %3072 = vmatpush.msra.mxu0 0.0
  %3073 = vmatpush.msra.mxu0 0.0
  %3074 = vmatpush.msra.mxu0 0.0
  %3075 = vmatpush.msra.mxu0 0.0
  %3076 = vmatpush.msra.mxu0 0.0
  %3077 = vmatpush.msra.mxu0 %v614
  %3078 = vmatpush.msra.mxu0 %v611
  %3079 = vmatpush.msra.mxu0 %v608
  %3080 = vmatpush.msra.mxu0 %v605
  %3081 = vmatmul.f32.gmra.mxu0 %v3063
  %v3082 = vpop.f32.mrf.mxu0
  %v3083 = vadd.f32 %v276, %v3082
  %3084 = vdwg.mxu0
  %3085 = vmatpush.msra.mxu0 0.0
  %3086 = vmatpush.msra.mxu0 0.0
  %3087 = vmatpush.msra.mxu0 0.0
  %3088 = vmatpush.msra.mxu0 0.0
  %3089 = vmatpush.msra.mxu0 0.0
  %3090 = vmatpush.msra.mxu0 0.0
  %3091 = vmatpush.msra.mxu0 0.0
  %3092 = vmatpush.msra.mxu0 0.0
  %3093 = vmatpush.msra.mxu0 0.0
  %3094 = vmatpush.msra.mxu0 0.0
  %3095 = vmatpush.msra.mxu0 0.0
  %3096 = vmatpush.msra.mxu0 0.0
  %3097 = vmatpush.msra.mxu0 %v615
  %3098 = vmatpush.msra.mxu0 %v612
  %3099 = vmatpush.msra.mxu0 %v609
  %3100 = vmatpush.msra.mxu0 %v606
  %3101 = vmatmul.f32.gmra.mxu0 %v3063
  %v3102 = vpop.f32.mrf.mxu0
  %v3103 = vadd.f32 %v277, %v3102
  %3104 = vdwg.mxu0
  %3105 = vmatpush.msra.mxu0 0.0
  %3106 = vmatpush.msra.mxu0 0.0
  %3107 = vmatpush.msra.mxu0 0.0
  %3108 = vmatpush.msra.mxu0 0.0
  %3109 = vmatpush.msra.mxu0 0.0
  %3110 = vmatpush.msra.mxu0 0.0
  %3111 = vmatpush.msra.mxu0 0.0
  %3112 = vmatpush.msra.mxu0 0.0
  %3113 = vmatpush.msra.mxu0 0.0
  %3114 = vmatpush.msra.mxu0 0.0
  %3115 = vmatpush.msra.mxu0 0.0
  %3116 = vmatpush.msra.mxu0 0.0
  %3117 = vmatpush.msra.mxu0 %v616
  %3118 = vmatpush.msra.mxu0 %v613
  %3119 = vmatpush.msra.mxu0 %v610
  %3120 = vmatpush.msra.mxu0 %v607
  %3121 = vmatmul.f32.gmra.mxu0 %v3063
  %v3122 = vpop.f32.mrf.mxu0
  %v3123 = vadd.f32 %v278, %v3122
  %3124 = vdwg.mxu0
  %v3125 = vadd.f32 %v3020, %v3083
  %v3126 = vxor.u32 %v3125, 2147483648
  %v3127 = vmul.f32 %v3126, 1.442695
  %v3128 = vpow.pop %v3127
  %v3129 = vadd.f32 %v3128, 1.0
  %v3130 = vrcp.pop %v3129
  %v3131 = vmul.f32 %v3129, %v3130
  %v3132 = vsub.f32 1.0, %v3131
  %v3133 = vmul.f32 %v3130, %v3132
  %v3134 = vadd.f32 %v3130, %v3133
  %vm3135 = vweird.f32 %v3129
  %vm3136 = vweird.f32 %v3130
  %vm3137 = vmor %vm3135, %vm3136
  %v3138 = vsel %vm3137, %v3130, %v3134
  %v3139 = vand.u32 2147483647, %v3129
  %vm3140 = vcmp.eq.f32.partialorder %v3139, 8.507059e+37
  %v3141 = vand.u32 %v3129, 2147483648
  %v3142 = vor.u32 1.1754944e-38, %v3141
  %v3143 = vsel %vm3140, %v3142, %v3138
  %v3144 = vmul.f32 1.0, %v3143
  %v3145 = vadd.f32 %v3040, %v3103
  %v3146 = vxor.u32 %v3145, 2147483648
  %v3147 = vmul.f32 %v3146, 1.442695
  %v3148 = vpow.pop %v3147
  %v3149 = vadd.f32 %v3148, 1.0
  %v3150 = vrcp.pop %v3149
  %v3151 = vmul.f32 %v3149, %v3150
  %v3152 = vsub.f32 1.0, %v3151
  %v3153 = vmul.f32 %v3150, %v3152
  %v3154 = vadd.f32 %v3150, %v3153
  %vm3155 = vweird.f32 %v3149
  %vm3156 = vweird.f32 %v3150
  %vm3157 = vmor %vm3155, %vm3156
  %v3158 = vsel %vm3157, %v3150, %v3154
  %v3159 = vand.u32 2147483647, %v3149
  %vm3160 = vcmp.eq.f32.partialorder %v3159, 8.507059e+37
  %v3161 = vand.u32 %v3149, 2147483648
  %v3162 = vor.u32 1.1754944e-38, %v3161
  %v3163 = vsel %vm3160, %v3162, %v3158
  %v3164 = vmul.f32 1.0, %v3163
  %v3165 = vmul.f32 %v3144, %v3123
  %v3166 = vadd.f32 %v3060, %v3165
  %v3167 = vtanh.pop %v3166
  %v3168 = vsub.f32 1.0, %v3164
  %v3169 = vmul.f32 %v3168, %v3167
  %v3170 = vmul.f32 %v3164, %v2998
  %v3171 = vadd.f32 %v3169, %v3170
  %v3172 = vld [vmem:[%s10] sm:$0x1]
  %v3174 = vperm.slane %v3172, 0
  %v3176 = vmul.f32 %v3171, %v3174
  %v3177 = vsel %vm308, %v3176, 0.0
  %3178 = vadd.xlane.f32.xlu0 %v3177
  %v3179 = vpop.xlane.xlu0 %3178
  %v3180 = vld [vmem:[#allocation3] sm:$0x1]
  %v3182 = vperm.slane %v3180, 0
  %v3184 = vadd.f32 %v3179, %v3182
  %v3185 = vmax.f32 %v3184, 0.0
  %vm3186 = vcmask 7168
  %3187 = vst.msk [vmem:[%s12] sm:$0xff] %vm3186, %v3185
  // Predicated region
  $region50: #{gru_model_forward.1} parent=0 // pred_check
    _
  $region51: #{gru_model_forward.1} parent=0 // pred_check_branch
    %3189 = sbr.rel (0) target = $region53
  $region52: #{gru_model_forward.1} parent=0 // pred_region
    _
  $region53: #{gru_model_forward.1} parent=0 // pred_fallthru
    _
  // Predicated region
  $region54: #{gru_model_forward.1} parent=0 // pred_check
    _
  $region55: #{gru_model_forward.1} parent=0 // pred_check_branch
    %3191 = sbr.rel (0) target = $region57
  $region56: #{gru_model_forward.1} parent=0 // pred_region
    _
  $region57: #{gru_model_forward.1} parent=0 // pred_fallthru
    _

</llo_original>
